<compile_context>
chip_gen: v6e
topology: v6e:2x2x1
jax: 0.10.0
libtpu: 0.0.40
codegen_flags: <defaults>
</compile_context>

<pallas_src>
import numpy as np
import jax
import jax.numpy as jnp
from jax.experimental import pallas as pl
from jax.experimental.pallas import tpu as pltpu


def _round_up(x, m):
    return (x + m - 1) // m * m


# ----------------------------------------------------------------------------
# Fused kernel: multi-layer LSTM -> packed gather -> vocab projection
# ----------------------------------------------------------------------------
def _make_decoder_kernel(T, B, E, H, num_layers, Np):
    """Refs (in order):
      idx_ref                       SMEM (Np,) i32   packed-row gather indices
      x_ref                         (T*B, E) bf16    time-major flattened input
      [w_ih, w_hh, b] * num_layers  (In,4H) bf16, (H,4H) bf16, (1,4H) f32
      lin_w_ref, lin_b_ref          (H, tv) bf16, (1, tv) f32   (vocab tile)
      out_ref                       (Np, tv) f32
      scratch: seq (T*B,H) f32, gx (T*B,4H) f32, h (B,H) f32, c (B,H) f32,
               pk (Np,H) f32, pkb (Np,H) bf16
    Gate order along 4H is i|f|o|g (reordered at weight-pack time)."""
    TB = T * B
    bf16 = jnp.bfloat16

    def kernel(idx_ref, *refs):
        nw = 3 * num_layers
        x_ref = refs[0]
        w_refs = refs[1:1 + nw]
        lin_w_ref = refs[1 + nw]
        lin_b_ref = refs[2 + nw]
        out_ref = refs[3 + nw]
        seq_scr, gx_scr, h_scr, c_scr, pk_scr, pkb_scr = refs[4 + nw:]

        # ---- LSTM stack + packed gather: run once, on the first vocab tile.
        @pl.when(pl.program_id(0) == 0)
        def _():
            for layer in range(num_layers):
                w_ih = w_refs[3 * layer][...]            # (In, 4H) bf16
                w_hh = w_refs[3 * layer + 1][...]        # (H, 4H)  bf16
                bias = w_refs[3 * layer + 2][...]        # (1, 4H)  f32

                # Hoisted input-path projection for ALL timesteps at once
                # (bulk bf16 cast for layers >= 1 happens here, not per step).
                in_2d = x_ref[...] if layer == 0 else seq_scr[...].astype(bf16)
                gx_scr[...] = (
                    jnp.dot(in_2d, w_ih, preferred_element_type=jnp.float32)
                    + jnp.broadcast_to(bias, (TB, 4 * H)))

                h_scr[...] = jnp.zeros_like(h_scr)
                c_scr[...] = jnp.zeros_like(c_scr)

                def step(t, carry, w_hh=w_hh):
                    row = pl.multiple_of(t * B, 8)
                    gates = (
                        jnp.dot(h_scr[...].astype(bf16), w_hh,
                                preferred_element_type=jnp.float32)
                        + gx_scr[pl.ds(row, B), :])      # (B, 4H) f32
                    sig = jax.nn.sigmoid(gates[:, :3 * H])   # i | f | o
                    i_g = sig[:, 0 * H:1 * H]
                    f_g = sig[:, 1 * H:2 * H]
                    o_g = sig[:, 2 * H:3 * H]
                    g_g = jnp.tanh(gates[:, 3 * H:4 * H])
                    c_new = f_g * c_scr[...] + i_g * g_g
                    h_new = o_g * jnp.tanh(c_new)
                    c_scr[...] = c_new
                    h_scr[...] = h_new
                    seq_scr[pl.ds(row, B), :] = h_new    # read-before-write OK
                    return carry

                jax.lax.fori_loop(0, T, step, 0,
                                  unroll=True if T <= 16 else 4)

            # pack_padded_sequence row order, indices prefetched into SMEM.
            def gather(n, carry):
                r = idx_ref[n]
                pk_scr[pl.ds(n, 1), :] = seq_scr[pl.ds(r, 1), :]
                return carry

            jax.lax.fori_loop(0, Np, gather, 0, unroll=False)
            pkb_scr[...] = pk_scr[...].astype(bf16)      # one bulk cast

        # ---- Vocab projection for this tile (every grid step). ----
        out_ref[...] = (
            jnp.dot(pkb_scr[...], lin_w_ref[...],
                    preferred_element_type=jnp.float32)
            + lin_b_ref[...])

    return kernel


def decoder_fused_pallas(flat_idx, x_2d, lstm_params, lin_wT, lin_b,
                         *, T, B, E, H, Np):
    num_layers = len(lstm_params)
    Vp = lin_wT.shape[1]
    TB = T * B

    # Large lane-dense vocab tiles: W tile (H, tv) bf16 double-buffered stays
    # tiny, so amortize per-grid-step overhead aggressively.
    tv = 128
    for cand in (2048, 1024, 512, 256, 128):
        if Vp % cand == 0:
            tv = cand
            break
    grid = (Vp // tv,)

    flat_w = []
    in_specs = [pl.BlockSpec((TB, E), lambda j, idx: (0, 0))]
    for lp in lstm_params:
        In = lp["w_ih"].shape[0]
        flat_w += [lp["w_ih"], lp["w_hh"], lp["b"]]
        in_specs += [
            pl.BlockSpec((In, 4 * H), lambda j, idx: (0, 0)),
            pl.BlockSpec((H, 4 * H), lambda j, idx: (0, 0)),
            pl.BlockSpec((1, 4 * H), lambda j, idx: (0, 0)),
        ]
    in_specs += [
        pl.BlockSpec((H, tv), lambda j, idx: (0, j)),   # each W tile DMA'd once
        pl.BlockSpec((1, tv), lambda j, idx: (0, j)),
    ]

    # TODO(synk): on v7x with B >= 16 a leading "parallel" batch grid axis (or
    # core_map over the 2-TC mesh) could split the recurrence across cores.
    return pl.pallas_call(
        _make_decoder_kernel(T, B, E, H, num_layers, Np),
        out_shape=jax.ShapeDtypeStruct((Np, Vp), jnp.float32),
        grid_spec=pltpu.PrefetchScalarGridSpec(
            num_scalar_prefetch=1,
            grid=grid,
            in_specs=in_specs,
            out_specs=pl.BlockSpec((Np, tv), lambda j, idx: (0, j)),
            scratch_shapes=[
                pltpu.VMEM((TB, H), jnp.float32),       # layer output sequence
                pltpu.VMEM((TB, 4 * H), jnp.float32),   # hoisted x-path gates
                pltpu.VMEM((B, H), jnp.float32),        # h state
                pltpu.VMEM((B, H), jnp.float32),        # c state
                pltpu.VMEM((Np, H), jnp.float32),       # packed rows (f32)
                pltpu.VMEM((Np, H), jnp.bfloat16),      # packed rows (bf16)
            ]),
        compiler_params=pltpu.CompilerParams(
            dimension_semantics=("arbitrary",),
            vmem_limit_bytes=64 * 1024 * 1024),
    )(flat_idx, x_2d, *flat_w, lin_wT, lin_b)


# ----------------------------------------------------------------------------
# DecoderRNN forward (glue + kernel)
# ----------------------------------------------------------------------------
def packed_gather_indices(lengths_np, batch, batch_pad, T):
    """pack_padded_sequence ordering: for each t, every batch row with
    length > t (lengths sorted descending).  Indexes the time-major padded
    flat layout (T * batch_pad, H)."""
    idx = []
    for t in range(T):
        for b in range(batch):
            if lengths_np[b] > t:
                idx.append(t * batch_pad + b)
    return np.asarray(idx, dtype=np.int32)


def decoder_rnn_forward(features, captions, lengths_np, params):
    emb = jnp.take(params["embed_w"], captions, axis=0)            # (B, Tc, E)
    x = jnp.concatenate([features[:, None, :], emb], axis=1)       # (B, T, E)
    B, T, E = x.shape
    H = params["hidden_size"]

    B_p = _round_up(B, 8)                                          # sublane pad
    if B_p != B:
        x = jnp.pad(x, ((0, B_p - B), (0, 0), (0, 0)))
    # Time-major, flattened so the whole per-layer input projection is one
    # MXU matmul inside the kernel.
    x_2d = jnp.swapaxes(x, 0, 1).reshape(T * B_p, E).astype(jnp.bfloat16)

    # Host-computed packed order (lengths are concrete numpy, as in PyTorch's
    # lengths.cpu()).  Padded index rows point at row 0 and are sliced off.
    # TODO(synk): concrete lengths => retrace per distinct length pattern; a
    # fixed-Np scalar-prefetch scheme would avoid that in deployment.
    idx_np = packed_gather_indices(lengths_np, B, B_p, T)
    N = int(idx_np.shape[0])
    Np = _round_up(max(N, 8), 8)
    idx_pad = np.zeros((Np,), np.int32)
    idx_pad[:N] = idx_np
    flat_idx = jnp.asarray(idx_pad)

    out_p = decoder_fused_pallas(
        flat_idx, x_2d, params["lstm"], params["lin_wT"], params["lin_b"],
        T=T, B=B_p, E=E, H=H, Np=Np)
    return out_p[:N, :params["vocab_size"]]                        # (N, V) f32


# ----------------------------------------------------------------------------
# Pure-JAX reference with identical bf16-matmul precision (no Pallas)
# ----------------------------------------------------------------------------
def decoder_rnn_reference(features, captions, lengths_np, torch_params):
    embed_w, lstm_layers, lin_w, lin_b = torch_params
    emb = jnp.take(embed_w, captions, axis=0)
    x = jnp.concatenate([features[:, None, :], emb], axis=1)       # (B, T, E)
    B, T, _ = x.shape
    bf16 = jnp.bfloat16

    h_seq = x
    for (w_ih, w_hh, b_ih, b_hh) in lstm_layers:
        H = w_hh.shape[1]
        w_ih_t = w_ih.T.astype(bf16)
        w_hh_t = w_hh.T.astype(bf16)
        bias = (b_ih + b_hh).astype(jnp.float32)

        def step(carry, x_t, w_ih_t=w_ih_t, w_hh_t=w_hh_t, bias=bias):
            h, c = carry
            gates = (
                jnp.dot(x_t.astype(bf16), w_ih_t, preferred_element_type=jnp.float32)
                + jnp.dot(h.astype(bf16), w_hh_t, preferred_element_type=jnp.float32)
                + bias
            )
            i, f, g, o = jnp.split(gates, 4, axis=-1)
            c = jax.nn.sigmoid(f) * c + jax.nn.sigmoid(i) * jnp.tanh(g)
            h = jax.nn.sigmoid(o) * jnp.tanh(c)
            return (h, c), h

        init = (jnp.zeros((B, H), jnp.float32), jnp.zeros((B, H), jnp.float32))
        _, ys = jax.lax.scan(step, init, jnp.swapaxes(h_seq, 0, 1))
        h_seq = jnp.swapaxes(ys, 0, 1)

    H = h_seq.shape[-1]
    idx = []
    for t in range(T):
        for b in range(B):
            if lengths_np[b] > t:
                idx.append(b * T + t)
    packed = h_seq.reshape(B * T, H)[jnp.asarray(np.array(idx, np.int32))]
    return (jnp.dot(packed.astype(bf16), lin_w.T.astype(bf16),
                    preferred_element_type=jnp.float32) + lin_b)


# ----------------------------------------------------------------------------
# Parameter construction (deterministic, PyTorch-shaped, then repacked)
# ----------------------------------------------------------------------------
def _reorder_ifgo_to_ifog(m):
    """m: (..., 4H) with gate columns in PyTorch order i|f|g|o -> i|f|o|g."""
    Hh = m.shape[-1] // 4
    return jnp.concatenate(
        [m[..., :2 * Hh], m[..., 3 * Hh:], m[..., 2 * Hh:3 * Hh]], axis=-1)


def build_params(key, vocab_size, embed_size, hidden_size, num_layers):
    keys = jax.random.split(key, 3 + 4 * num_layers)
    k = 1.0 / np.sqrt(hidden_size)

    embed_w = jax.random.normal(keys[0], (vocab_size, embed_size), jnp.float32)

    lstm_layers = []
    for l in range(num_layers):
        in_size = embed_size if l == 0 else hidden_size
        kk = keys[3 + 4 * l: 3 + 4 * (l + 1)]
        w_ih = jax.random.uniform(kk[0], (4 * hidden_size, in_size), jnp.float32, -k, k)
        w_hh = jax.random.uniform(kk[1], (4 * hidden_size, hidden_size), jnp.float32, -k, k)
        b_ih = jax.random.uniform(kk[2], (4 * hidden_size,), jnp.float32, -k, k)
        b_hh = jax.random.uniform(kk[3], (4 * hidden_size,), jnp.float32, -k, k)
        lstm_layers.append((w_ih, w_hh, b_ih, b_hh))

    lin_w = jax.random.uniform(keys[1], (vocab_size, hidden_size), jnp.float32, -k, k)
    lin_b = jax.random.uniform(keys[2], (vocab_size,), jnp.float32, -k, k)

    torch_params = (embed_w, lstm_layers, lin_w, lin_b)

    # Repack for the fused kernel: gate columns i|f|o|g, bf16 matmul operands.
    kernel_lstm = []
    for (w_ih, w_hh, b_ih, b_hh) in lstm_layers:
        kernel_lstm.append({
            "w_ih": _reorder_ifgo_to_ifog(w_ih.T).astype(jnp.bfloat16),  # (In, 4H)
            "w_hh": _reorder_ifgo_to_ifog(w_hh.T).astype(jnp.bfloat16),  # (H, 4H)
            "b": _reorder_ifgo_to_ifog((b_ih + b_hh).reshape(1, -1)),    # (1, 4H) f32
        })

    V_p = _round_up(vocab_size, 128)                      # lane-dense vocab pad
    lin_wT = jnp.zeros((hidden_size, V_p), jnp.float32).at[:, :vocab_size].set(lin_w.T)
    lin_b_row = jnp.zeros((1, V_p), jnp.float32).at[:, :vocab_size].set(lin_b)

    kernel_params = {
        "embed_w": embed_w,
        "lstm": kernel_lstm,
        "lin_wT": lin_wT.astype(jnp.bfloat16),            # (H, V_p) bf16
        "lin_b": lin_b_row,                               # (1, V_p) f32
        "vocab_size": vocab_size,
        "hidden_size": hidden_size,
    }
    return kernel_params, torch_params


# TODO(synk): predict()/token_to_string_conversion are host-side greedy decode +
# python vocab-dict string lookups; not representable as a TPU kernel.

if __name__ == "__main__":
    vocab_size, embed_size, hidden_size, num_layers = 50, 16, 32, 2
    B, T_cap = 4, 7

    root = jax.random.PRNGKey(0)
    k_par, k_feat, k_cap = jax.random.split(root, 3)

    kernel_params, torch_params = build_params(
        k_par, vocab_size, embed_size, hidden_size, num_layers)

    features = jax.random.normal(k_feat, (B, embed_size), jnp.float32)
    captions = jax.random.randint(k_cap, (B, T_cap), 0, vocab_size, jnp.int32)
    # lengths must be sorted descending (pack_padded_sequence, enforce_sorted=True)
    lengths_np = np.array([T_cap + 1, 6, 5, 3], dtype=np.int32)

    out = decoder_rnn_forward(features, captions, lengths_np, kernel_params)
    out = jax.block_until_ready(out)

    ref = decoder_rnn_reference(features, captions, lengths_np, torch_params)
    ref = jax.block_until_ready(ref)

    assert out.shape == (int(lengths_np.sum()), vocab_size), out.shape
    np.testing.assert_allclose(np.asarray(out), np.asarray(ref), rtol=2e-3, atol=2e-3)

    print("KERNEL_OK")
</pallas_src>

<mosaic_0001>
module attributes {stable_mosaic.version = 11 : i64} {
  func.func @kernel(%arg0: i32, %arg1: memref<24xi32, #tpu.memory_space<smem>>, %arg2: memref<64x16xbf16, #tpu.memory_space<vmem>>, %arg3: memref<16x128xbf16, #tpu.memory_space<vmem>>, %arg4: memref<32x128xbf16, #tpu.memory_space<vmem>>, %arg5: memref<1x128xf32, #tpu.memory_space<vmem>>, %arg6: memref<32x128xbf16, #tpu.memory_space<vmem>>, %arg7: memref<32x128xbf16, #tpu.memory_space<vmem>>, %arg8: memref<1x128xf32, #tpu.memory_space<vmem>>, %arg9: memref<32x128xbf16, #tpu.memory_space<vmem>>, %arg10: memref<1x128xf32, #tpu.memory_space<vmem>>, %arg11: memref<24x128xf32, #tpu.memory_space<vmem>>, %arg12: memref<64x32xf32, #tpu.memory_space<vmem>>, %arg13: memref<64x128xf32, #tpu.memory_space<vmem>>, %arg14: memref<8x32xf32, #tpu.memory_space<vmem>>, %arg15: memref<8x32xf32, #tpu.memory_space<vmem>>, %arg16: memref<24x32xf32, #tpu.memory_space<vmem>>, %arg17: memref<24x32xbf16, #tpu.memory_space<vmem>>) attributes {dimension_semantics = [#tpu.dimension_semantics<arbitrary>], iteration_bounds = array<i64: 1>, scalar_prefetch = 1 : i64, scratch_operands = 6 : i64, tpu.core_type = #tpu.core_type<tc>, window_params = [{pipeline_mode = #tpu.pipeline_mode<synchronous>, transform_indices = @transform_0, window_bounds = array<i64: 64, 16>}, {pipeline_mode = #tpu.pipeline_mode<synchronous>, transform_indices = @transform_1, window_bounds = array<i64: 16, 128>}, {pipeline_mode = #tpu.pipeline_mode<synchronous>, transform_indices = @transform_2, window_bounds = array<i64: 32, 128>}, {pipeline_mode = #tpu.pipeline_mode<synchronous>, transform_indices = @transform_3, window_bounds = array<i64: 1, 128>}, {pipeline_mode = #tpu.pipeline_mode<synchronous>, transform_indices = @transform_4, window_bounds = array<i64: 32, 128>}, {pipeline_mode = #tpu.pipeline_mode<synchronous>, transform_indices = @transform_5, window_bounds = array<i64: 32, 128>}, {pipeline_mode = #tpu.pipeline_mode<synchronous>, transform_indices = @transform_6, window_bounds = array<i64: 1, 128>}, {transform_indices = @transform_7, window_bounds = array<i64: 32, 128>}, {transform_indices = @transform_8, window_bounds = array<i64: 1, 128>}, {transform_indices = @transform_9, window_bounds = array<i64: 24, 128>}]} {
    %c0_i32 = arith.constant 0 : i32
    %0 = arith.cmpi eq, %arg0, %c0_i32 : i32
    %1 = arith.extui %0 : i1 to i32
    %c0_i32_0 = arith.constant 0 : i32
    %2 = arith.cmpi ne, %1, %c0_i32_0 : i32
    scf.if %2 {
      %c0_8 = arith.constant 0 : index
      %c0_9 = arith.constant 0 : index
      %10 = vector.load %arg3[%c0_8, %c0_9] : memref<16x128xbf16, #tpu.memory_space<vmem>>, vector<16x128xbf16>
      %c0_10 = arith.constant 0 : index
      %c0_11 = arith.constant 0 : index
      %11 = vector.load %arg4[%c0_10, %c0_11] : memref<32x128xbf16, #tpu.memory_space<vmem>>, vector<32x128xbf16>
      %c0_12 = arith.constant 0 : index
      %c0_13 = arith.constant 0 : index
      %12 = vector.load %arg5[%c0_12, %c0_13] : memref<1x128xf32, #tpu.memory_space<vmem>>, vector<1x128xf32>
      %c0_14 = arith.constant 0 : index
      %c0_15 = arith.constant 0 : index
      %13 = vector.load %arg2[%c0_14, %c0_15] : memref<64x16xbf16, #tpu.memory_space<vmem>>, vector<64x16xbf16>
      %cst_16 = arith.constant dense<0.000000e+00> : vector<64x128xf32>
      %14 = tpu.matmul %13, %10, %cst_16 {dimension_numbers = #tpu.dot_dimension_numbers<[1], [0], [0], [1], [0, 0, 1, 1], [], []>} : vector<64x16xbf16>, vector<16x128xbf16>, vector<64x128xf32> -> vector<64x128xf32>
      %15 = vector.shape_cast %12 : vector<1x128xf32> to vector<1x128xf32>
      %16 = vector.broadcast %15 : vector<1x128xf32> to vector<64x128xf32>
      %17 = arith.addf %14, %16 : vector<64x128xf32>
      %c0_17 = arith.constant 0 : index
      %c0_18 = arith.constant 0 : index
      %18 = vector.load %arg13[%c0_17, %c0_18] : memref<64x128xf32, #tpu.memory_space<vmem>>, vector<64x128xf32>
      tpu.vector_store %arg13[%c0_17, %c0_18], %17 {strides = array<i32>} : memref<64x128xf32, #tpu.memory_space<vmem>>, vector<64x128xf32>,
      %cst_19 = arith.constant 0.000000e+00 : f32
      %19 = vector.broadcast %cst_19 : f32 to vector<8x32xf32>
      %c0_20 = arith.constant 0 : index
      %c0_21 = arith.constant 0 : index
      %20 = vector.load %arg14[%c0_20, %c0_21] : memref<8x32xf32, #tpu.memory_space<vmem>>, vector<8x32xf32>
      tpu.vector_store %arg14[%c0_20, %c0_21], %19 {strides = array<i32>} : memref<8x32xf32, #tpu.memory_space<vmem>>, vector<8x32xf32>,
      %cst_22 = arith.constant 0.000000e+00 : f32
      %21 = vector.broadcast %cst_22 : f32 to vector<8x32xf32>
      %c0_23 = arith.constant 0 : index
      %c0_24 = arith.constant 0 : index
      %22 = vector.load %arg15[%c0_23, %c0_24] : memref<8x32xf32, #tpu.memory_space<vmem>>, vector<8x32xf32>
      tpu.vector_store %arg15[%c0_23, %c0_24], %21 {strides = array<i32>} : memref<8x32xf32, #tpu.memory_space<vmem>>, vector<8x32xf32>,
      %c0_i32_25 = arith.constant 0 : i32
      %c8_i32 = arith.constant 8 : i32
      %23 = arith.muli %c0_i32_25, %c8_i32 : i32
      %24 = tpu.assume_multiple %23, 8 : i32
      %c0_26 = arith.constant 0 : index
      %c0_27 = arith.constant 0 : index
      %25 = vector.load %arg14[%c0_26, %c0_27] : memref<8x32xf32, #tpu.memory_space<vmem>>, vector<8x32xf32>
      %26 = arith.truncf %25 : vector<8x32xf32> to vector<8x32xbf16>
      %cst_28 = arith.constant dense<0.000000e+00> : vector<8x128xf32>
      %27 = tpu.matmul %26, %11, %cst_28 {dimension_numbers = #tpu.dot_dimension_numbers<[1], [0], [0], [1], [0, 0, 1, 1], [], []>} : vector<8x32xbf16>, vector<32x128xbf16>, vector<8x128xf32> -> vector<8x128xf32>
      %28 = arith.index_cast %24 : i32 to index
      %c0_29 = arith.constant 0 : index
      %29 = vector.load %arg13[%28, %c0_29] : memref<64x128xf32, #tpu.memory_space<vmem>>, vector<8x128xf32>
      %30 = arith.addf %27, %29 : vector<8x128xf32>
      %31 = vector.extract_strided_slice %30 {offsets = [0, 0], sizes = [8, 96], strides = [1, 1]} : vector<8x128xf32> to vector<8x96xf32>
      %32 = arith.negf %31 : vector<8x96xf32>
      %33 = math.exp %32 : vector<8x96xf32>
      %cst_30 = arith.constant 1.000000e+00 : f32
      %34 = vector.broadcast %cst_30 : f32 to vector<8x96xf32>
      %35 = arith.addf %34, %33 : vector<8x96xf32>
      %36 = arith.divf %34, %35 : vector<8x96xf32>
      %37 = vector.extract_strided_slice %36 {offsets = [0, 0], sizes = [8, 32], strides = [1, 1]} : vector<8x96xf32> to vector<8x32xf32>
      %38 = vector.extract_strided_slice %36 {offsets = [0, 32], sizes = [8, 32], strides = [1, 1]} : vector<8x96xf32> to vector<8x32xf32>
      %39 = vector.extract_strided_slice %36 {offsets = [0, 64], sizes = [8, 32], strides = [1, 1]} : vector<8x96xf32> to vector<8x32xf32>
      %40 = vector.extract_strided_slice %30 {offsets = [0, 96], sizes = [8, 32], strides = [1, 1]} : vector<8x128xf32> to vector<8x32xf32>
      %41 = math.tanh %40 : vector<8x32xf32>
      %c0_31 = arith.constant 0 : index
      %c0_32 = arith.constant 0 : index
      %42 = vector.load %arg15[%c0_31, %c0_32] : memref<8x32xf32, #tpu.memory_space<vmem>>, vector<8x32xf32>
      %43 = arith.mulf %38, %42 : vector<8x32xf32>
      %44 = arith.mulf %37, %41 : vector<8x32xf32>
      %45 = arith.addf %43, %44 : vector<8x32xf32>
      %46 = math.tanh %45 : vector<8x32xf32>
      %47 = arith.mulf %39, %46 : vector<8x32xf32>
      %c0_33 = arith.constant 0 : index
      %c0_34 = arith.constant 0 : index
      %48 = vector.load %arg15[%c0_33, %c0_34] : memref<8x32xf32, #tpu.memory_space<vmem>>, vector<8x32xf32>
      tpu.vector_store %arg15[%c0_33, %c0_34], %45 {strides = array<i32>} : memref<8x32xf32, #tpu.memory_space<vmem>>, vector<8x32xf32>,
      %c0_35 = arith.constant 0 : index
      %c0_36 = arith.constant 0 : index
      %49 = vector.load %arg14[%c0_35, %c0_36] : memref<8x32xf32, #tpu.memory_space<vmem>>, vector<8x32xf32>
      tpu.vector_store %arg14[%c0_35, %c0_36], %47 {strides = array<i32>} : memref<8x32xf32, #tpu.memory_space<vmem>>, vector<8x32xf32>,
      %50 = arith.index_cast %24 : i32 to index
      %c0_37 = arith.constant 0 : index
      %51 = vector.load %arg12[%50, %c0_37] : memref<64x32xf32, #tpu.memory_space<vmem>>, vector<8x32xf32>
      tpu.vector_store %arg12[%50, %c0_37], %47 {strides = array<i32>} : memref<64x32xf32, #tpu.memory_space<vmem>>, vector<8x32xf32>,
      %c1_i32 = arith.constant 1 : i32
      %c8_i32_38 = arith.constant 8 : i32
      %52 = arith.muli %c1_i32, %c8_i32_38 : i32
      %53 = tpu.assume_multiple %52, 8 : i32
      %c0_39 = arith.constant 0 : index
      %c0_40 = arith.constant 0 : index
      %54 = vector.load %arg14[%c0_39, %c0_40] : memref<8x32xf32, #tpu.memory_space<vmem>>, vector<8x32xf32>
      %55 = arith.truncf %54 : vector<8x32xf32> to vector<8x32xbf16>
      %cst_41 = arith.constant dense<0.000000e+00> : vector<8x128xf32>
      %56 = tpu.matmul %55, %11, %cst_41 {dimension_numbers = #tpu.dot_dimension_numbers<[1], [0], [0], [1], [0, 0, 1, 1], [], []>} : vector<8x32xbf16>, vector<32x128xbf16>, vector<8x128xf32> -> vector<8x128xf32>
      %57 = arith.index_cast %53 : i32 to index
      %c0_42 = arith.constant 0 : index
      %58 = vector.load %arg13[%57, %c0_42] : memref<64x128xf32, #tpu.memory_space<vmem>>, vector<8x128xf32>
      %59 = arith.addf %56, %58 : vector<8x128xf32>
      %60 = vector.extract_strided_slice %59 {offsets = [0, 0], sizes = [8, 96], strides = [1, 1]} : vector<8x128xf32> to vector<8x96xf32>
      %61 = arith.negf %60 : vector<8x96xf32>
      %62 = math.exp %61 : vector<8x96xf32>
      %cst_43 = arith.constant 1.000000e+00 : f32
      %63 = vector.broadcast %cst_43 : f32 to vector<8x96xf32>
      %64 = arith.addf %63, %62 : vector<8x96xf32>
      %65 = arith.divf %63, %64 : vector<8x96xf32>
      %66 = vector.extract_strided_slice %65 {offsets = [0, 0], sizes = [8, 32], strides = [1, 1]} : vector<8x96xf32> to vector<8x32xf32>
      %67 = vector.extract_strided_slice %65 {offsets = [0, 32], sizes = [8, 32], strides = [1, 1]} : vector<8x96xf32> to vector<8x32xf32>
      %68 = vector.extract_strided_slice %65 {offsets = [0, 64], sizes = [8, 32], strides = [1, 1]} : vector<8x96xf32> to vector<8x32xf32>
      %69 = vector.extract_strided_slice %59 {offsets = [0, 96], sizes = [8, 32], strides = [1, 1]} : vector<8x128xf32> to vector<8x32xf32>
      %70 = math.tanh %69 : vector<8x32xf32>
      %c0_44 = arith.constant 0 : index
      %c0_45 = arith.constant 0 : index
      %71 = vector.load %arg15[%c0_44, %c0_45] : memref<8x32xf32, #tpu.memory_space<vmem>>, vector<8x32xf32>
      %72 = arith.mulf %67, %71 : vector<8x32xf32>
      %73 = arith.mulf %66, %70 : vector<8x32xf32>
      %74 = arith.addf %72, %73 : vector<8x32xf32>
      %75 = math.tanh %74 : vector<8x32xf32>
      %76 = arith.mulf %68, %75 : vector<8x32xf32>
      %c0_46 = arith.constant 0 : index
      %c0_47 = arith.constant 0 : index
      %77 = vector.load %arg15[%c0_46, %c0_47] : memref<8x32xf32, #tpu.memory_space<vmem>>, vector<8x32xf32>
      tpu.vector_store %arg15[%c0_46, %c0_47], %74 {strides = array<i32>} : memref<8x32xf32, #tpu.memory_space<vmem>>, vector<8x32xf32>,
      %c0_48 = arith.constant 0 : index
      %c0_49 = arith.constant 0 : index
      %78 = vector.load %arg14[%c0_48, %c0_49] : memref<8x32xf32, #tpu.memory_space<vmem>>, vector<8x32xf32>
      tpu.vector_store %arg14[%c0_48, %c0_49], %76 {strides = array<i32>} : memref<8x32xf32, #tpu.memory_space<vmem>>, vector<8x32xf32>,
      %79 = arith.index_cast %53 : i32 to index
      %c0_50 = arith.constant 0 : index
      %80 = vector.load %arg12[%79, %c0_50] : memref<64x32xf32, #tpu.memory_space<vmem>>, vector<8x32xf32>
      tpu.vector_store %arg12[%79, %c0_50], %76 {strides = array<i32>} : memref<64x32xf32, #tpu.memory_space<vmem>>, vector<8x32xf32>,
      %c2_i32 = arith.constant 2 : i32
      %c8_i32_51 = arith.constant 8 : i32
      %81 = arith.muli %c2_i32, %c8_i32_51 : i32
      %82 = tpu.assume_multiple %81, 8 : i32
      %c0_52 = arith.constant 0 : index
      %c0_53 = arith.constant 0 : index
      %83 = vector.load %arg14[%c0_52, %c0_53] : memref<8x32xf32, #tpu.memory_space<vmem>>, vector<8x32xf32>
      %84 = arith.truncf %83 : vector<8x32xf32> to vector<8x32xbf16>
      %cst_54 = arith.constant dense<0.000000e+00> : vector<8x128xf32>
      %85 = tpu.matmul %84, %11, %cst_54 {dimension_numbers = #tpu.dot_dimension_numbers<[1], [0], [0], [1], [0, 0, 1, 1], [], []>} : vector<8x32xbf16>, vector<32x128xbf16>, vector<8x128xf32> -> vector<8x128xf32>
      %86 = arith.index_cast %82 : i32 to index
      %c0_55 = arith.constant 0 : index
      %87 = vector.load %arg13[%86, %c0_55] : memref<64x128xf32, #tpu.memory_space<vmem>>, vector<8x128xf32>
      %88 = arith.addf %85, %87 : vector<8x128xf32>
      %89 = vector.extract_strided_slice %88 {offsets = [0, 0], sizes = [8, 96], strides = [1, 1]} : vector<8x128xf32> to vector<8x96xf32>
      %90 = arith.negf %89 : vector<8x96xf32>
      %91 = math.exp %90 : vector<8x96xf32>
      %cst_56 = arith.constant 1.000000e+00 : f32
      %92 = vector.broadcast %cst_56 : f32 to vector<8x96xf32>
      %93 = arith.addf %92, %91 : vector<8x96xf32>
      %94 = arith.divf %92, %93 : vector<8x96xf32>
      %95 = vector.extract_strided_slice %94 {offsets = [0, 0], sizes = [8, 32], strides = [1, 1]} : vector<8x96xf32> to vector<8x32xf32>
      %96 = vector.extract_strided_slice %94 {offsets = [0, 32], sizes = [8, 32], strides = [1, 1]} : vector<8x96xf32> to vector<8x32xf32>
      %97 = vector.extract_strided_slice %94 {offsets = [0, 64], sizes = [8, 32], strides = [1, 1]} : vector<8x96xf32> to vector<8x32xf32>
      %98 = vector.extract_strided_slice %88 {offsets = [0, 96], sizes = [8, 32], strides = [1, 1]} : vector<8x128xf32> to vector<8x32xf32>
      %99 = math.tanh %98 : vector<8x32xf32>
      %c0_57 = arith.constant 0 : index
      %c0_58 = arith.constant 0 : index
      %100 = vector.load %arg15[%c0_57, %c0_58] : memref<8x32xf32, #tpu.memory_space<vmem>>, vector<8x32xf32>
      %101 = arith.mulf %96, %100 : vector<8x32xf32>
      %102 = arith.mulf %95, %99 : vector<8x32xf32>
      %103 = arith.addf %101, %102 : vector<8x32xf32>
      %104 = math.tanh %103 : vector<8x32xf32>
      %105 = arith.mulf %97, %104 : vector<8x32xf32>
      %c0_59 = arith.constant 0 : index
      %c0_60 = arith.constant 0 : index
      %106 = vector.load %arg15[%c0_59, %c0_60] : memref<8x32xf32, #tpu.memory_space<vmem>>, vector<8x32xf32>
      tpu.vector_store %arg15[%c0_59, %c0_60], %103 {strides = array<i32>} : memref<8x32xf32, #tpu.memory_space<vmem>>, vector<8x32xf32>,
      %c0_61 = arith.constant 0 : index
      %c0_62 = arith.constant 0 : index
      %107 = vector.load %arg14[%c0_61, %c0_62] : memref<8x32xf32, #tpu.memory_space<vmem>>, vector<8x32xf32>
      tpu.vector_store %arg14[%c0_61, %c0_62], %105 {strides = array<i32>} : memref<8x32xf32, #tpu.memory_space<vmem>>, vector<8x32xf32>,
      %108 = arith.index_cast %82 : i32 to index
      %c0_63 = arith.constant 0 : index
      %109 = vector.load %arg12[%108, %c0_63] : memref<64x32xf32, #tpu.memory_space<vmem>>, vector<8x32xf32>
      tpu.vector_store %arg12[%108, %c0_63], %105 {strides = array<i32>} : memref<64x32xf32, #tpu.memory_space<vmem>>, vector<8x32xf32>,
      %c3_i32 = arith.constant 3 : i32
      %c8_i32_64 = arith.constant 8 : i32
      %110 = arith.muli %c3_i32, %c8_i32_64 : i32
      %111 = tpu.assume_multiple %110, 8 : i32
      %c0_65 = arith.constant 0 : index
      %c0_66 = arith.constant 0 : index
      %112 = vector.load %arg14[%c0_65, %c0_66] : memref<8x32xf32, #tpu.memory_space<vmem>>, vector<8x32xf32>
      %113 = arith.truncf %112 : vector<8x32xf32> to vector<8x32xbf16>
      %cst_67 = arith.constant dense<0.000000e+00> : vector<8x128xf32>
      %114 = tpu.matmul %113, %11, %cst_67 {dimension_numbers = #tpu.dot_dimension_numbers<[1], [0], [0], [1], [0, 0, 1, 1], [], []>} : vector<8x32xbf16>, vector<32x128xbf16>, vector<8x128xf32> -> vector<8x128xf32>
      %115 = arith.index_cast %111 : i32 to index
      %c0_68 = arith.constant 0 : index
      %116 = vector.load %arg13[%115, %c0_68] : memref<64x128xf32, #tpu.memory_space<vmem>>, vector<8x128xf32>
      %117 = arith.addf %114, %116 : vector<8x128xf32>
      %118 = vector.extract_strided_slice %117 {offsets = [0, 0], sizes = [8, 96], strides = [1, 1]} : vector<8x128xf32> to vector<8x96xf32>
      %119 = arith.negf %118 : vector<8x96xf32>
      %120 = math.exp %119 : vector<8x96xf32>
      %cst_69 = arith.constant 1.000000e+00 : f32
      %121 = vector.broadcast %cst_69 : f32 to vector<8x96xf32>
      %122 = arith.addf %121, %120 : vector<8x96xf32>
      %123 = arith.divf %121, %122 : vector<8x96xf32>
      %124 = vector.extract_strided_slice %123 {offsets = [0, 0], sizes = [8, 32], strides = [1, 1]} : vector<8x96xf32> to vector<8x32xf32>
      %125 = vector.extract_strided_slice %123 {offsets = [0, 32], sizes = [8, 32], strides = [1, 1]} : vector<8x96xf32> to vector<8x32xf32>
      %126 = vector.extract_strided_slice %123 {offsets = [0, 64], sizes = [8, 32], strides = [1, 1]} : vector<8x96xf32> to vector<8x32xf32>
      %127 = vector.extract_strided_slice %117 {offsets = [0, 96], sizes = [8, 32], strides = [1, 1]} : vector<8x128xf32> to vector<8x32xf32>
      %128 = math.tanh %127 : vector<8x32xf32>
      %c0_70 = arith.constant 0 : index
      %c0_71 = arith.constant 0 : index
      %129 = vector.load %arg15[%c0_70, %c0_71] : memref<8x32xf32, #tpu.memory_space<vmem>>, vector<8x32xf32>
      %130 = arith.mulf %125, %129 : vector<8x32xf32>
      %131 = arith.mulf %124, %128 : vector<8x32xf32>
      %132 = arith.addf %130, %131 : vector<8x32xf32>
      %133 = math.tanh %132 : vector<8x32xf32>
      %134 = arith.mulf %126, %133 : vector<8x32xf32>
      %c0_72 = arith.constant 0 : index
      %c0_73 = arith.constant 0 : index
      %135 = vector.load %arg15[%c0_72, %c0_73] : memref<8x32xf32, #tpu.memory_space<vmem>>, vector<8x32xf32>
      tpu.vector_store %arg15[%c0_72, %c0_73], %132 {strides = array<i32>} : memref<8x32xf32, #tpu.memory_space<vmem>>, vector<8x32xf32>,
      %c0_74 = arith.constant 0 : index
      %c0_75 = arith.constant 0 : index
      %136 = vector.load %arg14[%c0_74, %c0_75] : memref<8x32xf32, #tpu.memory_space<vmem>>, vector<8x32xf32>
      tpu.vector_store %arg14[%c0_74, %c0_75], %134 {strides = array<i32>} : memref<8x32xf32, #tpu.memory_space<vmem>>, vector<8x32xf32>,
      %137 = arith.index_cast %111 : i32 to index
      %c0_76 = arith.constant 0 : index
      %138 = vector.load %arg12[%137, %c0_76] : memref<64x32xf32, #tpu.memory_space<vmem>>, vector<8x32xf32>
      tpu.vector_store %arg12[%137, %c0_76], %134 {strides = array<i32>} : memref<64x32xf32, #tpu.memory_space<vmem>>, vector<8x32xf32>,
      %c4_i32 = arith.constant 4 : i32
      %c8_i32_77 = arith.constant 8 : i32
      %139 = arith.muli %c4_i32, %c8_i32_77 : i32
      %140 = tpu.assume_multiple %139, 8 : i32
      %c0_78 = arith.constant 0 : index
      %c0_79 = arith.constant 0 : index
      %141 = vector.load %arg14[%c0_78, %c0_79] : memref<8x32xf32, #tpu.memory_space<vmem>>, vector<8x32xf32>
      %142 = arith.truncf %141 : vector<8x32xf32> to vector<8x32xbf16>
      %cst_80 = arith.constant dense<0.000000e+00> : vector<8x128xf32>
      %143 = tpu.matmul %142, %11, %cst_80 {dimension_numbers = #tpu.dot_dimension_numbers<[1], [0], [0], [1], [0, 0, 1, 1], [], []>} : vector<8x32xbf16>, vector<32x128xbf16>, vector<8x128xf32> -> vector<8x128xf32>
      %144 = arith.index_cast %140 : i32 to index
      %c0_81 = arith.constant 0 : index
      %145 = vector.load %arg13[%144, %c0_81] : memref<64x128xf32, #tpu.memory_space<vmem>>, vector<8x128xf32>
      %146 = arith.addf %143, %145 : vector<8x128xf32>
      %147 = vector.extract_strided_slice %146 {offsets = [0, 0], sizes = [8, 96], strides = [1, 1]} : vector<8x128xf32> to vector<8x96xf32>
      %148 = arith.negf %147 : vector<8x96xf32>
      %149 = math.exp %148 : vector<8x96xf32>
      %cst_82 = arith.constant 1.000000e+00 : f32
      %150 = vector.broadcast %cst_82 : f32 to vector<8x96xf32>
      %151 = arith.addf %150, %149 : vector<8x96xf32>
      %152 = arith.divf %150, %151 : vector<8x96xf32>
      %153 = vector.extract_strided_slice %152 {offsets = [0, 0], sizes = [8, 32], strides = [1, 1]} : vector<8x96xf32> to vector<8x32xf32>
      %154 = vector.extract_strided_slice %152 {offsets = [0, 32], sizes = [8, 32], strides = [1, 1]} : vector<8x96xf32> to vector<8x32xf32>
      %155 = vector.extract_strided_slice %152 {offsets = [0, 64], sizes = [8, 32], strides = [1, 1]} : vector<8x96xf32> to vector<8x32xf32>
      %156 = vector.extract_strided_slice %146 {offsets = [0, 96], sizes = [8, 32], strides = [1, 1]} : vector<8x128xf32> to vector<8x32xf32>
      %157 = math.tanh %156 : vector<8x32xf32>
      %c0_83 = arith.constant 0 : index
      %c0_84 = arith.constant 0 : index
      %158 = vector.load %arg15[%c0_83, %c0_84] : memref<8x32xf32, #tpu.memory_space<vmem>>, vector<8x32xf32>
      %159 = arith.mulf %154, %158 : vector<8x32xf32>
      %160 = arith.mulf %153, %157 : vector<8x32xf32>
      %161 = arith.addf %159, %160 : vector<8x32xf32>
      %162 = math.tanh %161 : vector<8x32xf32>
      %163 = arith.mulf %155, %162 : vector<8x32xf32>
      %c0_85 = arith.constant 0 : index
      %c0_86 = arith.constant 0 : index
      %164 = vector.load %arg15[%c0_85, %c0_86] : memref<8x32xf32, #tpu.memory_space<vmem>>, vector<8x32xf32>
      tpu.vector_store %arg15[%c0_85, %c0_86], %161 {strides = array<i32>} : memref<8x32xf32, #tpu.memory_space<vmem>>, vector<8x32xf32>,
      %c0_87 = arith.constant 0 : index
      %c0_88 = arith.constant 0 : index
      %165 = vector.load %arg14[%c0_87, %c0_88] : memref<8x32xf32, #tpu.memory_space<vmem>>, vector<8x32xf32>
      tpu.vector_store %arg14[%c0_87, %c0_88], %163 {strides = array<i32>} : memref<8x32xf32, #tpu.memory_space<vmem>>, vector<8x32xf32>,
      %166 = arith.index_cast %140 : i32 to index
      %c0_89 = arith.constant 0 : index
      %167 = vector.load %arg12[%166, %c0_89] : memref<64x32xf32, #tpu.memory_space<vmem>>, vector<8x32xf32>
      tpu.vector_store %arg12[%166, %c0_89], %163 {strides = array<i32>} : memref<64x32xf32, #tpu.memory_space<vmem>>, vector<8x32xf32>,
      %c5_i32 = arith.constant 5 : i32
      %c8_i32_90 = arith.constant 8 : i32
      %168 = arith.muli %c5_i32, %c8_i32_90 : i32
      %169 = tpu.assume_multiple %168, 8 : i32
      %c0_91 = arith.constant 0 : index
      %c0_92 = arith.constant 0 : index
      %170 = vector.load %arg14[%c0_91, %c0_92] : memref<8x32xf32, #tpu.memory_space<vmem>>, vector<8x32xf32>
      %171 = arith.truncf %170 : vector<8x32xf32> to vector<8x32xbf16>
      %cst_93 = arith.constant dense<0.000000e+00> : vector<8x128xf32>
      %172 = tpu.matmul %171, %11, %cst_93 {dimension_numbers = #tpu.dot_dimension_numbers<[1], [0], [0], [1], [0, 0, 1, 1], [], []>} : vector<8x32xbf16>, vector<32x128xbf16>, vector<8x128xf32> -> vector<8x128xf32>
      %173 = arith.index_cast %169 : i32 to index
      %c0_94 = arith.constant 0 : index
      %174 = vector.load %arg13[%173, %c0_94] : memref<64x128xf32, #tpu.memory_space<vmem>>, vector<8x128xf32>
      %175 = arith.addf %172, %174 : vector<8x128xf32>
      %176 = vector.extract_strided_slice %175 {offsets = [0, 0], sizes = [8, 96], strides = [1, 1]} : vector<8x128xf32> to vector<8x96xf32>
      %177 = arith.negf %176 : vector<8x96xf32>
      %178 = math.exp %177 : vector<8x96xf32>
      %cst_95 = arith.constant 1.000000e+00 : f32
      %179 = vector.broadcast %cst_95 : f32 to vector<8x96xf32>
      %180 = arith.addf %179, %178 : vector<8x96xf32>
      %181 = arith.divf %179, %180 : vector<8x96xf32>
      %182 = vector.extract_strided_slice %181 {offsets = [0, 0], sizes = [8, 32], strides = [1, 1]} : vector<8x96xf32> to vector<8x32xf32>
      %183 = vector.extract_strided_slice %181 {offsets = [0, 32], sizes = [8, 32], strides = [1, 1]} : vector<8x96xf32> to vector<8x32xf32>
      %184 = vector.extract_strided_slice %181 {offsets = [0, 64], sizes = [8, 32], strides = [1, 1]} : vector<8x96xf32> to vector<8x32xf32>
      %185 = vector.extract_strided_slice %175 {offsets = [0, 96], sizes = [8, 32], strides = [1, 1]} : vector<8x128xf32> to vector<8x32xf32>
      %186 = math.tanh %185 : vector<8x32xf32>
      %c0_96 = arith.constant 0 : index
      %c0_97 = arith.constant 0 : index
      %187 = vector.load %arg15[%c0_96, %c0_97] : memref<8x32xf32, #tpu.memory_space<vmem>>, vector<8x32xf32>
      %188 = arith.mulf %183, %187 : vector<8x32xf32>
      %189 = arith.mulf %182, %186 : vector<8x32xf32>
      %190 = arith.addf %188, %189 : vector<8x32xf32>
      %191 = math.tanh %190 : vector<8x32xf32>
      %192 = arith.mulf %184, %191 : vector<8x32xf32>
      %c0_98 = arith.constant 0 : index
      %c0_99 = arith.constant 0 : index
      %193 = vector.load %arg15[%c0_98, %c0_99] : memref<8x32xf32, #tpu.memory_space<vmem>>, vector<8x32xf32>
      tpu.vector_store %arg15[%c0_98, %c0_99], %190 {strides = array<i32>} : memref<8x32xf32, #tpu.memory_space<vmem>>, vector<8x32xf32>,
      %c0_100 = arith.constant 0 : index
      %c0_101 = arith.constant 0 : index
      %194 = vector.load %arg14[%c0_100, %c0_101] : memref<8x32xf32, #tpu.memory_space<vmem>>, vector<8x32xf32>
      tpu.vector_store %arg14[%c0_100, %c0_101], %192 {strides = array<i32>} : memref<8x32xf32, #tpu.memory_space<vmem>>, vector<8x32xf32>,
      %195 = arith.index_cast %169 : i32 to index
      %c0_102 = arith.constant 0 : index
      %196 = vector.load %arg12[%195, %c0_102] : memref<64x32xf32, #tpu.memory_space<vmem>>, vector<8x32xf32>
      tpu.vector_store %arg12[%195, %c0_102], %192 {strides = array<i32>} : memref<64x32xf32, #tpu.memory_space<vmem>>, vector<8x32xf32>,
      %c6_i32 = arith.constant 6 : i32
      %c8_i32_103 = arith.constant 8 : i32
      %197 = arith.muli %c6_i32, %c8_i32_103 : i32
      %198 = tpu.assume_multiple %197, 8 : i32
      %c0_104 = arith.constant 0 : index
      %c0_105 = arith.constant 0 : index
      %199 = vector.load %arg14[%c0_104, %c0_105] : memref<8x32xf32, #tpu.memory_space<vmem>>, vector<8x32xf32>
      %200 = arith.truncf %199 : vector<8x32xf32> to vector<8x32xbf16>
      %cst_106 = arith.constant dense<0.000000e+00> : vector<8x128xf32>
      %201 = tpu.matmul %200, %11, %cst_106 {dimension_numbers = #tpu.dot_dimension_numbers<[1], [0], [0], [1], [0, 0, 1, 1], [], []>} : vector<8x32xbf16>, vector<32x128xbf16>, vector<8x128xf32> -> vector<8x128xf32>
      %202 = arith.index_cast %198 : i32 to index
      %c0_107 = arith.constant 0 : index
      %203 = vector.load %arg13[%202, %c0_107] : memref<64x128xf32, #tpu.memory_space<vmem>>, vector<8x128xf32>
      %204 = arith.addf %201, %203 : vector<8x128xf32>
      %205 = vector.extract_strided_slice %204 {offsets = [0, 0], sizes = [8, 96], strides = [1, 1]} : vector<8x128xf32> to vector<8x96xf32>
      %206 = arith.negf %205 : vector<8x96xf32>
      %207 = math.exp %206 : vector<8x96xf32>
      %cst_108 = arith.constant 1.000000e+00 : f32
      %208 = vector.broadcast %cst_108 : f32 to vector<8x96xf32>
      %209 = arith.addf %208, %207 : vector<8x96xf32>
      %210 = arith.divf %208, %209 : vector<8x96xf32>
      %211 = vector.extract_strided_slice %210 {offsets = [0, 0], sizes = [8, 32], strides = [1, 1]} : vector<8x96xf32> to vector<8x32xf32>
      %212 = vector.extract_strided_slice %210 {offsets = [0, 32], sizes = [8, 32], strides = [1, 1]} : vector<8x96xf32> to vector<8x32xf32>
      %213 = vector.extract_strided_slice %210 {offsets = [0, 64], sizes = [8, 32], strides = [1, 1]} : vector<8x96xf32> to vector<8x32xf32>
      %214 = vector.extract_strided_slice %204 {offsets = [0, 96], sizes = [8, 32], strides = [1, 1]} : vector<8x128xf32> to vector<8x32xf32>
      %215 = math.tanh %214 : vector<8x32xf32>
      %c0_109 = arith.constant 0 : index
      %c0_110 = arith.constant 0 : index
      %216 = vector.load %arg15[%c0_109, %c0_110] : memref<8x32xf32, #tpu.memory_space<vmem>>, vector<8x32xf32>
      %217 = arith.mulf %212, %216 : vector<8x32xf32>
      %218 = arith.mulf %211, %215 : vector<8x32xf32>
      %219 = arith.addf %217, %218 : vector<8x32xf32>
      %220 = math.tanh %219 : vector<8x32xf32>
      %221 = arith.mulf %213, %220 : vector<8x32xf32>
      %c0_111 = arith.constant 0 : index
      %c0_112 = arith.constant 0 : index
      %222 = vector.load %arg15[%c0_111, %c0_112] : memref<8x32xf32, #tpu.memory_space<vmem>>, vector<8x32xf32>
      tpu.vector_store %arg15[%c0_111, %c0_112], %219 {strides = array<i32>} : memref<8x32xf32, #tpu.memory_space<vmem>>, vector<8x32xf32>,
      %c0_113 = arith.constant 0 : index
      %c0_114 = arith.constant 0 : index
      %223 = vector.load %arg14[%c0_113, %c0_114] : memref<8x32xf32, #tpu.memory_space<vmem>>, vector<8x32xf32>
      tpu.vector_store %arg14[%c0_113, %c0_114], %221 {strides = array<i32>} : memref<8x32xf32, #tpu.memory_space<vmem>>, vector<8x32xf32>,
      %224 = arith.index_cast %198 : i32 to index
      %c0_115 = arith.constant 0 : index
      %225 = vector.load %arg12[%224, %c0_115] : memref<64x32xf32, #tpu.memory_space<vmem>>, vector<8x32xf32>
      tpu.vector_store %arg12[%224, %c0_115], %221 {strides = array<i32>} : memref<64x32xf32, #tpu.memory_space<vmem>>, vector<8x32xf32>,
      %c7_i32 = arith.constant 7 : i32
      %c8_i32_116 = arith.constant 8 : i32
      %226 = arith.muli %c7_i32, %c8_i32_116 : i32
      %227 = tpu.assume_multiple %226, 8 : i32
      %c0_117 = arith.constant 0 : index
      %c0_118 = arith.constant 0 : index
      %228 = vector.load %arg14[%c0_117, %c0_118] : memref<8x32xf32, #tpu.memory_space<vmem>>, vector<8x32xf32>
      %229 = arith.truncf %228 : vector<8x32xf32> to vector<8x32xbf16>
      %cst_119 = arith.constant dense<0.000000e+00> : vector<8x128xf32>
      %230 = tpu.matmul %229, %11, %cst_119 {dimension_numbers = #tpu.dot_dimension_numbers<[1], [0], [0], [1], [0, 0, 1, 1], [], []>} : vector<8x32xbf16>, vector<32x128xbf16>, vector<8x128xf32> -> vector<8x128xf32>
      %231 = arith.index_cast %227 : i32 to index
      %c0_120 = arith.constant 0 : index
      %232 = vector.load %arg13[%231, %c0_120] : memref<64x128xf32, #tpu.memory_space<vmem>>, vector<8x128xf32>
      %233 = arith.addf %230, %232 : vector<8x128xf32>
      %234 = vector.extract_strided_slice %233 {offsets = [0, 0], sizes = [8, 96], strides = [1, 1]} : vector<8x128xf32> to vector<8x96xf32>
      %235 = arith.negf %234 : vector<8x96xf32>
      %236 = math.exp %235 : vector<8x96xf32>
      %cst_121 = arith.constant 1.000000e+00 : f32
      %237 = vector.broadcast %cst_121 : f32 to vector<8x96xf32>
      %238 = arith.addf %237, %236 : vector<8x96xf32>
      %239 = arith.divf %237, %238 : vector<8x96xf32>
      %240 = vector.extract_strided_slice %239 {offsets = [0, 0], sizes = [8, 32], strides = [1, 1]} : vector<8x96xf32> to vector<8x32xf32>
      %241 = vector.extract_strided_slice %239 {offsets = [0, 32], sizes = [8, 32], strides = [1, 1]} : vector<8x96xf32> to vector<8x32xf32>
      %242 = vector.extract_strided_slice %239 {offsets = [0, 64], sizes = [8, 32], strides = [1, 1]} : vector<8x96xf32> to vector<8x32xf32>
      %243 = vector.extract_strided_slice %233 {offsets = [0, 96], sizes = [8, 32], strides = [1, 1]} : vector<8x128xf32> to vector<8x32xf32>
      %244 = math.tanh %243 : vector<8x32xf32>
      %c0_122 = arith.constant 0 : index
      %c0_123 = arith.constant 0 : index
      %245 = vector.load %arg15[%c0_122, %c0_123] : memref<8x32xf32, #tpu.memory_space<vmem>>, vector<8x32xf32>
      %246 = arith.mulf %241, %245 : vector<8x32xf32>
      %247 = arith.mulf %240, %244 : vector<8x32xf32>
      %248 = arith.addf %246, %247 : vector<8x32xf32>
      %249 = math.tanh %248 : vector<8x32xf32>
      %250 = arith.mulf %242, %249 : vector<8x32xf32>
      %c0_124 = arith.constant 0 : index
      %c0_125 = arith.constant 0 : index
      %251 = vector.load %arg15[%c0_124, %c0_125] : memref<8x32xf32, #tpu.memory_space<vmem>>, vector<8x32xf32>
      tpu.vector_store %arg15[%c0_124, %c0_125], %248 {strides = array<i32>} : memref<8x32xf32, #tpu.memory_space<vmem>>, vector<8x32xf32>,
      %c0_126 = arith.constant 0 : index
      %c0_127 = arith.constant 0 : index
      %252 = vector.load %arg14[%c0_126, %c0_127] : memref<8x32xf32, #tpu.memory_space<vmem>>, vector<8x32xf32>
      tpu.vector_store %arg14[%c0_126, %c0_127], %250 {strides = array<i32>} : memref<8x32xf32, #tpu.memory_space<vmem>>, vector<8x32xf32>,
      %253 = arith.index_cast %227 : i32 to index
      %c0_128 = arith.constant 0 : index
      %254 = vector.load %arg12[%253, %c0_128] : memref<64x32xf32, #tpu.memory_space<vmem>>, vector<8x32xf32>
      tpu.vector_store %arg12[%253, %c0_128], %250 {strides = array<i32>} : memref<64x32xf32, #tpu.memory_space<vmem>>, vector<8x32xf32>,
      %c8_i32_129 = arith.constant 8 : i32
      %c0_130 = arith.constant 0 : index
      %c0_131 = arith.constant 0 : index
      %255 = vector.load %arg6[%c0_130, %c0_131] : memref<32x128xbf16, #tpu.memory_space<vmem>>, vector<32x128xbf16>
      %c0_132 = arith.constant 0 : index
      %c0_133 = arith.constant 0 : index
      %256 = vector.load %arg7[%c0_132, %c0_133] : memref<32x128xbf16, #tpu.memory_space<vmem>>, vector<32x128xbf16>
      %c0_134 = arith.constant 0 : index
      %c0_135 = arith.constant 0 : index
      %257 = vector.load %arg8[%c0_134, %c0_135] : memref<1x128xf32, #tpu.memory_space<vmem>>, vector<1x128xf32>
      %c0_136 = arith.constant 0 : index
      %c0_137 = arith.constant 0 : index
      %258 = vector.load %arg12[%c0_136, %c0_137] : memref<64x32xf32, #tpu.memory_space<vmem>>, vector<64x32xf32>
      %259 = arith.truncf %258 : vector<64x32xf32> to vector<64x32xbf16>
      %cst_138 = arith.constant dense<0.000000e+00> : vector<64x128xf32>
      %260 = tpu.matmul %259, %255, %cst_138 {dimension_numbers = #tpu.dot_dimension_numbers<[1], [0], [0], [1], [0, 0, 1, 1], [], []>} : vector<64x32xbf16>, vector<32x128xbf16>, vector<64x128xf32> -> vector<64x128xf32>
      %261 = vector.shape_cast %257 : vector<1x128xf32> to vector<1x128xf32>
      %262 = vector.broadcast %261 : vector<1x128xf32> to vector<64x128xf32>
      %263 = arith.addf %260, %262 : vector<64x128xf32>
      %c0_139 = arith.constant 0 : index
      %c0_140 = arith.constant 0 : index
      %264 = vector.load %arg13[%c0_139, %c0_140] : memref<64x128xf32, #tpu.memory_space<vmem>>, vector<64x128xf32>
      tpu.vector_store %arg13[%c0_139, %c0_140], %263 {strides = array<i32>} : memref<64x128xf32, #tpu.memory_space<vmem>>, vector<64x128xf32>,
      %cst_141 = arith.constant 0.000000e+00 : f32
      %265 = vector.broadcast %cst_141 : f32 to vector<8x32xf32>
      %c0_142 = arith.constant 0 : index
      %c0_143 = arith.constant 0 : index
      %266 = vector.load %arg14[%c0_142, %c0_143] : memref<8x32xf32, #tpu.memory_space<vmem>>, vector<8x32xf32>
      tpu.vector_store %arg14[%c0_142, %c0_143], %265 {strides = array<i32>} : memref<8x32xf32, #tpu.memory_space<vmem>>, vector<8x32xf32>,
      %cst_144 = arith.constant 0.000000e+00 : f32
      %267 = vector.broadcast %cst_144 : f32 to vector<8x32xf32>
      %c0_145 = arith.constant 0 : index
      %c0_146 = arith.constant 0 : index
      %268 = vector.load %arg15[%c0_145, %c0_146] : memref<8x32xf32, #tpu.memory_space<vmem>>, vector<8x32xf32>
      tpu.vector_store %arg15[%c0_145, %c0_146], %267 {strides = array<i32>} : memref<8x32xf32, #tpu.memory_space<vmem>>, vector<8x32xf32>,
      %c0_i32_147 = arith.constant 0 : i32
      %c8_i32_148 = arith.constant 8 : i32
      %269 = arith.muli %c0_i32_147, %c8_i32_148 : i32
      %270 = tpu.assume_multiple %269, 8 : i32
      %c0_149 = arith.constant 0 : index
      %c0_150 = arith.constant 0 : index
      %271 = vector.load %arg14[%c0_149, %c0_150] : memref<8x32xf32, #tpu.memory_space<vmem>>, vector<8x32xf32>
      %272 = arith.truncf %271 : vector<8x32xf32> to vector<8x32xbf16>
      %cst_151 = arith.constant dense<0.000000e+00> : vector<8x128xf32>
      %273 = tpu.matmul %272, %256, %cst_151 {dimension_numbers = #tpu.dot_dimension_numbers<[1], [0], [0], [1], [0, 0, 1, 1], [], []>} : vector<8x32xbf16>, vector<32x128xbf16>, vector<8x128xf32> -> vector<8x128xf32>
      %274 = arith.index_cast %270 : i32 to index
      %c0_152 = arith.constant 0 : index
      %275 = vector.load %arg13[%274, %c0_152] : memref<64x128xf32, #tpu.memory_space<vmem>>, vector<8x128xf32>
      %276 = arith.addf %273, %275 : vector<8x128xf32>
      %277 = vector.extract_strided_slice %276 {offsets = [0, 0], sizes = [8, 96], strides = [1, 1]} : vector<8x128xf32> to vector<8x96xf32>
      %278 = arith.negf %277 : vector<8x96xf32>
      %279 = math.exp %278 : vector<8x96xf32>
      %cst_153 = arith.constant 1.000000e+00 : f32
      %280 = vector.broadcast %cst_153 : f32 to vector<8x96xf32>
      %281 = arith.addf %280, %279 : vector<8x96xf32>
      %282 = arith.divf %280, %281 : vector<8x96xf32>
      %283 = vector.extract_strided_slice %282 {offsets = [0, 0], sizes = [8, 32], strides = [1, 1]} : vector<8x96xf32> to vector<8x32xf32>
      %284 = vector.extract_strided_slice %282 {offsets = [0, 32], sizes = [8, 32], strides = [1, 1]} : vector<8x96xf32> to vector<8x32xf32>
      %285 = vector.extract_strided_slice %282 {offsets = [0, 64], sizes = [8, 32], strides = [1, 1]} : vector<8x96xf32> to vector<8x32xf32>
      %286 = vector.extract_strided_slice %276 {offsets = [0, 96], sizes = [8, 32], strides = [1, 1]} : vector<8x128xf32> to vector<8x32xf32>
      %287 = math.tanh %286 : vector<8x32xf32>
      %c0_154 = arith.constant 0 : index
      %c0_155 = arith.constant 0 : index
      %288 = vector.load %arg15[%c0_154, %c0_155] : memref<8x32xf32, #tpu.memory_space<vmem>>, vector<8x32xf32>
      %289 = arith.mulf %284, %288 : vector<8x32xf32>
      %290 = arith.mulf %283, %287 : vector<8x32xf32>
      %291 = arith.addf %289, %290 : vector<8x32xf32>
      %292 = math.tanh %291 : vector<8x32xf32>
      %293 = arith.mulf %285, %292 : vector<8x32xf32>
      %c0_156 = arith.constant 0 : index
      %c0_157 = arith.constant 0 : index
      %294 = vector.load %arg15[%c0_156, %c0_157] : memref<8x32xf32, #tpu.memory_space<vmem>>, vector<8x32xf32>
      tpu.vector_store %arg15[%c0_156, %c0_157], %291 {strides = array<i32>} : memref<8x32xf32, #tpu.memory_space<vmem>>, vector<8x32xf32>,
      %c0_158 = arith.constant 0 : index
      %c0_159 = arith.constant 0 : index
      %295 = vector.load %arg14[%c0_158, %c0_159] : memref<8x32xf32, #tpu.memory_space<vmem>>, vector<8x32xf32>
      tpu.vector_store %arg14[%c0_158, %c0_159], %293 {strides = array<i32>} : memref<8x32xf32, #tpu.memory_space<vmem>>, vector<8x32xf32>,
      %296 = arith.index_cast %270 : i32 to index
      %c0_160 = arith.constant 0 : index
      %297 = vector.load %arg12[%296, %c0_160] : memref<64x32xf32, #tpu.memory_space<vmem>>, vector<8x32xf32>
      tpu.vector_store %arg12[%296, %c0_160], %293 {strides = array<i32>} : memref<64x32xf32, #tpu.memory_space<vmem>>, vector<8x32xf32>,
      %c1_i32_161 = arith.constant 1 : i32
      %c8_i32_162 = arith.constant 8 : i32
      %298 = arith.muli %c1_i32_161, %c8_i32_162 : i32
      %299 = tpu.assume_multiple %298, 8 : i32
      %c0_163 = arith.constant 0 : index
      %c0_164 = arith.constant 0 : index
      %300 = vector.load %arg14[%c0_163, %c0_164] : memref<8x32xf32, #tpu.memory_space<vmem>>, vector<8x32xf32>
      %301 = arith.truncf %300 : vector<8x32xf32> to vector<8x32xbf16>
      %cst_165 = arith.constant dense<0.000000e+00> : vector<8x128xf32>
      %302 = tpu.matmul %301, %256, %cst_165 {dimension_numbers = #tpu.dot_dimension_numbers<[1], [0], [0], [1], [0, 0, 1, 1], [], []>} : vector<8x32xbf16>, vector<32x128xbf16>, vector<8x128xf32> -> vector<8x128xf32>
      %303 = arith.index_cast %299 : i32 to index
      %c0_166 = arith.constant 0 : index
      %304 = vector.load %arg13[%303, %c0_166] : memref<64x128xf32, #tpu.memory_space<vmem>>, vector<8x128xf32>
      %305 = arith.addf %302, %304 : vector<8x128xf32>
      %306 = vector.extract_strided_slice %305 {offsets = [0, 0], sizes = [8, 96], strides = [1, 1]} : vector<8x128xf32> to vector<8x96xf32>
      %307 = arith.negf %306 : vector<8x96xf32>
      %308 = math.exp %307 : vector<8x96xf32>
      %cst_167 = arith.constant 1.000000e+00 : f32
      %309 = vector.broadcast %cst_167 : f32 to vector<8x96xf32>
      %310 = arith.addf %309, %308 : vector<8x96xf32>
      %311 = arith.divf %309, %310 : vector<8x96xf32>
      %312 = vector.extract_strided_slice %311 {offsets = [0, 0], sizes = [8, 32], strides = [1, 1]} : vector<8x96xf32> to vector<8x32xf32>
      %313 = vector.extract_strided_slice %311 {offsets = [0, 32], sizes = [8, 32], strides = [1, 1]} : vector<8x96xf32> to vector<8x32xf32>
      %314 = vector.extract_strided_slice %311 {offsets = [0, 64], sizes = [8, 32], strides = [1, 1]} : vector<8x96xf32> to vector<8x32xf32>
      %315 = vector.extract_strided_slice %305 {offsets = [0, 96], sizes = [8, 32], strides = [1, 1]} : vector<8x128xf32> to vector<8x32xf32>
      %316 = math.tanh %315 : vector<8x32xf32>
      %c0_168 = arith.constant 0 : index
      %c0_169 = arith.constant 0 : index
      %317 = vector.load %arg15[%c0_168, %c0_169] : memref<8x32xf32, #tpu.memory_space<vmem>>, vector<8x32xf32>
      %318 = arith.mulf %313, %317 : vector<8x32xf32>
      %319 = arith.mulf %312, %316 : vector<8x32xf32>
      %320 = arith.addf %318, %319 : vector<8x32xf32>
      %321 = math.tanh %320 : vector<8x32xf32>
      %322 = arith.mulf %314, %321 : vector<8x32xf32>
      %c0_170 = arith.constant 0 : index
      %c0_171 = arith.constant 0 : index
      %323 = vector.load %arg15[%c0_170, %c0_171] : memref<8x32xf32, #tpu.memory_space<vmem>>, vector<8x32xf32>
      tpu.vector_store %arg15[%c0_170, %c0_171], %320 {strides = array<i32>} : memref<8x32xf32, #tpu.memory_space<vmem>>, vector<8x32xf32>,
      %c0_172 = arith.constant 0 : index
      %c0_173 = arith.constant 0 : index
      %324 = vector.load %arg14[%c0_172, %c0_173] : memref<8x32xf32, #tpu.memory_space<vmem>>, vector<8x32xf32>
      tpu.vector_store %arg14[%c0_172, %c0_173], %322 {strides = array<i32>} : memref<8x32xf32, #tpu.memory_space<vmem>>, vector<8x32xf32>,
      %325 = arith.index_cast %299 : i32 to index
      %c0_174 = arith.constant 0 : index
      %326 = vector.load %arg12[%325, %c0_174] : memref<64x32xf32, #tpu.memory_space<vmem>>, vector<8x32xf32>
      tpu.vector_store %arg12[%325, %c0_174], %322 {strides = array<i32>} : memref<64x32xf32, #tpu.memory_space<vmem>>, vector<8x32xf32>,
      %c2_i32_175 = arith.constant 2 : i32
      %c8_i32_176 = arith.constant 8 : i32
      %327 = arith.muli %c2_i32_175, %c8_i32_176 : i32
      %328 = tpu.assume_multiple %327, 8 : i32
      %c0_177 = arith.constant 0 : index
      %c0_178 = arith.constant 0 : index
      %329 = vector.load %arg14[%c0_177, %c0_178] : memref<8x32xf32, #tpu.memory_space<vmem>>, vector<8x32xf32>
      %330 = arith.truncf %329 : vector<8x32xf32> to vector<8x32xbf16>
      %cst_179 = arith.constant dense<0.000000e+00> : vector<8x128xf32>
      %331 = tpu.matmul %330, %256, %cst_179 {dimension_numbers = #tpu.dot_dimension_numbers<[1], [0], [0], [1], [0, 0, 1, 1], [], []>} : vector<8x32xbf16>, vector<32x128xbf16>, vector<8x128xf32> -> vector<8x128xf32>
      %332 = arith.index_cast %328 : i32 to index
      %c0_180 = arith.constant 0 : index
      %333 = vector.load %arg13[%332, %c0_180] : memref<64x128xf32, #tpu.memory_space<vmem>>, vector<8x128xf32>
      %334 = arith.addf %331, %333 : vector<8x128xf32>
      %335 = vector.extract_strided_slice %334 {offsets = [0, 0], sizes = [8, 96], strides = [1, 1]} : vector<8x128xf32> to vector<8x96xf32>
      %336 = arith.negf %335 : vector<8x96xf32>
      %337 = math.exp %336 : vector<8x96xf32>
      %cst_181 = arith.constant 1.000000e+00 : f32
      %338 = vector.broadcast %cst_181 : f32 to vector<8x96xf32>
      %339 = arith.addf %338, %337 : vector<8x96xf32>
      %340 = arith.divf %338, %339 : vector<8x96xf32>
      %341 = vector.extract_strided_slice %340 {offsets = [0, 0], sizes = [8, 32], strides = [1, 1]} : vector<8x96xf32> to vector<8x32xf32>
      %342 = vector.extract_strided_slice %340 {offsets = [0, 32], sizes = [8, 32], strides = [1, 1]} : vector<8x96xf32> to vector<8x32xf32>
      %343 = vector.extract_strided_slice %340 {offsets = [0, 64], sizes = [8, 32], strides = [1, 1]} : vector<8x96xf32> to vector<8x32xf32>
      %344 = vector.extract_strided_slice %334 {offsets = [0, 96], sizes = [8, 32], strides = [1, 1]} : vector<8x128xf32> to vector<8x32xf32>
      %345 = math.tanh %344 : vector<8x32xf32>
      %c0_182 = arith.constant 0 : index
      %c0_183 = arith.constant 0 : index
      %346 = vector.load %arg15[%c0_182, %c0_183] : memref<8x32xf32, #tpu.memory_space<vmem>>, vector<8x32xf32>
      %347 = arith.mulf %342, %346 : vector<8x32xf32>
      %348 = arith.mulf %341, %345 : vector<8x32xf32>
      %349 = arith.addf %347, %348 : vector<8x32xf32>
      %350 = math.tanh %349 : vector<8x32xf32>
      %351 = arith.mulf %343, %350 : vector<8x32xf32>
      %c0_184 = arith.constant 0 : index
      %c0_185 = arith.constant 0 : index
      %352 = vector.load %arg15[%c0_184, %c0_185] : memref<8x32xf32, #tpu.memory_space<vmem>>, vector<8x32xf32>
      tpu.vector_store %arg15[%c0_184, %c0_185], %349 {strides = array<i32>} : memref<8x32xf32, #tpu.memory_space<vmem>>, vector<8x32xf32>,
      %c0_186 = arith.constant 0 : index
      %c0_187 = arith.constant 0 : index
      %353 = vector.load %arg14[%c0_186, %c0_187] : memref<8x32xf32, #tpu.memory_space<vmem>>, vector<8x32xf32>
      tpu.vector_store %arg14[%c0_186, %c0_187], %351 {strides = array<i32>} : memref<8x32xf32, #tpu.memory_space<vmem>>, vector<8x32xf32>,
      %354 = arith.index_cast %328 : i32 to index
      %c0_188 = arith.constant 0 : index
      %355 = vector.load %arg12[%354, %c0_188] : memref<64x32xf32, #tpu.memory_space<vmem>>, vector<8x32xf32>
      tpu.vector_store %arg12[%354, %c0_188], %351 {strides = array<i32>} : memref<64x32xf32, #tpu.memory_space<vmem>>, vector<8x32xf32>,
      %c3_i32_189 = arith.constant 3 : i32
      %c8_i32_190 = arith.constant 8 : i32
      %356 = arith.muli %c3_i32_189, %c8_i32_190 : i32
      %357 = tpu.assume_multiple %356, 8 : i32
      %c0_191 = arith.constant 0 : index
      %c0_192 = arith.constant 0 : index
      %358 = vector.load %arg14[%c0_191, %c0_192] : memref<8x32xf32, #tpu.memory_space<vmem>>, vector<8x32xf32>
      %359 = arith.truncf %358 : vector<8x32xf32> to vector<8x32xbf16>
      %cst_193 = arith.constant dense<0.000000e+00> : vector<8x128xf32>
      %360 = tpu.matmul %359, %256, %cst_193 {dimension_numbers = #tpu.dot_dimension_numbers<[1], [0], [0], [1], [0, 0, 1, 1], [], []>} : vector<8x32xbf16>, vector<32x128xbf16>, vector<8x128xf32> -> vector<8x128xf32>
      %361 = arith.index_cast %357 : i32 to index
      %c0_194 = arith.constant 0 : index
      %362 = vector.load %arg13[%361, %c0_194] : memref<64x128xf32, #tpu.memory_space<vmem>>, vector<8x128xf32>
      %363 = arith.addf %360, %362 : vector<8x128xf32>
      %364 = vector.extract_strided_slice %363 {offsets = [0, 0], sizes = [8, 96], strides = [1, 1]} : vector<8x128xf32> to vector<8x96xf32>
      %365 = arith.negf %364 : vector<8x96xf32>
      %366 = math.exp %365 : vector<8x96xf32>
      %cst_195 = arith.constant 1.000000e+00 : f32
      %367 = vector.broadcast %cst_195 : f32 to vector<8x96xf32>
      %368 = arith.addf %367, %366 : vector<8x96xf32>
      %369 = arith.divf %367, %368 : vector<8x96xf32>
      %370 = vector.extract_strided_slice %369 {offsets = [0, 0], sizes = [8, 32], strides = [1, 1]} : vector<8x96xf32> to vector<8x32xf32>
      %371 = vector.extract_strided_slice %369 {offsets = [0, 32], sizes = [8, 32], strides = [1, 1]} : vector<8x96xf32> to vector<8x32xf32>
      %372 = vector.extract_strided_slice %369 {offsets = [0, 64], sizes = [8, 32], strides = [1, 1]} : vector<8x96xf32> to vector<8x32xf32>
      %373 = vector.extract_strided_slice %363 {offsets = [0, 96], sizes = [8, 32], strides = [1, 1]} : vector<8x128xf32> to vector<8x32xf32>
      %374 = math.tanh %373 : vector<8x32xf32>
      %c0_196 = arith.constant 0 : index
      %c0_197 = arith.constant 0 : index
      %375 = vector.load %arg15[%c0_196, %c0_197] : memref<8x32xf32, #tpu.memory_space<vmem>>, vector<8x32xf32>
      %376 = arith.mulf %371, %375 : vector<8x32xf32>
      %377 = arith.mulf %370, %374 : vector<8x32xf32>
      %378 = arith.addf %376, %377 : vector<8x32xf32>
      %379 = math.tanh %378 : vector<8x32xf32>
      %380 = arith.mulf %372, %379 : vector<8x32xf32>
      %c0_198 = arith.constant 0 : index
      %c0_199 = arith.constant 0 : index
      %381 = vector.load %arg15[%c0_198, %c0_199] : memref<8x32xf32, #tpu.memory_space<vmem>>, vector<8x32xf32>
      tpu.vector_store %arg15[%c0_198, %c0_199], %378 {strides = array<i32>} : memref<8x32xf32, #tpu.memory_space<vmem>>, vector<8x32xf32>,
      %c0_200 = arith.constant 0 : index
      %c0_201 = arith.constant 0 : index
      %382 = vector.load %arg14[%c0_200, %c0_201] : memref<8x32xf32, #tpu.memory_space<vmem>>, vector<8x32xf32>
      tpu.vector_store %arg14[%c0_200, %c0_201], %380 {strides = array<i32>} : memref<8x32xf32, #tpu.memory_space<vmem>>, vector<8x32xf32>,
      %383 = arith.index_cast %357 : i32 to index
      %c0_202 = arith.constant 0 : index
      %384 = vector.load %arg12[%383, %c0_202] : memref<64x32xf32, #tpu.memory_space<vmem>>, vector<8x32xf32>
      tpu.vector_store %arg12[%383, %c0_202], %380 {strides = array<i32>} : memref<64x32xf32, #tpu.memory_space<vmem>>, vector<8x32xf32>,
      %c4_i32_203 = arith.constant 4 : i32
      %c8_i32_204 = arith.constant 8 : i32
      %385 = arith.muli %c4_i32_203, %c8_i32_204 : i32
      %386 = tpu.assume_multiple %385, 8 : i32
      %c0_205 = arith.constant 0 : index
      %c0_206 = arith.constant 0 : index
      %387 = vector.load %arg14[%c0_205, %c0_206] : memref<8x32xf32, #tpu.memory_space<vmem>>, vector<8x32xf32>
      %388 = arith.truncf %387 : vector<8x32xf32> to vector<8x32xbf16>
      %cst_207 = arith.constant dense<0.000000e+00> : vector<8x128xf32>
      %389 = tpu.matmul %388, %256, %cst_207 {dimension_numbers = #tpu.dot_dimension_numbers<[1], [0], [0], [1], [0, 0, 1, 1], [], []>} : vector<8x32xbf16>, vector<32x128xbf16>, vector<8x128xf32> -> vector<8x128xf32>
      %390 = arith.index_cast %386 : i32 to index
      %c0_208 = arith.constant 0 : index
      %391 = vector.load %arg13[%390, %c0_208] : memref<64x128xf32, #tpu.memory_space<vmem>>, vector<8x128xf32>
      %392 = arith.addf %389, %391 : vector<8x128xf32>
      %393 = vector.extract_strided_slice %392 {offsets = [0, 0], sizes = [8, 96], strides = [1, 1]} : vector<8x128xf32> to vector<8x96xf32>
      %394 = arith.negf %393 : vector<8x96xf32>
      %395 = math.exp %394 : vector<8x96xf32>
      %cst_209 = arith.constant 1.000000e+00 : f32
      %396 = vector.broadcast %cst_209 : f32 to vector<8x96xf32>
      %397 = arith.addf %396, %395 : vector<8x96xf32>
      %398 = arith.divf %396, %397 : vector<8x96xf32>
      %399 = vector.extract_strided_slice %398 {offsets = [0, 0], sizes = [8, 32], strides = [1, 1]} : vector<8x96xf32> to vector<8x32xf32>
      %400 = vector.extract_strided_slice %398 {offsets = [0, 32], sizes = [8, 32], strides = [1, 1]} : vector<8x96xf32> to vector<8x32xf32>
      %401 = vector.extract_strided_slice %398 {offsets = [0, 64], sizes = [8, 32], strides = [1, 1]} : vector<8x96xf32> to vector<8x32xf32>
      %402 = vector.extract_strided_slice %392 {offsets = [0, 96], sizes = [8, 32], strides = [1, 1]} : vector<8x128xf32> to vector<8x32xf32>
      %403 = math.tanh %402 : vector<8x32xf32>
      %c0_210 = arith.constant 0 : index
      %c0_211 = arith.constant 0 : index
      %404 = vector.load %arg15[%c0_210, %c0_211] : memref<8x32xf32, #tpu.memory_space<vmem>>, vector<8x32xf32>
      %405 = arith.mulf %400, %404 : vector<8x32xf32>
      %406 = arith.mulf %399, %403 : vector<8x32xf32>
      %407 = arith.addf %405, %406 : vector<8x32xf32>
      %408 = math.tanh %407 : vector<8x32xf32>
      %409 = arith.mulf %401, %408 : vector<8x32xf32>
      %c0_212 = arith.constant 0 : index
      %c0_213 = arith.constant 0 : index
      %410 = vector.load %arg15[%c0_212, %c0_213] : memref<8x32xf32, #tpu.memory_space<vmem>>, vector<8x32xf32>
      tpu.vector_store %arg15[%c0_212, %c0_213], %407 {strides = array<i32>} : memref<8x32xf32, #tpu.memory_space<vmem>>, vector<8x32xf32>,
      %c0_214 = arith.constant 0 : index
      %c0_215 = arith.constant 0 : index
      %411 = vector.load %arg14[%c0_214, %c0_215] : memref<8x32xf32, #tpu.memory_space<vmem>>, vector<8x32xf32>
      tpu.vector_store %arg14[%c0_214, %c0_215], %409 {strides = array<i32>} : memref<8x32xf32, #tpu.memory_space<vmem>>, vector<8x32xf32>,
      %412 = arith.index_cast %386 : i32 to index
      %c0_216 = arith.constant 0 : index
      %413 = vector.load %arg12[%412, %c0_216] : memref<64x32xf32, #tpu.memory_space<vmem>>, vector<8x32xf32>
      tpu.vector_store %arg12[%412, %c0_216], %409 {strides = array<i32>} : memref<64x32xf32, #tpu.memory_space<vmem>>, vector<8x32xf32>,
      %c5_i32_217 = arith.constant 5 : i32
      %c8_i32_218 = arith.constant 8 : i32
      %414 = arith.muli %c5_i32_217, %c8_i32_218 : i32
      %415 = tpu.assume_multiple %414, 8 : i32
      %c0_219 = arith.constant 0 : index
      %c0_220 = arith.constant 0 : index
      %416 = vector.load %arg14[%c0_219, %c0_220] : memref<8x32xf32, #tpu.memory_space<vmem>>, vector<8x32xf32>
      %417 = arith.truncf %416 : vector<8x32xf32> to vector<8x32xbf16>
      %cst_221 = arith.constant dense<0.000000e+00> : vector<8x128xf32>
      %418 = tpu.matmul %417, %256, %cst_221 {dimension_numbers = #tpu.dot_dimension_numbers<[1], [0], [0], [1], [0, 0, 1, 1], [], []>} : vector<8x32xbf16>, vector<32x128xbf16>, vector<8x128xf32> -> vector<8x128xf32>
      %419 = arith.index_cast %415 : i32 to index
      %c0_222 = arith.constant 0 : index
      %420 = vector.load %arg13[%419, %c0_222] : memref<64x128xf32, #tpu.memory_space<vmem>>, vector<8x128xf32>
      %421 = arith.addf %418, %420 : vector<8x128xf32>
      %422 = vector.extract_strided_slice %421 {offsets = [0, 0], sizes = [8, 96], strides = [1, 1]} : vector<8x128xf32> to vector<8x96xf32>
      %423 = arith.negf %422 : vector<8x96xf32>
      %424 = math.exp %423 : vector<8x96xf32>
      %cst_223 = arith.constant 1.000000e+00 : f32
      %425 = vector.broadcast %cst_223 : f32 to vector<8x96xf32>
      %426 = arith.addf %425, %424 : vector<8x96xf32>
      %427 = arith.divf %425, %426 : vector<8x96xf32>
      %428 = vector.extract_strided_slice %427 {offsets = [0, 0], sizes = [8, 32], strides = [1, 1]} : vector<8x96xf32> to vector<8x32xf32>
      %429 = vector.extract_strided_slice %427 {offsets = [0, 32], sizes = [8, 32], strides = [1, 1]} : vector<8x96xf32> to vector<8x32xf32>
      %430 = vector.extract_strided_slice %427 {offsets = [0, 64], sizes = [8, 32], strides = [1, 1]} : vector<8x96xf32> to vector<8x32xf32>
      %431 = vector.extract_strided_slice %421 {offsets = [0, 96], sizes = [8, 32], strides = [1, 1]} : vector<8x128xf32> to vector<8x32xf32>
      %432 = math.tanh %431 : vector<8x32xf32>
      %c0_224 = arith.constant 0 : index
      %c0_225 = arith.constant 0 : index
      %433 = vector.load %arg15[%c0_224, %c0_225] : memref<8x32xf32, #tpu.memory_space<vmem>>, vector<8x32xf32>
      %434 = arith.mulf %429, %433 : vector<8x32xf32>
      %435 = arith.mulf %428, %432 : vector<8x32xf32>
      %436 = arith.addf %434, %435 : vector<8x32xf32>
      %437 = math.tanh %436 : vector<8x32xf32>
      %438 = arith.mulf %430, %437 : vector<8x32xf32>
      %c0_226 = arith.constant 0 : index
      %c0_227 = arith.constant 0 : index
      %439 = vector.load %arg15[%c0_226, %c0_227] : memref<8x32xf32, #tpu.memory_space<vmem>>, vector<8x32xf32>
      tpu.vector_store %arg15[%c0_226, %c0_227], %436 {strides = array<i32>} : memref<8x32xf32, #tpu.memory_space<vmem>>, vector<8x32xf32>,
      %c0_228 = arith.constant 0 : index
      %c0_229 = arith.constant 0 : index
      %440 = vector.load %arg14[%c0_228, %c0_229] : memref<8x32xf32, #tpu.memory_space<vmem>>, vector<8x32xf32>
      tpu.vector_store %arg14[%c0_228, %c0_229], %438 {strides = array<i32>} : memref<8x32xf32, #tpu.memory_space<vmem>>, vector<8x32xf32>,
      %441 = arith.index_cast %415 : i32 to index
      %c0_230 = arith.constant 0 : index
      %442 = vector.load %arg12[%441, %c0_230] : memref<64x32xf32, #tpu.memory_space<vmem>>, vector<8x32xf32>
      tpu.vector_store %arg12[%441, %c0_230], %438 {strides = array<i32>} : memref<64x32xf32, #tpu.memory_space<vmem>>, vector<8x32xf32>,
      %c6_i32_231 = arith.constant 6 : i32
      %c8_i32_232 = arith.constant 8 : i32
      %443 = arith.muli %c6_i32_231, %c8_i32_232 : i32
      %444 = tpu.assume_multiple %443, 8 : i32
      %c0_233 = arith.constant 0 : index
      %c0_234 = arith.constant 0 : index
      %445 = vector.load %arg14[%c0_233, %c0_234] : memref<8x32xf32, #tpu.memory_space<vmem>>, vector<8x32xf32>
      %446 = arith.truncf %445 : vector<8x32xf32> to vector<8x32xbf16>
      %cst_235 = arith.constant dense<0.000000e+00> : vector<8x128xf32>
      %447 = tpu.matmul %446, %256, %cst_235 {dimension_numbers = #tpu.dot_dimension_numbers<[1], [0], [0], [1], [0, 0, 1, 1], [], []>} : vector<8x32xbf16>, vector<32x128xbf16>, vector<8x128xf32> -> vector<8x128xf32>
      %448 = arith.index_cast %444 : i32 to index
      %c0_236 = arith.constant 0 : index
      %449 = vector.load %arg13[%448, %c0_236] : memref<64x128xf32, #tpu.memory_space<vmem>>, vector<8x128xf32>
      %450 = arith.addf %447, %449 : vector<8x128xf32>
      %451 = vector.extract_strided_slice %450 {offsets = [0, 0], sizes = [8, 96], strides = [1, 1]} : vector<8x128xf32> to vector<8x96xf32>
      %452 = arith.negf %451 : vector<8x96xf32>
      %453 = math.exp %452 : vector<8x96xf32>
      %cst_237 = arith.constant 1.000000e+00 : f32
      %454 = vector.broadcast %cst_237 : f32 to vector<8x96xf32>
      %455 = arith.addf %454, %453 : vector<8x96xf32>
      %456 = arith.divf %454, %455 : vector<8x96xf32>
      %457 = vector.extract_strided_slice %456 {offsets = [0, 0], sizes = [8, 32], strides = [1, 1]} : vector<8x96xf32> to vector<8x32xf32>
      %458 = vector.extract_strided_slice %456 {offsets = [0, 32], sizes = [8, 32], strides = [1, 1]} : vector<8x96xf32> to vector<8x32xf32>
      %459 = vector.extract_strided_slice %456 {offsets = [0, 64], sizes = [8, 32], strides = [1, 1]} : vector<8x96xf32> to vector<8x32xf32>
      %460 = vector.extract_strided_slice %450 {offsets = [0, 96], sizes = [8, 32], strides = [1, 1]} : vector<8x128xf32> to vector<8x32xf32>
      %461 = math.tanh %460 : vector<8x32xf32>
      %c0_238 = arith.constant 0 : index
      %c0_239 = arith.constant 0 : index
      %462 = vector.load %arg15[%c0_238, %c0_239] : memref<8x32xf32, #tpu.memory_space<vmem>>, vector<8x32xf32>
      %463 = arith.mulf %458, %462 : vector<8x32xf32>
      %464 = arith.mulf %457, %461 : vector<8x32xf32>
      %465 = arith.addf %463, %464 : vector<8x32xf32>
      %466 = math.tanh %465 : vector<8x32xf32>
      %467 = arith.mulf %459, %466 : vector<8x32xf32>
      %c0_240 = arith.constant 0 : index
      %c0_241 = arith.constant 0 : index
      %468 = vector.load %arg15[%c0_240, %c0_241] : memref<8x32xf32, #tpu.memory_space<vmem>>, vector<8x32xf32>
      tpu.vector_store %arg15[%c0_240, %c0_241], %465 {strides = array<i32>} : memref<8x32xf32, #tpu.memory_space<vmem>>, vector<8x32xf32>,
      %c0_242 = arith.constant 0 : index
      %c0_243 = arith.constant 0 : index
      %469 = vector.load %arg14[%c0_242, %c0_243] : memref<8x32xf32, #tpu.memory_space<vmem>>, vector<8x32xf32>
      tpu.vector_store %arg14[%c0_242, %c0_243], %467 {strides = array<i32>} : memref<8x32xf32, #tpu.memory_space<vmem>>, vector<8x32xf32>,
      %470 = arith.index_cast %444 : i32 to index
      %c0_244 = arith.constant 0 : index
      %471 = vector.load %arg12[%470, %c0_244] : memref<64x32xf32, #tpu.memory_space<vmem>>, vector<8x32xf32>
      tpu.vector_store %arg12[%470, %c0_244], %467 {strides = array<i32>} : memref<64x32xf32, #tpu.memory_space<vmem>>, vector<8x32xf32>,
      %c7_i32_245 = arith.constant 7 : i32
      %c8_i32_246 = arith.constant 8 : i32
      %472 = arith.muli %c7_i32_245, %c8_i32_246 : i32
      %473 = tpu.assume_multiple %472, 8 : i32
      %c0_247 = arith.constant 0 : index
      %c0_248 = arith.constant 0 : index
      %474 = vector.load %arg14[%c0_247, %c0_248] : memref<8x32xf32, #tpu.memory_space<vmem>>, vector<8x32xf32>
      %475 = arith.truncf %474 : vector<8x32xf32> to vector<8x32xbf16>
      %cst_249 = arith.constant dense<0.000000e+00> : vector<8x128xf32>
      %476 = tpu.matmul %475, %256, %cst_249 {dimension_numbers = #tpu.dot_dimension_numbers<[1], [0], [0], [1], [0, 0, 1, 1], [], []>} : vector<8x32xbf16>, vector<32x128xbf16>, vector<8x128xf32> -> vector<8x128xf32>
      %477 = arith.index_cast %473 : i32 to index
      %c0_250 = arith.constant 0 : index
      %478 = vector.load %arg13[%477, %c0_250] : memref<64x128xf32, #tpu.memory_space<vmem>>, vector<8x128xf32>
      %479 = arith.addf %476, %478 : vector<8x128xf32>
      %480 = vector.extract_strided_slice %479 {offsets = [0, 0], sizes = [8, 96], strides = [1, 1]} : vector<8x128xf32> to vector<8x96xf32>
      %481 = arith.negf %480 : vector<8x96xf32>
      %482 = math.exp %481 : vector<8x96xf32>
      %cst_251 = arith.constant 1.000000e+00 : f32
      %483 = vector.broadcast %cst_251 : f32 to vector<8x96xf32>
      %484 = arith.addf %483, %482 : vector<8x96xf32>
      %485 = arith.divf %483, %484 : vector<8x96xf32>
      %486 = vector.extract_strided_slice %485 {offsets = [0, 0], sizes = [8, 32], strides = [1, 1]} : vector<8x96xf32> to vector<8x32xf32>
      %487 = vector.extract_strided_slice %485 {offsets = [0, 32], sizes = [8, 32], strides = [1, 1]} : vector<8x96xf32> to vector<8x32xf32>
      %488 = vector.extract_strided_slice %485 {offsets = [0, 64], sizes = [8, 32], strides = [1, 1]} : vector<8x96xf32> to vector<8x32xf32>
      %489 = vector.extract_strided_slice %479 {offsets = [0, 96], sizes = [8, 32], strides = [1, 1]} : vector<8x128xf32> to vector<8x32xf32>
      %490 = math.tanh %489 : vector<8x32xf32>
      %c0_252 = arith.constant 0 : index
      %c0_253 = arith.constant 0 : index
      %491 = vector.load %arg15[%c0_252, %c0_253] : memref<8x32xf32, #tpu.memory_space<vmem>>, vector<8x32xf32>
      %492 = arith.mulf %487, %491 : vector<8x32xf32>
      %493 = arith.mulf %486, %490 : vector<8x32xf32>
      %494 = arith.addf %492, %493 : vector<8x32xf32>
      %495 = math.tanh %494 : vector<8x32xf32>
      %496 = arith.mulf %488, %495 : vector<8x32xf32>
      %c0_254 = arith.constant 0 : index
      %c0_255 = arith.constant 0 : index
      %497 = vector.load %arg15[%c0_254, %c0_255] : memref<8x32xf32, #tpu.memory_space<vmem>>, vector<8x32xf32>
      tpu.vector_store %arg15[%c0_254, %c0_255], %494 {strides = array<i32>} : memref<8x32xf32, #tpu.memory_space<vmem>>, vector<8x32xf32>,
      %c0_256 = arith.constant 0 : index
      %c0_257 = arith.constant 0 : index
      %498 = vector.load %arg14[%c0_256, %c0_257] : memref<8x32xf32, #tpu.memory_space<vmem>>, vector<8x32xf32>
      tpu.vector_store %arg14[%c0_256, %c0_257], %496 {strides = array<i32>} : memref<8x32xf32, #tpu.memory_space<vmem>>, vector<8x32xf32>,
      %499 = arith.index_cast %473 : i32 to index
      %c0_258 = arith.constant 0 : index
      %500 = vector.load %arg12[%499, %c0_258] : memref<64x32xf32, #tpu.memory_space<vmem>>, vector<8x32xf32>
      tpu.vector_store %arg12[%499, %c0_258], %496 {strides = array<i32>} : memref<64x32xf32, #tpu.memory_space<vmem>>, vector<8x32xf32>,
      %c8_i32_259 = arith.constant 8 : i32
      %c0_i32_260 = arith.constant 0 : i32
      %c24_i32 = arith.constant 24 : i32
      %501 = arith.addi %c0_i32_260, %c24_i32 : i32
      %c1_i32_261 = arith.constant 1 : i32
      scf.for %arg18 = %c0_i32_260 to %501 step %c1_i32_261  : i32 {
        %505 = arith.index_cast %arg18 : i32 to index
        %506 = memref.load %arg1[%505] : memref<24xi32, #tpu.memory_space<smem>>
        %507 = arith.index_cast %506 : i32 to index
        %c0_267 = arith.constant 0 : index
        %508 = vector.load %arg12[%507, %c0_267] : memref<64x32xf32, #tpu.memory_space<vmem>>, vector<1x32xf32>
        %509 = arith.index_cast %arg18 : i32 to index
        %c0_268 = arith.constant 0 : index
        %510 = vector.load %arg16[%509, %c0_268] : memref<24x32xf32, #tpu.memory_space<vmem>>, vector<1x32xf32>
        tpu.vector_store %arg16[%509, %c0_268], %508 {strides = array<i32>} : memref<24x32xf32, #tpu.memory_space<vmem>>, vector<1x32xf32>,
      }
      %c24_i32_262 = arith.constant 24 : i32
      %c0_263 = arith.constant 0 : index
      %c0_264 = arith.constant 0 : index
      %502 = vector.load %arg16[%c0_263, %c0_264] : memref<24x32xf32, #tpu.memory_space<vmem>>, vector<24x32xf32>
      %503 = arith.truncf %502 : vector<24x32xf32> to vector<24x32xbf16>
      %c0_265 = arith.constant 0 : index
      %c0_266 = arith.constant 0 : index
      %504 = vector.load %arg17[%c0_265, %c0_266] : memref<24x32xbf16, #tpu.memory_space<vmem>>, vector<24x32xbf16>
      tpu.vector_store %arg17[%c0_265, %c0_266], %503 {strides = array<i32>} : memref<24x32xbf16, #tpu.memory_space<vmem>>, vector<24x32xbf16>,
    } else {
    }
    %c0 = arith.constant 0 : index
    %c0_1 = arith.constant 0 : index
    %3 = vector.load %arg17[%c0, %c0_1] : memref<24x32xbf16, #tpu.memory_space<vmem>>, vector<24x32xbf16>
    %c0_2 = arith.constant 0 : index
    %c0_3 = arith.constant 0 : index
    %4 = vector.load %arg9[%c0_2, %c0_3] : memref<32x128xbf16, #tpu.memory_space<vmem>>, vector<32x128xbf16>
    %cst = arith.constant dense<0.000000e+00> : vector<24x128xf32>
    %5 = tpu.matmul %3, %4, %cst {dimension_numbers = #tpu.dot_dimension_numbers<[1], [0], [0], [1], [0, 0, 1, 1], [], []>} : vector<24x32xbf16>, vector<32x128xbf16>, vector<24x128xf32> -> vector<24x128xf32>
    %c0_4 = arith.constant 0 : index
    %c0_5 = arith.constant 0 : index
    %6 = vector.load %arg10[%c0_4, %c0_5] : memref<1x128xf32, #tpu.memory_space<vmem>>, vector<1x128xf32>
    %7 = vector.broadcast %6 : vector<1x128xf32> to vector<24x128xf32>
    %8 = arith.addf %5, %7 : vector<24x128xf32>
    %c0_6 = arith.constant 0 : index
    %c0_7 = arith.constant 0 : index
    %9 = vector.load %arg11[%c0_6, %c0_7] : memref<24x128xf32, #tpu.memory_space<vmem>>, vector<24x128xf32>
    tpu.vector_store %arg11[%c0_6, %c0_7], %8 {strides = array<i32>} : memref<24x128xf32, #tpu.memory_space<vmem>>, vector<24x128xf32>,
    return
  }
  func.func @transform_0(%arg0: i32, %arg1: memref<24xi32, #tpu.memory_space<smem>>) -> (i32, i32) {
    %c0_i32 = arith.constant 0 : i32
    %c0_i32_0 = arith.constant 0 : i32
    %c0_i32_1 = arith.constant 0 : i32
    return %c0_i32, %c0_i32_0 : i32, i32
  }
  func.func @transform_1(%arg0: i32, %arg1: memref<24xi32, #tpu.memory_space<smem>>) -> (i32, i32) {
    %c0_i32 = arith.constant 0 : i32
    %c0_i32_0 = arith.constant 0 : i32
    %c0_i32_1 = arith.constant 0 : i32
    return %c0_i32, %c0_i32_0 : i32, i32
  }
  func.func @transform_2(%arg0: i32, %arg1: memref<24xi32, #tpu.memory_space<smem>>) -> (i32, i32) {
    %c0_i32 = arith.constant 0 : i32
    %c0_i32_0 = arith.constant 0 : i32
    %c0_i32_1 = arith.constant 0 : i32
    return %c0_i32, %c0_i32_0 : i32, i32
  }
  func.func @transform_3(%arg0: i32, %arg1: memref<24xi32, #tpu.memory_space<smem>>) -> (i32, i32) {
    %c0_i32 = arith.constant 0 : i32
    %c0_i32_0 = arith.constant 0 : i32
    %c0_i32_1 = arith.constant 0 : i32
    return %c0_i32, %c0_i32_0 : i32, i32
  }
  func.func @transform_4(%arg0: i32, %arg1: memref<24xi32, #tpu.memory_space<smem>>) -> (i32, i32) {
    %c0_i32 = arith.constant 0 : i32
    %c0_i32_0 = arith.constant 0 : i32
    %c0_i32_1 = arith.constant 0 : i32
    return %c0_i32, %c0_i32_0 : i32, i32
  }
  func.func @transform_5(%arg0: i32, %arg1: memref<24xi32, #tpu.memory_space<smem>>) -> (i32, i32) {
    %c0_i32 = arith.constant 0 : i32
    %c0_i32_0 = arith.constant 0 : i32
    %c0_i32_1 = arith.constant 0 : i32
    return %c0_i32, %c0_i32_0 : i32, i32
  }
  func.func @transform_6(%arg0: i32, %arg1: memref<24xi32, #tpu.memory_space<smem>>) -> (i32, i32) {
    %c0_i32 = arith.constant 0 : i32
    %c0_i32_0 = arith.constant 0 : i32
    %c0_i32_1 = arith.constant 0 : i32
    return %c0_i32, %c0_i32_0 : i32, i32
  }
  func.func @transform_7(%arg0: i32, %arg1: memref<24xi32, #tpu.memory_space<smem>>) -> (i32, i32) {
    %c0_i32 = arith.constant 0 : i32
    %c0_i32_0 = arith.constant 0 : i32
    return %c0_i32, %arg0 : i32, i32
  }
  func.func @transform_8(%arg0: i32, %arg1: memref<24xi32, #tpu.memory_space<smem>>) -> (i32, i32) {
    %c0_i32 = arith.constant 0 : i32
    %c0_i32_0 = arith.constant 0 : i32
    return %c0_i32, %arg0 : i32, i32
  }
  func.func @transform_9(%arg0: i32, %arg1: memref<24xi32, #tpu.memory_space<smem>>) -> (i32, i32) {
    %c0_i32 = arith.constant 0 : i32
    %c0_i32_0 = arith.constant 0 : i32
    return %c0_i32, %arg0 : i32, i32
  }
}

</mosaic_0001>

<llo_original>
// kernel: tpu_custom_call.1
$region0: #{tpu_custom_call.1}
  #allocation0 [shape = 'u32[]', space=smem, size = 0x4, offset = 0x4, fixed_abs, tag = 'smem constant byte address 0x4 - core index']
  #allocation1 [shape = 'u32[144,128]{1,0:T(1,128)}', space=vmem, size = 0x12000, scoped, tag = 'internal scratch']
  #allocation2 [shape = 'f32[64,32]{1,0:T(8,128)}', space=vmem, size = 0x8000, scoped, tag = 'scratch operand']
  #allocation3 [shape = 'f32[64,128]{1,0:T(8,128)}', space=vmem, size = 0x8000, scoped, tag = 'scratch operand']
  #allocation4 [shape = 'f32[8,32]{1,0:T(8,128)}', space=vmem, size = 0x1000, scoped, tag = 'scratch operand']
  #allocation5 [shape = 'f32[8,32]{1,0:T(8,128)}', space=vmem, size = 0x1000, scoped, tag = 'scratch operand']
  #allocation6 [shape = 'f32[24,32]{1,0:T(8,128)}', space=vmem, size = 0x3000, scoped, tag = 'scratch operand']
  #allocation7 [shape = 'bf16[24,32]{1,0:T(8,128)(2,1)}', space=vmem, size = 0x1800, scoped, tag = 'scratch operand']
  #allocation8 [shape = 's32[1]{0}', space=sflag, size = 0x4, scoped, tag = 'scoped memory for tpu_custom_call.1']
  #allocation9 [shape = 'u8[512]{0}', space=smem, size = 0x200, scoped, tag = 'prefetched SMEM operand 0']
  %s0 = inlined_call_operand.vmem [shape: s32[24], index: 0, kind: input, shape index: {}]
  %s1 = inlined_call_operand.vmem [shape: bf16[64,16], index: 1, kind: input, shape index: {}]
  %s2 = inlined_call_operand.hbm [shape: bf16[16,128], index: 2, kind: input, shape index: {}]
  %s3 = inlined_call_operand.vmem [shape: bf16[32,128], index: 3, kind: input, shape index: {}]
  %s4 = inlined_call_operand.hbm [shape: f32[1,128], index: 4, kind: input, shape index: {}]
  %s5 = inlined_call_operand.vmem [shape: bf16[32,128], index: 5, kind: input, shape index: {}]
  %s6 = inlined_call_operand.vmem [shape: bf16[32,128], index: 6, kind: input, shape index: {}]
  %s7 = inlined_call_operand.vmem [shape: f32[1,128], index: 7, kind: input, shape index: {}]
  %s8 = inlined_call_operand.hbm [shape: bf16[32,128], index: 8, kind: input, shape index: {}]
  %s9 = inlined_call_operand.vmem [shape: f32[1,128], index: 9, kind: input, shape index: {}]
  %s10 = inlined_call_operand.hbm [shape: f32[24,128], index: 10, kind: output, shape index: {}]
  %s11 = sld [smem:[#allocation0]]
  $region69: #{tpu_custom_call.1} parent=0
    _
  %s13 = ssub.s32 1, %s11
  %s14 = scalar_select 0, %s13, %s11
  %s15 = sshll.u32 %s0, 4
  %s16 = int_to_ptr.vmem [resolvable:$true] %s15
  %18 = dma.vmem_to_smem %s16, 16, [#allocation9], [#allocation8]
  %19 = dma.done [#allocation8], 16
  %20 = sfence
  $region1: #{tpu_custom_call.1} parent=0
    #allocation10 [shape = 'u8[4096]{0}', space=vmem, size = 0x1000, scoped, tag = 'input window, operand 2, single buffered']
    #allocation11 [shape = 's32[1]{0}', space=sflag, size = 0x4, scoped, tag = 'scoped memory for tpu_custom_call.1']
    #allocation12 [shape = 's32[1]{0}', space=sflag, size = 0x4, scoped, tag = 'scoped memory for tpu_custom_call.1']
    #allocation13 [shape = 'u8[512]{0}', space=vmem, size = 0x400, scoped, tag = 'input window, operand 4, single buffered']
    #allocation14 [shape = 's32[1]{0}', space=sflag, size = 0x4, scoped, tag = 'scoped memory for tpu_custom_call.1']
    #allocation15 [shape = 'u8[8192]{0}', space=vmem, size = 0x2000, scoped, tag = 'input window, operand 8, single buffered']
    #allocation16 [shape = 'u8[12288]{0}', space=vmem, size = 0x3000, scoped, tag = 'output window, operand 0, single buffered']
    %21 = vsyncpa [#allocation11], 0
    %22 = vsyncpa [#allocation14], 0
    %23 = vsyncpa [#allocation12], 0
    // Predicated region
    $region2: #{tpu_custom_call.1} parent=1 // pred_check
      _
    $region3: #{tpu_custom_call.1} parent=1 // pred_check_branch
      %25 = sbr.rel (0) target = $region5
    $region4: #{tpu_custom_call.1} parent=1 // pred_region
      _
    $region5: #{tpu_custom_call.1} parent=1 // pred_fallthru
      _
    // Predicated region
    $region6: #{tpu_custom_call.1} parent=1 // pred_check
      _
    $region7: #{tpu_custom_call.1} parent=1 // pred_check_branch
      %27 = sbr.rel (0) target = $region9
    $region8: #{tpu_custom_call.1} parent=1 // pred_region
      %s29 = ssub.s32 128, 128
      %30 = vsyncadd [#allocation11], %s29
      %s31 = sshll.u32 [#allocation10], 4
      %s32 = int_to_ptr.vmem [resolvable:$true] %s31
      %37 = dma.hbm_to_vmem [thread:$0]  %s2, 128, %s32, [#allocation11], 64, 64, 4
    $region9: #{tpu_custom_call.1} parent=1 // pred_fallthru
      _
    // Predicated region
    $region10: #{tpu_custom_call.1} parent=1 // pred_check
      _
    $region11: #{tpu_custom_call.1} parent=1 // pred_check_branch
      %39 = sbr.rel (0) target = $region13
    $region12: #{tpu_custom_call.1} parent=1 // pred_region
      _
    $region13: #{tpu_custom_call.1} parent=1 // pred_fallthru
      _
    // Predicated region
    $region14: #{tpu_custom_call.1} parent=1 // pred_check
      _
    $region15: #{tpu_custom_call.1} parent=1 // pred_check_branch
      %41 = sbr.rel (0) target = $region17
    $region16: #{tpu_custom_call.1} parent=1 // pred_region
      %s43 = ssub.s32 16, 16
      %44 = vsyncadd [#allocation14], %s43
      %s46 = sshll.u32 [#allocation13], 4
      %s47 = int_to_ptr.vmem [resolvable:$true] %s46
      %49 = dma.hbm_to_vmem [thread:$0]  %s4, 16, %s47, [#allocation14]
    $region17: #{tpu_custom_call.1} parent=1 // pred_fallthru
      _
    // Predicated region
    $region18: #{tpu_custom_call.1} parent=1 // pred_check
      _
    $region19: #{tpu_custom_call.1} parent=1 // pred_check_branch
      %51 = sbr.rel (0) target = $region21
    $region20: #{tpu_custom_call.1} parent=1 // pred_region
      _
    $region21: #{tpu_custom_call.1} parent=1 // pred_fallthru
      _
    // Predicated region
    $region22: #{tpu_custom_call.1} parent=1 // pred_check
      _
    $region23: #{tpu_custom_call.1} parent=1 // pred_check_branch
      %53 = sbr.rel (0) target = $region25
    $region24: #{tpu_custom_call.1} parent=1 // pred_region
      _
    $region25: #{tpu_custom_call.1} parent=1 // pred_fallthru
      _
    // Predicated region
    $region26: #{tpu_custom_call.1} parent=1 // pred_check
      _
    $region27: #{tpu_custom_call.1} parent=1 // pred_check_branch
      %55 = sbr.rel (0) target = $region29
    $region28: #{tpu_custom_call.1} parent=1 // pred_region
      _
    $region29: #{tpu_custom_call.1} parent=1 // pred_fallthru
      _
    // Predicated region
    $region30: #{tpu_custom_call.1} parent=1 // pred_check
      _
    $region31: #{tpu_custom_call.1} parent=1 // pred_check_branch
      %57 = sbr.rel (0) target = $region33
    $region32: #{tpu_custom_call.1} parent=1 // pred_region
      %s59 = ssub.s32 256, 256
      %60 = vsyncadd [#allocation14], %s59
      %s61 = sshll.u32 [#allocation15], 4
      %s62 = int_to_ptr.vmem [resolvable:$true] %s61
      %67 = dma.hbm_to_vmem [thread:$0]  %s8, 256, %s62, [#allocation14], 64, 64, 4
    $region33: #{tpu_custom_call.1} parent=1 // pred_fallthru
      _
    // Predicated region
    $region34: #{tpu_custom_call.1} parent=1 // pred_check
      _
    $region35: #{tpu_custom_call.1} parent=1 // pred_check_branch
      %69 = sbr.rel (0) target = $region37
    $region36: #{tpu_custom_call.1} parent=1 // pred_region
      _
    $region37: #{tpu_custom_call.1} parent=1 // pred_fallthru
      _
    // Predicated region
    $region38: #{tpu_custom_call.1} parent=1 // pred_check
      _
    $region39: #{tpu_custom_call.1} parent=1 // pred_check_branch
      %71 = sbr.rel (0) target = $region41
    $region40: #{tpu_custom_call.1} parent=1 // pred_region
      %72 = dma.done [#allocation11], 128
    $region41: #{tpu_custom_call.1} parent=1 // pred_fallthru
      _
    // Predicated region
    $region42: #{tpu_custom_call.1} parent=1 // pred_check
      _
    $region43: #{tpu_custom_call.1} parent=1 // pred_check_branch
      %74 = sbr.rel (0) target = $region45
    $region44: #{tpu_custom_call.1} parent=1 // pred_region
      %75 = dma.done [#allocation14], 16
    $region45: #{tpu_custom_call.1} parent=1 // pred_fallthru
      _
    // Predicated region
    $region46: #{tpu_custom_call.1} parent=1 // pred_check
      _
    $region47: #{tpu_custom_call.1} parent=1 // pred_check_branch
      %77 = sbr.rel (0) target = $region49
    $region48: #{tpu_custom_call.1} parent=1 // pred_region
      %78 = dma.done [#allocation14], 256
    $region49: #{tpu_custom_call.1} parent=1 // pred_fallthru
      _
    %p80 = scmp.eq.s32.totalorder 0, 0
    // Predicated region
    $region50: #{tpu_custom_call.1} parent=1 // pred_check
      %p81 = pneg %p80
    $region51: #{tpu_custom_call.1} parent=1 // pred_check_branch
      %83 = sbr.rel (%p81) target = $region53
    $region52: #{tpu_custom_call.1} parent=1 // pred_region
      %v84 = vld [vmem:[#allocation10] sm:$0xf]
      %v85 = vld [vmem:[#allocation10 + $0x4] sm:$0xf]
      %v86 = vld [vmem:[%s3] sm:$0xf]
      %v87 = vld [vmem:[%s3 + $0x4] sm:$0xf]
      %v88 = vld [vmem:[%s3 + $0x8] sm:$0xf]
      %v89 = vld [vmem:[%s3 + $0xc] sm:$0xf]
      %v90 = vld [vmem:[#allocation13] sm:$0x1]
      %v91 = vld [vmem:[%s1] sm:$0xf]
      %v92 = vld [vmem:[%s1 + $0x4] sm:$0xf]
      %v93 = vld [vmem:[%s1 + $0x8] sm:$0xf]
      %v94 = vld [vmem:[%s1 + $0xc] sm:$0xf]
      %v95 = vld [vmem:[%s1 + $0x10] sm:$0xf]
      %v96 = vld [vmem:[%s1 + $0x14] sm:$0xf]
      %v97 = vld [vmem:[%s1 + $0x18] sm:$0xf]
      %v98 = vld [vmem:[%s1 + $0x1c] sm:$0xf]
      %v100 = vlaneseq
      %v101 = vshrl.u32 %v100, 7
      %v102 = vsub.s32 0, %v101
      %v103 = vrot.slane %v90, %v102
      %v113 = vunpack.c.l.b16 %v91
      %v114 = vunpack.c.l.b16 %v92
      %v115 = vunpack.c.l.b16 %v93
      %v116 = vunpack.c.l.b16 %v94
      %v117 = vunpack.c.l.b16 %v95
      %v118 = vunpack.c.l.b16 %v96
      %v119 = vunpack.c.l.b16 %v97
      %v120 = vunpack.c.l.b16 %v98
      %v121 = vpack.c.b16 %v114, %v113
      %v122 = vpack.c.b16 %v116, %v115
      %v123 = vpack.c.b16 %v118, %v117
      %v124 = vpack.c.b16 %v120, %v119
      %v127 = vunpack.c.l.b16 %v84
      %v128 = vunpack.c.l.b16 %v85
      %v129 = vpack.c.b16 %v128, %v127
      %vm131 = vcmask 130048
      %v133 = vsel %vm131, %v121, 0
      %v136 = vsel %vm131, %v122, 0
      %v139 = vsel %vm131, %v123, 0
      %v142 = vsel %vm131, %v124, 0
      %144 = vmatprep.subr.bf16.mxu0 0
      %145 = vmatpush1.bf16.msra.mxu0 0
      %146 = vmatprep.subr.bf16.mxu0 0
      %147 = vmatpush1.bf16.msra.mxu0 0
      %148 = vmatprep.subr.bf16.mxu0 0
      %149 = vmatpush1.bf16.msra.mxu0 0
      %150 = vmatprep.subr.bf16.mxu0 0
      %151 = vmatpush1.bf16.msra.mxu0 0
      %152 = vmatprep.subr.bf16.mxu0 0
      %153 = vmatpush1.bf16.msra.mxu0 0
      %154 = vmatprep.subr.bf16.mxu0 0
      %155 = vmatpush1.bf16.msra.mxu0 0
      %156 = vmatprep.subr.bf16.mxu0 0
      %157 = vmatpush1.bf16.msra.mxu0 0
      %158 = vmatprep.subr.bf16.mxu0 0
      %159 = vmatpush1.bf16.msra.mxu0 %v129
      %160 = vmatprep.subr.bf16.mxu0 0
      %161 = vmatpush2.bf16.msra.mxu0 0
      %162 = vmatprep.subr.bf16.mxu0 0
      %163 = vmatpush2.bf16.msra.mxu0 0
      %164 = vmatprep.subr.bf16.mxu0 0
      %165 = vmatpush2.bf16.msra.mxu0 0
      %166 = vmatprep.subr.bf16.mxu0 0
      %167 = vmatpush2.bf16.msra.mxu0 0
      %168 = vmatprep.subr.bf16.mxu0 0
      %169 = vmatpush2.bf16.msra.mxu0 0
      %170 = vmatprep.subr.bf16.mxu0 0
      %171 = vmatpush2.bf16.msra.mxu0 0
      %172 = vmatprep.subr.bf16.mxu0 0
      %173 = vmatpush2.bf16.msra.mxu0 0
      %174 = vmatprep.subr.bf16.mxu0 0
      %175 = vmatpush2.bf16.msra.mxu0 0
      %176 = vmatprep.mubr.bf16.mxu0 0
      %177 = vmatmul.mubr.bf16.gmra.mxu0 %v133
      %v178 = vpop.f32.mrf.mxu0
      %v179 = vadd.f32 %v103, %v178
      %v180 = vpop.f32.mrf.mxu0
      %v181 = vpop.f32.mrf.mxu0
      %v182 = vadd.f32 %v103, %v181
      %v183 = vpop.f32.mrf.mxu0
      %184 = vmatprep.mubr.bf16.mxu0 0
      %185 = vmatmul.mubr.bf16.gmra.mxu0 %v136
      %v186 = vpop.f32.mrf.mxu0
      %v187 = vadd.f32 %v103, %v186
      %v188 = vpop.f32.mrf.mxu0
      %v189 = vpop.f32.mrf.mxu0
      %v190 = vadd.f32 %v103, %v189
      %v191 = vpop.f32.mrf.mxu0
      %192 = vmatprep.mubr.bf16.mxu0 0
      %193 = vmatmul.mubr.bf16.gmra.mxu0 %v139
      %v194 = vpop.f32.mrf.mxu0
      %v195 = vadd.f32 %v103, %v194
      %v196 = vpop.f32.mrf.mxu0
      %v197 = vpop.f32.mrf.mxu0
      %v198 = vadd.f32 %v103, %v197
      %v199 = vpop.f32.mrf.mxu0
      %200 = vmatprep.mubr.bf16.mxu0 0
      %201 = vmatmul.mubr.bf16.gmra.mxu0 %v142
      %v202 = vpop.f32.mrf.mxu0
      %v203 = vadd.f32 %v103, %v202
      %v204 = vpop.f32.mrf.mxu0
      %v205 = vpop.f32.mrf.mxu0
      %v206 = vadd.f32 %v103, %v205
      %v207 = vpop.f32.mrf.mxu0
      %208 = vdwg.mxu0
      %209 = vst [vmem:[#allocation3] sm:$0xff] %v179
      %210 = vst [vmem:[#allocation3 + $0x8] sm:$0xff] %v182
      %211 = vst [vmem:[#allocation3 + $0x10] sm:$0xff] %v187
      %212 = vst [vmem:[#allocation3 + $0x18] sm:$0xff] %v190
      %213 = vst [vmem:[#allocation3 + $0x20] sm:$0xff] %v195
      %214 = vst [vmem:[#allocation3 + $0x28] sm:$0xff] %v198
      %215 = vst [vmem:[#allocation3 + $0x30] sm:$0xff] %v203
      %216 = vst [vmem:[#allocation3 + $0x38] sm:$0xff] %v206
      %vm217 = vcmask 261120
      %218 = vst.msk [vmem:[#allocation4] sm:$0xff] %vm217, 0.0
      %219 = vst.msk [vmem:[#allocation5] sm:$0xff] %vm217, 0.0
      %v220 = vld [vmem:[#allocation4] sm:$0xff]
      %v221 = vpack.c.bf16 %v220, %v220
      %v222 = vld [vmem:[#allocation3] sm:$0xff]
      %v227 = vunpack.c.l.b16 %v86
      %v228 = vunpack.c.l.b16 %v87
      %v229 = vunpack.c.l.b16 %v88
      %v230 = vunpack.c.l.b16 %v89
      %v231 = vpack.c.b16 %v228, %v227
      %v232 = vpack.c.b16 %v230, %v229
      %v236 = vsel %vm217, %v221, 0
      %238 = vmatprep.subr.bf16.mxu0 0
      %239 = vmatpush1.bf16.msra.mxu0 0
      %240 = vmatprep.subr.bf16.mxu0 0
      %241 = vmatpush1.bf16.msra.mxu0 0
      %242 = vmatprep.subr.bf16.mxu0 0
      %243 = vmatpush1.bf16.msra.mxu0 0
      %244 = vmatprep.subr.bf16.mxu0 0
      %245 = vmatpush1.bf16.msra.mxu0 0
      %246 = vmatprep.subr.bf16.mxu0 0
      %247 = vmatpush1.bf16.msra.mxu0 0
      %248 = vmatprep.subr.bf16.mxu0 0
      %249 = vmatpush1.bf16.msra.mxu0 0
      %250 = vmatprep.subr.bf16.mxu0 0
      %251 = vmatpush1.bf16.msra.mxu0 %v232
      %252 = vmatprep.subr.bf16.mxu0 0
      %253 = vmatpush1.bf16.msra.mxu0 %v231
      %254 = vmatprep.subr.bf16.mxu0 0
      %255 = vmatpush2.bf16.msra.mxu0 0
      %256 = vmatprep.subr.bf16.mxu0 0
      %257 = vmatpush2.bf16.msra.mxu0 0
      %258 = vmatprep.subr.bf16.mxu0 0
      %259 = vmatpush2.bf16.msra.mxu0 0
      %260 = vmatprep.subr.bf16.mxu0 0
      %261 = vmatpush2.bf16.msra.mxu0 0
      %262 = vmatprep.subr.bf16.mxu0 0
      %263 = vmatpush2.bf16.msra.mxu0 0
      %264 = vmatprep.subr.bf16.mxu0 0
      %265 = vmatpush2.bf16.msra.mxu0 0
      %266 = vmatprep.subr.bf16.mxu0 0
      %267 = vmatpush2.bf16.msra.mxu0 0
      %268 = vmatprep.subr.bf16.mxu0 0
      %269 = vmatpush2.bf16.msra.mxu0 0
      %270 = vmatprep.mubr.bf16.mxu0 0
      %271 = vmatmul.mubr.bf16.gmra.mxu0 %v236
      %v272 = vpop.f32.mrf.mxu0
      %v273 = vadd.f32 %v222, %v272
      %v274 = vpop.f32.mrf.mxu0
      %v275 = vpop.f32.mrf.mxu0
      %v276 = vpop.f32.mrf.mxu0
      %277 = vdwg.mxu0
      %v278 = vxor.u32 %v273, 2147483648
      %v279 = vmul.f32 %v278, 1.442695
      %v280 = vpow.pop %v279
      %v281 = vadd.f32 %v280, 1.0
      %v282 = vrcp.pop %v281
      %v283 = vmul.f32 1.0, %v282
      %v284 = vtanh.pop %v273
      %v285 = vld [vmem:[#allocation5] sm:$0xff]
      %287 = vrot.lane.b32.xlu0 %v285, 32
      %v288 = vpop.permute.xlu0 %287
      %v290 = vmul.f32 %v283, %v288
      %292 = vrot.lane.b32.xlu0 %v284, 32
      %v293 = vpop.permute.xlu0 %292
      %v295 = vmul.f32 %v283, %v293
      %297 = vrot.lane.b32.xlu0 %v295, 32
      %v298 = vpop.permute.xlu0 %297
      %v300 = vadd.f32 %v290, %v298
      %v301 = vtanh.pop %v300
      %303 = vrot.lane.b32.xlu0 %v301, 32
      %v304 = vpop.permute.xlu0 %303
      %v306 = vmul.f32 %v283, %v304
      %308 = vrot.lane.b32.xlu0 %v300, 96
      %v309 = vpop.permute.xlu0 %308
      %311 = vst.msk [vmem:[#allocation5] sm:$0xff] %vm217, %v309
      %313 = vrot.lane.b32.xlu0 %v306, 64
      %v314 = vpop.permute.xlu0 %313
      %316 = vst.msk [vmem:[#allocation4] sm:$0xff] %vm217, %v314
      %317 = vst.msk [vmem:[#allocation2] sm:$0xff] %vm217, %v314
      %v318 = vld [vmem:[#allocation4] sm:$0xff]
      %v319 = vpack.c.bf16 %v318, %v318
      %s320 = scalar_lea.vmem [#allocation3], 8
      %v321 = vld [vmem:[%s320] sm:$0xff]
      %v323 = vsel %vm217, %v319, 0
      %325 = vmatprep.subr.bf16.mxu0 0
      %326 = vmatpush1.bf16.msra.mxu0 0
      %327 = vmatprep.subr.bf16.mxu0 0
      %328 = vmatpush1.bf16.msra.mxu0 0
      %329 = vmatprep.subr.bf16.mxu0 0
      %330 = vmatpush1.bf16.msra.mxu0 0
      %331 = vmatprep.subr.bf16.mxu0 0
      %332 = vmatpush1.bf16.msra.mxu0 0
      %333 = vmatprep.subr.bf16.mxu0 0
      %334 = vmatpush1.bf16.msra.mxu0 0
      %335 = vmatprep.subr.bf16.mxu0 0
      %336 = vmatpush1.bf16.msra.mxu0 0
      %337 = vmatprep.subr.bf16.mxu0 0
      %338 = vmatpush1.bf16.msra.mxu0 %v232
      %339 = vmatprep.subr.bf16.mxu0 0
      %340 = vmatpush1.bf16.msra.mxu0 %v231
      %341 = vmatprep.subr.bf16.mxu0 0
      %342 = vmatpush2.bf16.msra.mxu0 0
      %343 = vmatprep.subr.bf16.mxu0 0
      %344 = vmatpush2.bf16.msra.mxu0 0
      %345 = vmatprep.subr.bf16.mxu0 0
      %346 = vmatpush2.bf16.msra.mxu0 0
      %347 = vmatprep.subr.bf16.mxu0 0
      %348 = vmatpush2.bf16.msra.mxu0 0
      %349 = vmatprep.subr.bf16.mxu0 0
      %350 = vmatpush2.bf16.msra.mxu0 0
      %351 = vmatprep.subr.bf16.mxu0 0
      %352 = vmatpush2.bf16.msra.mxu0 0
      %353 = vmatprep.subr.bf16.mxu0 0
      %354 = vmatpush2.bf16.msra.mxu0 0
      %355 = vmatprep.subr.bf16.mxu0 0
      %356 = vmatpush2.bf16.msra.mxu0 0
      %357 = vmatprep.mubr.bf16.mxu0 0
      %358 = vmatmul.mubr.bf16.gmra.mxu0 %v323
      %v359 = vpop.f32.mrf.mxu0
      %v360 = vadd.f32 %v321, %v359
      %v361 = vpop.f32.mrf.mxu0
      %v362 = vpop.f32.mrf.mxu0
      %v363 = vpop.f32.mrf.mxu0
      %364 = vdwg.mxu0
      %v365 = vxor.u32 %v360, 2147483648
      %v366 = vmul.f32 %v365, 1.442695
      %v367 = vpow.pop %v366
      %v368 = vadd.f32 %v367, 1.0
      %v369 = vrcp.pop %v368
      %v370 = vmul.f32 1.0, %v369
      %v371 = vtanh.pop %v360
      %v372 = vld [vmem:[#allocation5] sm:$0xff]
      %374 = vrot.lane.b32.xlu0 %v372, 32
      %v375 = vpop.permute.xlu0 %374
      %v377 = vmul.f32 %v370, %v375
      %379 = vrot.lane.b32.xlu0 %v371, 32
      %v380 = vpop.permute.xlu0 %379
      %v382 = vmul.f32 %v370, %v380
      %384 = vrot.lane.b32.xlu0 %v382, 32
      %v385 = vpop.permute.xlu0 %384
      %v387 = vadd.f32 %v377, %v385
      %v388 = vtanh.pop %v387
      %390 = vrot.lane.b32.xlu0 %v388, 32
      %v391 = vpop.permute.xlu0 %390
      %v393 = vmul.f32 %v370, %v391
      %395 = vrot.lane.b32.xlu0 %v387, 96
      %v396 = vpop.permute.xlu0 %395
      %398 = vst.msk [vmem:[#allocation5] sm:$0xff] %vm217, %v396
      %400 = vrot.lane.b32.xlu0 %v393, 64
      %v401 = vpop.permute.xlu0 %400
      %403 = vst.msk [vmem:[#allocation4] sm:$0xff] %vm217, %v401
      %s404 = scalar_lea.vmem [#allocation2], 8
      %405 = vst.msk [vmem:[%s404] sm:$0xff] %vm217, %v401
      %v406 = vld [vmem:[#allocation4] sm:$0xff]
      %v407 = vpack.c.bf16 %v406, %v406
      %s408 = scalar_lea.vmem [#allocation3], 16
      %v409 = vld [vmem:[%s408] sm:$0xff]
      %v411 = vsel %vm217, %v407, 0
      %413 = vmatprep.subr.bf16.mxu0 0
      %414 = vmatpush1.bf16.msra.mxu0 0
      %415 = vmatprep.subr.bf16.mxu0 0
      %416 = vmatpush1.bf16.msra.mxu0 0
      %417 = vmatprep.subr.bf16.mxu0 0
      %418 = vmatpush1.bf16.msra.mxu0 0
      %419 = vmatprep.subr.bf16.mxu0 0
      %420 = vmatpush1.bf16.msra.mxu0 0
      %421 = vmatprep.subr.bf16.mxu0 0
      %422 = vmatpush1.bf16.msra.mxu0 0
      %423 = vmatprep.subr.bf16.mxu0 0
      %424 = vmatpush1.bf16.msra.mxu0 0
      %425 = vmatprep.subr.bf16.mxu0 0
      %426 = vmatpush1.bf16.msra.mxu0 %v232
      %427 = vmatprep.subr.bf16.mxu0 0
      %428 = vmatpush1.bf16.msra.mxu0 %v231
      %429 = vmatprep.subr.bf16.mxu0 0
      %430 = vmatpush2.bf16.msra.mxu0 0
      %431 = vmatprep.subr.bf16.mxu0 0
      %432 = vmatpush2.bf16.msra.mxu0 0
      %433 = vmatprep.subr.bf16.mxu0 0
      %434 = vmatpush2.bf16.msra.mxu0 0
      %435 = vmatprep.subr.bf16.mxu0 0
      %436 = vmatpush2.bf16.msra.mxu0 0
      %437 = vmatprep.subr.bf16.mxu0 0
      %438 = vmatpush2.bf16.msra.mxu0 0
      %439 = vmatprep.subr.bf16.mxu0 0
      %440 = vmatpush2.bf16.msra.mxu0 0
      %441 = vmatprep.subr.bf16.mxu0 0
      %442 = vmatpush2.bf16.msra.mxu0 0
      %443 = vmatprep.subr.bf16.mxu0 0
      %444 = vmatpush2.bf16.msra.mxu0 0
      %445 = vmatprep.mubr.bf16.mxu0 0
      %446 = vmatmul.mubr.bf16.gmra.mxu0 %v411
      %v447 = vpop.f32.mrf.mxu0
      %v448 = vadd.f32 %v409, %v447
      %v449 = vpop.f32.mrf.mxu0
      %v450 = vpop.f32.mrf.mxu0
      %v451 = vpop.f32.mrf.mxu0
      %452 = vdwg.mxu0
      %v453 = vxor.u32 %v448, 2147483648
      %v454 = vmul.f32 %v453, 1.442695
      %v455 = vpow.pop %v454
      %v456 = vadd.f32 %v455, 1.0
      %v457 = vrcp.pop %v456
      %v458 = vmul.f32 1.0, %v457
      %v459 = vtanh.pop %v448
      %v460 = vld [vmem:[#allocation5] sm:$0xff]
      %462 = vrot.lane.b32.xlu0 %v460, 32
      %v463 = vpop.permute.xlu0 %462
      %v465 = vmul.f32 %v458, %v463
      %467 = vrot.lane.b32.xlu0 %v459, 32
      %v468 = vpop.permute.xlu0 %467
      %v470 = vmul.f32 %v458, %v468
      %472 = vrot.lane.b32.xlu0 %v470, 32
      %v473 = vpop.permute.xlu0 %472
      %v475 = vadd.f32 %v465, %v473
      %v476 = vtanh.pop %v475
      %478 = vrot.lane.b32.xlu0 %v476, 32
      %v479 = vpop.permute.xlu0 %478
      %v481 = vmul.f32 %v458, %v479
      %483 = vrot.lane.b32.xlu0 %v475, 96
      %v484 = vpop.permute.xlu0 %483
      %486 = vst.msk [vmem:[#allocation5] sm:$0xff] %vm217, %v484
      %488 = vrot.lane.b32.xlu0 %v481, 64
      %v489 = vpop.permute.xlu0 %488
      %491 = vst.msk [vmem:[#allocation4] sm:$0xff] %vm217, %v489
      %s492 = scalar_lea.vmem [#allocation2], 16
      %493 = vst.msk [vmem:[%s492] sm:$0xff] %vm217, %v489
      %v494 = vld [vmem:[#allocation4] sm:$0xff]
      %v495 = vpack.c.bf16 %v494, %v494
      %s496 = scalar_lea.vmem [#allocation3], 24
      %v497 = vld [vmem:[%s496] sm:$0xff]
      %v499 = vsel %vm217, %v495, 0
      %501 = vmatprep.subr.bf16.mxu0 0
      %502 = vmatpush1.bf16.msra.mxu0 0
      %503 = vmatprep.subr.bf16.mxu0 0
      %504 = vmatpush1.bf16.msra.mxu0 0
      %505 = vmatprep.subr.bf16.mxu0 0
      %506 = vmatpush1.bf16.msra.mxu0 0
      %507 = vmatprep.subr.bf16.mxu0 0
      %508 = vmatpush1.bf16.msra.mxu0 0
      %509 = vmatprep.subr.bf16.mxu0 0
      %510 = vmatpush1.bf16.msra.mxu0 0
      %511 = vmatprep.subr.bf16.mxu0 0
      %512 = vmatpush1.bf16.msra.mxu0 0
      %513 = vmatprep.subr.bf16.mxu0 0
      %514 = vmatpush1.bf16.msra.mxu0 %v232
      %515 = vmatprep.subr.bf16.mxu0 0
      %516 = vmatpush1.bf16.msra.mxu0 %v231
      %517 = vmatprep.subr.bf16.mxu0 0
      %518 = vmatpush2.bf16.msra.mxu0 0
      %519 = vmatprep.subr.bf16.mxu0 0
      %520 = vmatpush2.bf16.msra.mxu0 0
      %521 = vmatprep.subr.bf16.mxu0 0
      %522 = vmatpush2.bf16.msra.mxu0 0
      %523 = vmatprep.subr.bf16.mxu0 0
      %524 = vmatpush2.bf16.msra.mxu0 0
      %525 = vmatprep.subr.bf16.mxu0 0
      %526 = vmatpush2.bf16.msra.mxu0 0
      %527 = vmatprep.subr.bf16.mxu0 0
      %528 = vmatpush2.bf16.msra.mxu0 0
      %529 = vmatprep.subr.bf16.mxu0 0
      %530 = vmatpush2.bf16.msra.mxu0 0
      %531 = vmatprep.subr.bf16.mxu0 0
      %532 = vmatpush2.bf16.msra.mxu0 0
      %533 = vmatprep.mubr.bf16.mxu0 0
      %534 = vmatmul.mubr.bf16.gmra.mxu0 %v499
      %v535 = vpop.f32.mrf.mxu0
      %v536 = vadd.f32 %v497, %v535
      %v537 = vpop.f32.mrf.mxu0
      %v538 = vpop.f32.mrf.mxu0
      %v539 = vpop.f32.mrf.mxu0
      %540 = vdwg.mxu0
      %v541 = vxor.u32 %v536, 2147483648
      %v542 = vmul.f32 %v541, 1.442695
      %v543 = vpow.pop %v542
      %v544 = vadd.f32 %v543, 1.0
      %v545 = vrcp.pop %v544
      %v546 = vmul.f32 1.0, %v545
      %v547 = vtanh.pop %v536
      %v548 = vld [vmem:[#allocation5] sm:$0xff]
      %550 = vrot.lane.b32.xlu0 %v548, 32
      %v551 = vpop.permute.xlu0 %550
      %v553 = vmul.f32 %v546, %v551
      %555 = vrot.lane.b32.xlu0 %v547, 32
      %v556 = vpop.permute.xlu0 %555
      %v558 = vmul.f32 %v546, %v556
      %560 = vrot.lane.b32.xlu0 %v558, 32
      %v561 = vpop.permute.xlu0 %560
      %v563 = vadd.f32 %v553, %v561
      %v564 = vtanh.pop %v563
      %566 = vrot.lane.b32.xlu0 %v564, 32
      %v567 = vpop.permute.xlu0 %566
      %v569 = vmul.f32 %v546, %v567
      %571 = vrot.lane.b32.xlu0 %v563, 96
      %v572 = vpop.permute.xlu0 %571
      %574 = vst.msk [vmem:[#allocation5] sm:$0xff] %vm217, %v572
      %576 = vrot.lane.b32.xlu0 %v569, 64
      %v577 = vpop.permute.xlu0 %576
      %579 = vst.msk [vmem:[#allocation4] sm:$0xff] %vm217, %v577
      %s580 = scalar_lea.vmem [#allocation2], 24
      %581 = vst.msk [vmem:[%s580] sm:$0xff] %vm217, %v577
      %v582 = vld [vmem:[#allocation4] sm:$0xff]
      %v583 = vpack.c.bf16 %v582, %v582
      %s584 = scalar_lea.vmem [#allocation3], 32
      %v585 = vld [vmem:[%s584] sm:$0xff]
      %v587 = vsel %vm217, %v583, 0
      %589 = vmatprep.subr.bf16.mxu0 0
      %590 = vmatpush1.bf16.msra.mxu0 0
      %591 = vmatprep.subr.bf16.mxu0 0
      %592 = vmatpush1.bf16.msra.mxu0 0
      %593 = vmatprep.subr.bf16.mxu0 0
      %594 = vmatpush1.bf16.msra.mxu0 0
      %595 = vmatprep.subr.bf16.mxu0 0
      %596 = vmatpush1.bf16.msra.mxu0 0
      %597 = vmatprep.subr.bf16.mxu0 0
      %598 = vmatpush1.bf16.msra.mxu0 0
      %599 = vmatprep.subr.bf16.mxu0 0
      %600 = vmatpush1.bf16.msra.mxu0 0
      %601 = vmatprep.subr.bf16.mxu0 0
      %602 = vmatpush1.bf16.msra.mxu0 %v232
      %603 = vmatprep.subr.bf16.mxu0 0
      %604 = vmatpush1.bf16.msra.mxu0 %v231
      %605 = vmatprep.subr.bf16.mxu0 0
      %606 = vmatpush2.bf16.msra.mxu0 0
      %607 = vmatprep.subr.bf16.mxu0 0
      %608 = vmatpush2.bf16.msra.mxu0 0
      %609 = vmatprep.subr.bf16.mxu0 0
      %610 = vmatpush2.bf16.msra.mxu0 0
      %611 = vmatprep.subr.bf16.mxu0 0
      %612 = vmatpush2.bf16.msra.mxu0 0
      %613 = vmatprep.subr.bf16.mxu0 0
      %614 = vmatpush2.bf16.msra.mxu0 0
      %615 = vmatprep.subr.bf16.mxu0 0
      %616 = vmatpush2.bf16.msra.mxu0 0
      %617 = vmatprep.subr.bf16.mxu0 0
      %618 = vmatpush2.bf16.msra.mxu0 0
      %619 = vmatprep.subr.bf16.mxu0 0
      %620 = vmatpush2.bf16.msra.mxu0 0
      %621 = vmatprep.mubr.bf16.mxu0 0
      %622 = vmatmul.mubr.bf16.gmra.mxu0 %v587
      %v623 = vpop.f32.mrf.mxu0
      %v624 = vadd.f32 %v585, %v623
      %v625 = vpop.f32.mrf.mxu0
      %v626 = vpop.f32.mrf.mxu0
      %v627 = vpop.f32.mrf.mxu0
      %628 = vdwg.mxu0
      %v629 = vxor.u32 %v624, 2147483648
      %v630 = vmul.f32 %v629, 1.442695
      %v631 = vpow.pop %v630
      %v632 = vadd.f32 %v631, 1.0
      %v633 = vrcp.pop %v632
      %v634 = vmul.f32 1.0, %v633
      %v635 = vtanh.pop %v624
      %v636 = vld [vmem:[#allocation5] sm:$0xff]
      %638 = vrot.lane.b32.xlu0 %v636, 32
      %v639 = vpop.permute.xlu0 %638
      %v641 = vmul.f32 %v634, %v639
      %643 = vrot.lane.b32.xlu0 %v635, 32
      %v644 = vpop.permute.xlu0 %643
      %v646 = vmul.f32 %v634, %v644
      %648 = vrot.lane.b32.xlu0 %v646, 32
      %v649 = vpop.permute.xlu0 %648
      %v651 = vadd.f32 %v641, %v649
      %v652 = vtanh.pop %v651
      %654 = vrot.lane.b32.xlu0 %v652, 32
      %v655 = vpop.permute.xlu0 %654
      %v657 = vmul.f32 %v634, %v655
      %659 = vrot.lane.b32.xlu0 %v651, 96
      %v660 = vpop.permute.xlu0 %659
      %662 = vst.msk [vmem:[#allocation5] sm:$0xff] %vm217, %v660
      %664 = vrot.lane.b32.xlu0 %v657, 64
      %v665 = vpop.permute.xlu0 %664
      %667 = vst.msk [vmem:[#allocation4] sm:$0xff] %vm217, %v665
      %s668 = scalar_lea.vmem [#allocation2], 32
      %669 = vst.msk [vmem:[%s668] sm:$0xff] %vm217, %v665
      %v670 = vld [vmem:[#allocation4] sm:$0xff]
      %v671 = vpack.c.bf16 %v670, %v670
      %s672 = scalar_lea.vmem [#allocation3], 40
      %v673 = vld [vmem:[%s672] sm:$0xff]
      %v675 = vsel %vm217, %v671, 0
      %677 = vmatprep.subr.bf16.mxu0 0
      %678 = vmatpush1.bf16.msra.mxu0 0
      %679 = vmatprep.subr.bf16.mxu0 0
      %680 = vmatpush1.bf16.msra.mxu0 0
      %681 = vmatprep.subr.bf16.mxu0 0
      %682 = vmatpush1.bf16.msra.mxu0 0
      %683 = vmatprep.subr.bf16.mxu0 0
      %684 = vmatpush1.bf16.msra.mxu0 0
      %685 = vmatprep.subr.bf16.mxu0 0
      %686 = vmatpush1.bf16.msra.mxu0 0
      %687 = vmatprep.subr.bf16.mxu0 0
      %688 = vmatpush1.bf16.msra.mxu0 0
      %689 = vmatprep.subr.bf16.mxu0 0
      %690 = vmatpush1.bf16.msra.mxu0 %v232
      %691 = vmatprep.subr.bf16.mxu0 0
      %692 = vmatpush1.bf16.msra.mxu0 %v231
      %693 = vmatprep.subr.bf16.mxu0 0
      %694 = vmatpush2.bf16.msra.mxu0 0
      %695 = vmatprep.subr.bf16.mxu0 0
      %696 = vmatpush2.bf16.msra.mxu0 0
      %697 = vmatprep.subr.bf16.mxu0 0
      %698 = vmatpush2.bf16.msra.mxu0 0
      %699 = vmatprep.subr.bf16.mxu0 0
      %700 = vmatpush2.bf16.msra.mxu0 0
      %701 = vmatprep.subr.bf16.mxu0 0
      %702 = vmatpush2.bf16.msra.mxu0 0
      %703 = vmatprep.subr.bf16.mxu0 0
      %704 = vmatpush2.bf16.msra.mxu0 0
      %705 = vmatprep.subr.bf16.mxu0 0
      %706 = vmatpush2.bf16.msra.mxu0 0
      %707 = vmatprep.subr.bf16.mxu0 0
      %708 = vmatpush2.bf16.msra.mxu0 0
      %709 = vmatprep.mubr.bf16.mxu0 0
      %710 = vmatmul.mubr.bf16.gmra.mxu0 %v675
      %v711 = vpop.f32.mrf.mxu0
      %v712 = vadd.f32 %v673, %v711
      %v713 = vpop.f32.mrf.mxu0
      %v714 = vpop.f32.mrf.mxu0
      %v715 = vpop.f32.mrf.mxu0
      %716 = vdwg.mxu0
      %v717 = vxor.u32 %v712, 2147483648
      %v718 = vmul.f32 %v717, 1.442695
      %v719 = vpow.pop %v718
      %v720 = vadd.f32 %v719, 1.0
      %v721 = vrcp.pop %v720
      %v722 = vmul.f32 1.0, %v721
      %v723 = vtanh.pop %v712
      %v724 = vld [vmem:[#allocation5] sm:$0xff]
      %726 = vrot.lane.b32.xlu0 %v724, 32
      %v727 = vpop.permute.xlu0 %726
      %v729 = vmul.f32 %v722, %v727
      %731 = vrot.lane.b32.xlu0 %v723, 32
      %v732 = vpop.permute.xlu0 %731
      %v734 = vmul.f32 %v722, %v732
      %736 = vrot.lane.b32.xlu0 %v734, 32
      %v737 = vpop.permute.xlu0 %736
      %v739 = vadd.f32 %v729, %v737
      %v740 = vtanh.pop %v739
      %742 = vrot.lane.b32.xlu0 %v740, 32
      %v743 = vpop.permute.xlu0 %742
      %v745 = vmul.f32 %v722, %v743
      %747 = vrot.lane.b32.xlu0 %v739, 96
      %v748 = vpop.permute.xlu0 %747
      %750 = vst.msk [vmem:[#allocation5] sm:$0xff] %vm217, %v748
      %752 = vrot.lane.b32.xlu0 %v745, 64
      %v753 = vpop.permute.xlu0 %752
      %755 = vst.msk [vmem:[#allocation4] sm:$0xff] %vm217, %v753
      %s756 = scalar_lea.vmem [#allocation2], 40
      %757 = vst.msk [vmem:[%s756] sm:$0xff] %vm217, %v753
      %v758 = vld [vmem:[#allocation4] sm:$0xff]
      %v759 = vpack.c.bf16 %v758, %v758
      %s760 = scalar_lea.vmem [#allocation3], 48
      %v761 = vld [vmem:[%s760] sm:$0xff]
      %v763 = vsel %vm217, %v759, 0
      %765 = vmatprep.subr.bf16.mxu0 0
      %766 = vmatpush1.bf16.msra.mxu0 0
      %767 = vmatprep.subr.bf16.mxu0 0
      %768 = vmatpush1.bf16.msra.mxu0 0
      %769 = vmatprep.subr.bf16.mxu0 0
      %770 = vmatpush1.bf16.msra.mxu0 0
      %771 = vmatprep.subr.bf16.mxu0 0
      %772 = vmatpush1.bf16.msra.mxu0 0
      %773 = vmatprep.subr.bf16.mxu0 0
      %774 = vmatpush1.bf16.msra.mxu0 0
      %775 = vmatprep.subr.bf16.mxu0 0
      %776 = vmatpush1.bf16.msra.mxu0 0
      %777 = vmatprep.subr.bf16.mxu0 0
      %778 = vmatpush1.bf16.msra.mxu0 %v232
      %779 = vmatprep.subr.bf16.mxu0 0
      %780 = vmatpush1.bf16.msra.mxu0 %v231
      %781 = vmatprep.subr.bf16.mxu0 0
      %782 = vmatpush2.bf16.msra.mxu0 0
      %783 = vmatprep.subr.bf16.mxu0 0
      %784 = vmatpush2.bf16.msra.mxu0 0
      %785 = vmatprep.subr.bf16.mxu0 0
      %786 = vmatpush2.bf16.msra.mxu0 0
      %787 = vmatprep.subr.bf16.mxu0 0
      %788 = vmatpush2.bf16.msra.mxu0 0
      %789 = vmatprep.subr.bf16.mxu0 0
      %790 = vmatpush2.bf16.msra.mxu0 0
      %791 = vmatprep.subr.bf16.mxu0 0
      %792 = vmatpush2.bf16.msra.mxu0 0
      %793 = vmatprep.subr.bf16.mxu0 0
      %794 = vmatpush2.bf16.msra.mxu0 0
      %795 = vmatprep.subr.bf16.mxu0 0
      %796 = vmatpush2.bf16.msra.mxu0 0
      %797 = vmatprep.mubr.bf16.mxu0 0
      %798 = vmatmul.mubr.bf16.gmra.mxu0 %v763
      %v799 = vpop.f32.mrf.mxu0
      %v800 = vadd.f32 %v761, %v799
      %v801 = vpop.f32.mrf.mxu0
      %v802 = vpop.f32.mrf.mxu0
      %v803 = vpop.f32.mrf.mxu0
      %804 = vdwg.mxu0
      %v805 = vxor.u32 %v800, 2147483648
      %v806 = vmul.f32 %v805, 1.442695
      %v807 = vpow.pop %v806
      %v808 = vadd.f32 %v807, 1.0
      %v809 = vrcp.pop %v808
      %v810 = vmul.f32 1.0, %v809
      %v811 = vtanh.pop %v800
      %v812 = vld [vmem:[#allocation5] sm:$0xff]
      %814 = vrot.lane.b32.xlu0 %v812, 32
      %v815 = vpop.permute.xlu0 %814
      %v817 = vmul.f32 %v810, %v815
      %819 = vrot.lane.b32.xlu0 %v811, 32
      %v820 = vpop.permute.xlu0 %819
      %v822 = vmul.f32 %v810, %v820
      %824 = vrot.lane.b32.xlu0 %v822, 32
      %v825 = vpop.permute.xlu0 %824
      %v827 = vadd.f32 %v817, %v825
      %v828 = vtanh.pop %v827
      %830 = vrot.lane.b32.xlu0 %v828, 32
      %v831 = vpop.permute.xlu0 %830
      %v833 = vmul.f32 %v810, %v831
      %835 = vrot.lane.b32.xlu0 %v827, 96
      %v836 = vpop.permute.xlu0 %835
      %838 = vst.msk [vmem:[#allocation5] sm:$0xff] %vm217, %v836
      %840 = vrot.lane.b32.xlu0 %v833, 64
      %v841 = vpop.permute.xlu0 %840
      %843 = vst.msk [vmem:[#allocation4] sm:$0xff] %vm217, %v841
      %s844 = scalar_lea.vmem [#allocation2], 48
      %845 = vst.msk [vmem:[%s844] sm:$0xff] %vm217, %v841
      %v846 = vld [vmem:[#allocation4] sm:$0xff]
      %v847 = vpack.c.bf16 %v846, %v846
      %s848 = scalar_lea.vmem [#allocation3], 56
      %v849 = vld [vmem:[%s848] sm:$0xff]
      %v851 = vsel %vm217, %v847, 0
      %853 = vmatprep.subr.bf16.mxu0 0
      %854 = vmatpush1.bf16.msra.mxu0 0
      %855 = vmatprep.subr.bf16.mxu0 0
      %856 = vmatpush1.bf16.msra.mxu0 0
      %857 = vmatprep.subr.bf16.mxu0 0
      %858 = vmatpush1.bf16.msra.mxu0 0
      %859 = vmatprep.subr.bf16.mxu0 0
      %860 = vmatpush1.bf16.msra.mxu0 0
      %861 = vmatprep.subr.bf16.mxu0 0
      %862 = vmatpush1.bf16.msra.mxu0 0
      %863 = vmatprep.subr.bf16.mxu0 0
      %864 = vmatpush1.bf16.msra.mxu0 0
      %865 = vmatprep.subr.bf16.mxu0 0
      %866 = vmatpush1.bf16.msra.mxu0 %v232
      %867 = vmatprep.subr.bf16.mxu0 0
      %868 = vmatpush1.bf16.msra.mxu0 %v231
      %869 = vmatprep.subr.bf16.mxu0 0
      %870 = vmatpush2.bf16.msra.mxu0 0
      %871 = vmatprep.subr.bf16.mxu0 0
      %872 = vmatpush2.bf16.msra.mxu0 0
      %873 = vmatprep.subr.bf16.mxu0 0
      %874 = vmatpush2.bf16.msra.mxu0 0
      %875 = vmatprep.subr.bf16.mxu0 0
      %876 = vmatpush2.bf16.msra.mxu0 0
      %877 = vmatprep.subr.bf16.mxu0 0
      %878 = vmatpush2.bf16.msra.mxu0 0
      %879 = vmatprep.subr.bf16.mxu0 0
      %880 = vmatpush2.bf16.msra.mxu0 0
      %881 = vmatprep.subr.bf16.mxu0 0
      %882 = vmatpush2.bf16.msra.mxu0 0
      %883 = vmatprep.subr.bf16.mxu0 0
      %884 = vmatpush2.bf16.msra.mxu0 0
      %885 = vmatprep.mubr.bf16.mxu0 0
      %886 = vmatmul.mubr.bf16.gmra.mxu0 %v851
      %v887 = vpop.f32.mrf.mxu0
      %v888 = vadd.f32 %v849, %v887
      %v889 = vpop.f32.mrf.mxu0
      %v890 = vpop.f32.mrf.mxu0
      %v891 = vpop.f32.mrf.mxu0
      %892 = vdwg.mxu0
      %v893 = vxor.u32 %v888, 2147483648
      %v894 = vmul.f32 %v893, 1.442695
      %v895 = vpow.pop %v894
      %v896 = vadd.f32 %v895, 1.0
      %v897 = vrcp.pop %v896
      %v898 = vmul.f32 1.0, %v897
      %v899 = vtanh.pop %v888
      %v900 = vld [vmem:[#allocation5] sm:$0xff]
      %902 = vrot.lane.b32.xlu0 %v900, 32
      %v903 = vpop.permute.xlu0 %902
      %v905 = vmul.f32 %v898, %v903
      %907 = vrot.lane.b32.xlu0 %v899, 32
      %v908 = vpop.permute.xlu0 %907
      %v910 = vmul.f32 %v898, %v908
      %912 = vrot.lane.b32.xlu0 %v910, 32
      %v913 = vpop.permute.xlu0 %912
      %v915 = vadd.f32 %v905, %v913
      %v916 = vtanh.pop %v915
      %918 = vrot.lane.b32.xlu0 %v916, 32
      %v919 = vpop.permute.xlu0 %918
      %v921 = vmul.f32 %v898, %v919
      %923 = vrot.lane.b32.xlu0 %v915, 96
      %v924 = vpop.permute.xlu0 %923
      %926 = vst.msk [vmem:[#allocation5] sm:$0xff] %vm217, %v924
      %928 = vrot.lane.b32.xlu0 %v921, 64
      %v929 = vpop.permute.xlu0 %928
      %931 = vst.msk [vmem:[#allocation4] sm:$0xff] %vm217, %v929
      %s932 = scalar_lea.vmem [#allocation2], 56
      %933 = vst.msk [vmem:[%s932] sm:$0xff] %vm217, %v929
      %v934 = vld [vmem:[%s5] sm:$0xf]
      %v935 = vld [vmem:[%s5 + $0x4] sm:$0xf]
      %v936 = vld [vmem:[%s5 + $0x8] sm:$0xf]
      %v937 = vld [vmem:[%s5 + $0xc] sm:$0xf]
      %v938 = vld [vmem:[%s6] sm:$0xf]
      %v939 = vld [vmem:[%s6 + $0x4] sm:$0xf]
      %v940 = vld [vmem:[%s6 + $0x8] sm:$0xf]
      %v941 = vld [vmem:[%s6 + $0xc] sm:$0xf]
      %v942 = vld [vmem:[%s7] sm:$0x1]
      %v943 = vld [vmem:[#allocation2] sm:$0xff]
      %v944 = vld [vmem:[#allocation2 + $0x8] sm:$0xff]
      %v945 = vld [vmem:[#allocation2 + $0x10] sm:$0xff]
      %v946 = vld [vmem:[#allocation2 + $0x18] sm:$0xff]
      %v947 = vld [vmem:[#allocation2 + $0x20] sm:$0xff]
      %v948 = vld [vmem:[#allocation2 + $0x28] sm:$0xff]
      %v949 = vld [vmem:[#allocation2 + $0x30] sm:$0xff]
      %v950 = vld [vmem:[#allocation2 + $0x38] sm:$0xff]
      %v951 = vpack.c.bf16 %v944, %v943
      %v952 = vpack.c.bf16 %v946, %v945
      %v953 = vpack.c.bf16 %v948, %v947
      %v954 = vpack.c.bf16 %v950, %v949
      %v956 = vlaneseq
      %v957 = vshrl.u32 %v956, 7
      %v958 = vsub.s32 0, %v957
      %v959 = vrot.slane %v942, %v958
      %v965 = vunpack.c.l.b16 %v934
      %v966 = vunpack.c.l.b16 %v935
      %v967 = vunpack.c.l.b16 %v936
      %v968 = vunpack.c.l.b16 %v937
      %v969 = vpack.c.b16 %v966, %v965
      %v970 = vpack.c.b16 %v968, %v967
      %v974 = vsel %vm217, %v951, 0
      %v977 = vsel %vm217, %v952, 0
      %v980 = vsel %vm217, %v953, 0
      %v983 = vsel %vm217, %v954, 0
      %985 = vmatprep.subr.bf16.mxu0 0
      %986 = vmatpush1.bf16.msra.mxu0 0
      %987 = vmatprep.subr.bf16.mxu0 0
      %988 = vmatpush1.bf16.msra.mxu0 0
      %989 = vmatprep.subr.bf16.mxu0 0
      %990 = vmatpush1.bf16.msra.mxu0 0
      %991 = vmatprep.subr.bf16.mxu0 0
      %992 = vmatpush1.bf16.msra.mxu0 0
      %993 = vmatprep.subr.bf16.mxu0 0
      %994 = vmatpush1.bf16.msra.mxu0 0
      %995 = vmatprep.subr.bf16.mxu0 0
      %996 = vmatpush1.bf16.msra.mxu0 0
      %997 = vmatprep.subr.bf16.mxu0 0
      %998 = vmatpush1.bf16.msra.mxu0 %v970
      %999 = vmatprep.subr.bf16.mxu0 0
      %1000 = vmatpush1.bf16.msra.mxu0 %v969
      %1001 = vmatprep.subr.bf16.mxu0 0
      %1002 = vmatpush2.bf16.msra.mxu0 0
      %1003 = vmatprep.subr.bf16.mxu0 0
      %1004 = vmatpush2.bf16.msra.mxu0 0
      %1005 = vmatprep.subr.bf16.mxu0 0
      %1006 = vmatpush2.bf16.msra.mxu0 0
      %1007 = vmatprep.subr.bf16.mxu0 0
      %1008 = vmatpush2.bf16.msra.mxu0 0
      %1009 = vmatprep.subr.bf16.mxu0 0
      %1010 = vmatpush2.bf16.msra.mxu0 0
      %1011 = vmatprep.subr.bf16.mxu0 0
      %1012 = vmatpush2.bf16.msra.mxu0 0
      %1013 = vmatprep.subr.bf16.mxu0 0
      %1014 = vmatpush2.bf16.msra.mxu0 0
      %1015 = vmatprep.subr.bf16.mxu0 0
      %1016 = vmatpush2.bf16.msra.mxu0 0
      %1017 = vmatprep.mubr.bf16.mxu0 0
      %1018 = vmatmul.mubr.bf16.gmra.mxu0 %v974
      %v1019 = vpop.f32.mrf.mxu0
      %v1020 = vadd.f32 %v959, %v1019
      %v1021 = vpop.f32.mrf.mxu0
      %v1022 = vpop.f32.mrf.mxu0
      %v1023 = vadd.f32 %v959, %v1022
      %v1024 = vpop.f32.mrf.mxu0
      %1025 = vmatprep.mubr.bf16.mxu0 0
      %1026 = vmatmul.mubr.bf16.gmra.mxu0 %v977
      %v1027 = vpop.f32.mrf.mxu0
      %v1028 = vadd.f32 %v959, %v1027
      %v1029 = vpop.f32.mrf.mxu0
      %v1030 = vpop.f32.mrf.mxu0
      %v1031 = vadd.f32 %v959, %v1030
      %v1032 = vpop.f32.mrf.mxu0
      %1033 = vmatprep.mubr.bf16.mxu0 0
      %1034 = vmatmul.mubr.bf16.gmra.mxu0 %v980
      %v1035 = vpop.f32.mrf.mxu0
      %v1036 = vadd.f32 %v959, %v1035
      %v1037 = vpop.f32.mrf.mxu0
      %v1038 = vpop.f32.mrf.mxu0
      %v1039 = vadd.f32 %v959, %v1038
      %v1040 = vpop.f32.mrf.mxu0
      %1041 = vmatprep.mubr.bf16.mxu0 0
      %1042 = vmatmul.mubr.bf16.gmra.mxu0 %v983
      %v1043 = vpop.f32.mrf.mxu0
      %v1044 = vadd.f32 %v959, %v1043
      %v1045 = vpop.f32.mrf.mxu0
      %v1046 = vpop.f32.mrf.mxu0
      %v1047 = vadd.f32 %v959, %v1046
      %v1048 = vpop.f32.mrf.mxu0
      %1049 = vdwg.mxu0
      %1050 = vst [vmem:[#allocation3] sm:$0xff] %v1020
      %1051 = vst [vmem:[#allocation3 + $0x8] sm:$0xff] %v1023
      %1052 = vst [vmem:[#allocation3 + $0x10] sm:$0xff] %v1028
      %1053 = vst [vmem:[#allocation3 + $0x18] sm:$0xff] %v1031
      %1054 = vst [vmem:[#allocation3 + $0x20] sm:$0xff] %v1036
      %1055 = vst [vmem:[#allocation3 + $0x28] sm:$0xff] %v1039
      %1056 = vst [vmem:[#allocation3 + $0x30] sm:$0xff] %v1044
      %1057 = vst [vmem:[#allocation3 + $0x38] sm:$0xff] %v1047
      %1058 = vst.msk [vmem:[#allocation4] sm:$0xff] %vm217, 0.0
      %1059 = vst.msk [vmem:[#allocation5] sm:$0xff] %vm217, 0.0
      %v1060 = vld [vmem:[#allocation4] sm:$0xff]
      %v1061 = vpack.c.bf16 %v1060, %v1060
      %v1062 = vld [vmem:[#allocation3] sm:$0xff]
      %v1067 = vunpack.c.l.b16 %v938
      %v1068 = vunpack.c.l.b16 %v939
      %v1069 = vunpack.c.l.b16 %v940
      %v1070 = vunpack.c.l.b16 %v941
      %v1071 = vpack.c.b16 %v1068, %v1067
      %v1072 = vpack.c.b16 %v1070, %v1069
      %v1076 = vsel %vm217, %v1061, 0
      %1078 = vmatprep.subr.bf16.mxu0 0
      %1079 = vmatpush1.bf16.msra.mxu0 0
      %1080 = vmatprep.subr.bf16.mxu0 0
      %1081 = vmatpush1.bf16.msra.mxu0 0
      %1082 = vmatprep.subr.bf16.mxu0 0
      %1083 = vmatpush1.bf16.msra.mxu0 0
      %1084 = vmatprep.subr.bf16.mxu0 0
      %1085 = vmatpush1.bf16.msra.mxu0 0
      %1086 = vmatprep.subr.bf16.mxu0 0
      %1087 = vmatpush1.bf16.msra.mxu0 0
      %1088 = vmatprep.subr.bf16.mxu0 0
      %1089 = vmatpush1.bf16.msra.mxu0 0
      %1090 = vmatprep.subr.bf16.mxu0 0
      %1091 = vmatpush1.bf16.msra.mxu0 %v1072
      %1092 = vmatprep.subr.bf16.mxu0 0
      %1093 = vmatpush1.bf16.msra.mxu0 %v1071
      %1094 = vmatprep.subr.bf16.mxu0 0
      %1095 = vmatpush2.bf16.msra.mxu0 0
      %1096 = vmatprep.subr.bf16.mxu0 0
      %1097 = vmatpush2.bf16.msra.mxu0 0
      %1098 = vmatprep.subr.bf16.mxu0 0
      %1099 = vmatpush2.bf16.msra.mxu0 0
      %1100 = vmatprep.subr.bf16.mxu0 0
      %1101 = vmatpush2.bf16.msra.mxu0 0
      %1102 = vmatprep.subr.bf16.mxu0 0
      %1103 = vmatpush2.bf16.msra.mxu0 0
      %1104 = vmatprep.subr.bf16.mxu0 0
      %1105 = vmatpush2.bf16.msra.mxu0 0
      %1106 = vmatprep.subr.bf16.mxu0 0
      %1107 = vmatpush2.bf16.msra.mxu0 0
      %1108 = vmatprep.subr.bf16.mxu0 0
      %1109 = vmatpush2.bf16.msra.mxu0 0
      %1110 = vmatprep.mubr.bf16.mxu0 0
      %1111 = vmatmul.mubr.bf16.gmra.mxu0 %v1076
      %v1112 = vpop.f32.mrf.mxu0
      %v1113 = vadd.f32 %v1062, %v1112
      %v1114 = vpop.f32.mrf.mxu0
      %v1115 = vpop.f32.mrf.mxu0
      %v1116 = vpop.f32.mrf.mxu0
      %1117 = vdwg.mxu0
      %v1118 = vxor.u32 %v1113, 2147483648
      %v1119 = vmul.f32 %v1118, 1.442695
      %v1120 = vpow.pop %v1119
      %v1121 = vadd.f32 %v1120, 1.0
      %v1122 = vrcp.pop %v1121
      %v1123 = vmul.f32 1.0, %v1122
      %v1124 = vtanh.pop %v1113
      %v1125 = vld [vmem:[#allocation5] sm:$0xff]
      %1127 = vrot.lane.b32.xlu0 %v1125, 32
      %v1128 = vpop.permute.xlu0 %1127
      %v1130 = vmul.f32 %v1123, %v1128
      %1132 = vrot.lane.b32.xlu0 %v1124, 32
      %v1133 = vpop.permute.xlu0 %1132
      %v1135 = vmul.f32 %v1123, %v1133
      %1137 = vrot.lane.b32.xlu0 %v1135, 32
      %v1138 = vpop.permute.xlu0 %1137
      %v1140 = vadd.f32 %v1130, %v1138
      %v1141 = vtanh.pop %v1140
      %1143 = vrot.lane.b32.xlu0 %v1141, 32
      %v1144 = vpop.permute.xlu0 %1143
      %v1146 = vmul.f32 %v1123, %v1144
      %1148 = vrot.lane.b32.xlu0 %v1140, 96
      %v1149 = vpop.permute.xlu0 %1148
      %1151 = vst.msk [vmem:[#allocation5] sm:$0xff] %vm217, %v1149
      %1153 = vrot.lane.b32.xlu0 %v1146, 64
      %v1154 = vpop.permute.xlu0 %1153
      %1156 = vst.msk [vmem:[#allocation4] sm:$0xff] %vm217, %v1154
      %1157 = vst.msk [vmem:[#allocation2] sm:$0xff] %vm217, %v1154
      %v1158 = vld [vmem:[#allocation4] sm:$0xff]
      %v1159 = vpack.c.bf16 %v1158, %v1158
      %v1160 = vld [vmem:[%s320] sm:$0xff]
      %v1162 = vsel %vm217, %v1159, 0
      %1164 = vmatprep.subr.bf16.mxu0 0
      %1165 = vmatpush1.bf16.msra.mxu0 0
      %1166 = vmatprep.subr.bf16.mxu0 0
      %1167 = vmatpush1.bf16.msra.mxu0 0
      %1168 = vmatprep.subr.bf16.mxu0 0
      %1169 = vmatpush1.bf16.msra.mxu0 0
      %1170 = vmatprep.subr.bf16.mxu0 0
      %1171 = vmatpush1.bf16.msra.mxu0 0
      %1172 = vmatprep.subr.bf16.mxu0 0
      %1173 = vmatpush1.bf16.msra.mxu0 0
      %1174 = vmatprep.subr.bf16.mxu0 0
      %1175 = vmatpush1.bf16.msra.mxu0 0
      %1176 = vmatprep.subr.bf16.mxu0 0
      %1177 = vmatpush1.bf16.msra.mxu0 %v1072
      %1178 = vmatprep.subr.bf16.mxu0 0
      %1179 = vmatpush1.bf16.msra.mxu0 %v1071
      %1180 = vmatprep.subr.bf16.mxu0 0
      %1181 = vmatpush2.bf16.msra.mxu0 0
      %1182 = vmatprep.subr.bf16.mxu0 0
      %1183 = vmatpush2.bf16.msra.mxu0 0
      %1184 = vmatprep.subr.bf16.mxu0 0
      %1185 = vmatpush2.bf16.msra.mxu0 0
      %1186 = vmatprep.subr.bf16.mxu0 0
      %1187 = vmatpush2.bf16.msra.mxu0 0
      %1188 = vmatprep.subr.bf16.mxu0 0
      %1189 = vmatpush2.bf16.msra.mxu0 0
      %1190 = vmatprep.subr.bf16.mxu0 0
      %1191 = vmatpush2.bf16.msra.mxu0 0
      %1192 = vmatprep.subr.bf16.mxu0 0
      %1193 = vmatpush2.bf16.msra.mxu0 0
      %1194 = vmatprep.subr.bf16.mxu0 0
      %1195 = vmatpush2.bf16.msra.mxu0 0
      %1196 = vmatprep.mubr.bf16.mxu0 0
      %1197 = vmatmul.mubr.bf16.gmra.mxu0 %v1162
      %v1198 = vpop.f32.mrf.mxu0
      %v1199 = vadd.f32 %v1160, %v1198
      %v1200 = vpop.f32.mrf.mxu0
      %v1201 = vpop.f32.mrf.mxu0
      %v1202 = vpop.f32.mrf.mxu0
      %1203 = vdwg.mxu0
      %v1204 = vxor.u32 %v1199, 2147483648
      %v1205 = vmul.f32 %v1204, 1.442695
      %v1206 = vpow.pop %v1205
      %v1207 = vadd.f32 %v1206, 1.0
      %v1208 = vrcp.pop %v1207
      %v1209 = vmul.f32 1.0, %v1208
      %v1210 = vtanh.pop %v1199
      %v1211 = vld [vmem:[#allocation5] sm:$0xff]
      %1213 = vrot.lane.b32.xlu0 %v1211, 32
      %v1214 = vpop.permute.xlu0 %1213
      %v1216 = vmul.f32 %v1209, %v1214
      %1218 = vrot.lane.b32.xlu0 %v1210, 32
      %v1219 = vpop.permute.xlu0 %1218
      %v1221 = vmul.f32 %v1209, %v1219
      %1223 = vrot.lane.b32.xlu0 %v1221, 32
      %v1224 = vpop.permute.xlu0 %1223
      %v1226 = vadd.f32 %v1216, %v1224
      %v1227 = vtanh.pop %v1226
      %1229 = vrot.lane.b32.xlu0 %v1227, 32
      %v1230 = vpop.permute.xlu0 %1229
      %v1232 = vmul.f32 %v1209, %v1230
      %1234 = vrot.lane.b32.xlu0 %v1226, 96
      %v1235 = vpop.permute.xlu0 %1234
      %1237 = vst.msk [vmem:[#allocation5] sm:$0xff] %vm217, %v1235
      %1239 = vrot.lane.b32.xlu0 %v1232, 64
      %v1240 = vpop.permute.xlu0 %1239
      %1242 = vst.msk [vmem:[#allocation4] sm:$0xff] %vm217, %v1240
      %1243 = vst.msk [vmem:[%s404] sm:$0xff] %vm217, %v1240
      %v1244 = vld [vmem:[#allocation4] sm:$0xff]
      %v1245 = vpack.c.bf16 %v1244, %v1244
      %v1246 = vld [vmem:[%s408] sm:$0xff]
      %v1248 = vsel %vm217, %v1245, 0
      %1250 = vmatprep.subr.bf16.mxu0 0
      %1251 = vmatpush1.bf16.msra.mxu0 0
      %1252 = vmatprep.subr.bf16.mxu0 0
      %1253 = vmatpush1.bf16.msra.mxu0 0
      %1254 = vmatprep.subr.bf16.mxu0 0
      %1255 = vmatpush1.bf16.msra.mxu0 0
      %1256 = vmatprep.subr.bf16.mxu0 0
      %1257 = vmatpush1.bf16.msra.mxu0 0
      %1258 = vmatprep.subr.bf16.mxu0 0
      %1259 = vmatpush1.bf16.msra.mxu0 0
      %1260 = vmatprep.subr.bf16.mxu0 0
      %1261 = vmatpush1.bf16.msra.mxu0 0
      %1262 = vmatprep.subr.bf16.mxu0 0
      %1263 = vmatpush1.bf16.msra.mxu0 %v1072
      %1264 = vmatprep.subr.bf16.mxu0 0
      %1265 = vmatpush1.bf16.msra.mxu0 %v1071
      %1266 = vmatprep.subr.bf16.mxu0 0
      %1267 = vmatpush2.bf16.msra.mxu0 0
      %1268 = vmatprep.subr.bf16.mxu0 0
      %1269 = vmatpush2.bf16.msra.mxu0 0
      %1270 = vmatprep.subr.bf16.mxu0 0
      %1271 = vmatpush2.bf16.msra.mxu0 0
      %1272 = vmatprep.subr.bf16.mxu0 0
      %1273 = vmatpush2.bf16.msra.mxu0 0
      %1274 = vmatprep.subr.bf16.mxu0 0
      %1275 = vmatpush2.bf16.msra.mxu0 0
      %1276 = vmatprep.subr.bf16.mxu0 0
      %1277 = vmatpush2.bf16.msra.mxu0 0
      %1278 = vmatprep.subr.bf16.mxu0 0
      %1279 = vmatpush2.bf16.msra.mxu0 0
      %1280 = vmatprep.subr.bf16.mxu0 0
      %1281 = vmatpush2.bf16.msra.mxu0 0
      %1282 = vmatprep.mubr.bf16.mxu0 0
      %1283 = vmatmul.mubr.bf16.gmra.mxu0 %v1248
      %v1284 = vpop.f32.mrf.mxu0
      %v1285 = vadd.f32 %v1246, %v1284
      %v1286 = vpop.f32.mrf.mxu0
      %v1287 = vpop.f32.mrf.mxu0
      %v1288 = vpop.f32.mrf.mxu0
      %1289 = vdwg.mxu0
      %v1290 = vxor.u32 %v1285, 2147483648
      %v1291 = vmul.f32 %v1290, 1.442695
      %v1292 = vpow.pop %v1291
      %v1293 = vadd.f32 %v1292, 1.0
      %v1294 = vrcp.pop %v1293
      %v1295 = vmul.f32 1.0, %v1294
      %v1296 = vtanh.pop %v1285
      %v1297 = vld [vmem:[#allocation5] sm:$0xff]
      %1299 = vrot.lane.b32.xlu0 %v1297, 32
      %v1300 = vpop.permute.xlu0 %1299
      %v1302 = vmul.f32 %v1295, %v1300
      %1304 = vrot.lane.b32.xlu0 %v1296, 32
      %v1305 = vpop.permute.xlu0 %1304
      %v1307 = vmul.f32 %v1295, %v1305
      %1309 = vrot.lane.b32.xlu0 %v1307, 32
      %v1310 = vpop.permute.xlu0 %1309
      %v1312 = vadd.f32 %v1302, %v1310
      %v1313 = vtanh.pop %v1312
      %1315 = vrot.lane.b32.xlu0 %v1313, 32
      %v1316 = vpop.permute.xlu0 %1315
      %v1318 = vmul.f32 %v1295, %v1316
      %1320 = vrot.lane.b32.xlu0 %v1312, 96
      %v1321 = vpop.permute.xlu0 %1320
      %1323 = vst.msk [vmem:[#allocation5] sm:$0xff] %vm217, %v1321
      %1325 = vrot.lane.b32.xlu0 %v1318, 64
      %v1326 = vpop.permute.xlu0 %1325
      %1328 = vst.msk [vmem:[#allocation4] sm:$0xff] %vm217, %v1326
      %1329 = vst.msk [vmem:[%s492] sm:$0xff] %vm217, %v1326
      %v1330 = vld [vmem:[#allocation4] sm:$0xff]
      %v1331 = vpack.c.bf16 %v1330, %v1330
      %v1332 = vld [vmem:[%s496] sm:$0xff]
      %v1334 = vsel %vm217, %v1331, 0
      %1336 = vmatprep.subr.bf16.mxu0 0
      %1337 = vmatpush1.bf16.msra.mxu0 0
      %1338 = vmatprep.subr.bf16.mxu0 0
      %1339 = vmatpush1.bf16.msra.mxu0 0
      %1340 = vmatprep.subr.bf16.mxu0 0
      %1341 = vmatpush1.bf16.msra.mxu0 0
      %1342 = vmatprep.subr.bf16.mxu0 0
      %1343 = vmatpush1.bf16.msra.mxu0 0
      %1344 = vmatprep.subr.bf16.mxu0 0
      %1345 = vmatpush1.bf16.msra.mxu0 0
      %1346 = vmatprep.subr.bf16.mxu0 0
      %1347 = vmatpush1.bf16.msra.mxu0 0
      %1348 = vmatprep.subr.bf16.mxu0 0
      %1349 = vmatpush1.bf16.msra.mxu0 %v1072
      %1350 = vmatprep.subr.bf16.mxu0 0
      %1351 = vmatpush1.bf16.msra.mxu0 %v1071
      %1352 = vmatprep.subr.bf16.mxu0 0
      %1353 = vmatpush2.bf16.msra.mxu0 0
      %1354 = vmatprep.subr.bf16.mxu0 0
      %1355 = vmatpush2.bf16.msra.mxu0 0
      %1356 = vmatprep.subr.bf16.mxu0 0
      %1357 = vmatpush2.bf16.msra.mxu0 0
      %1358 = vmatprep.subr.bf16.mxu0 0
      %1359 = vmatpush2.bf16.msra.mxu0 0
      %1360 = vmatprep.subr.bf16.mxu0 0
      %1361 = vmatpush2.bf16.msra.mxu0 0
      %1362 = vmatprep.subr.bf16.mxu0 0
      %1363 = vmatpush2.bf16.msra.mxu0 0
      %1364 = vmatprep.subr.bf16.mxu0 0
      %1365 = vmatpush2.bf16.msra.mxu0 0
      %1366 = vmatprep.subr.bf16.mxu0 0
      %1367 = vmatpush2.bf16.msra.mxu0 0
      %1368 = vmatprep.mubr.bf16.mxu0 0
      %1369 = vmatmul.mubr.bf16.gmra.mxu0 %v1334
      %v1370 = vpop.f32.mrf.mxu0
      %v1371 = vadd.f32 %v1332, %v1370
      %v1372 = vpop.f32.mrf.mxu0
      %v1373 = vpop.f32.mrf.mxu0
      %v1374 = vpop.f32.mrf.mxu0
      %1375 = vdwg.mxu0
      %v1376 = vxor.u32 %v1371, 2147483648
      %v1377 = vmul.f32 %v1376, 1.442695
      %v1378 = vpow.pop %v1377
      %v1379 = vadd.f32 %v1378, 1.0
      %v1380 = vrcp.pop %v1379
      %v1381 = vmul.f32 1.0, %v1380
      %v1382 = vtanh.pop %v1371
      %v1383 = vld [vmem:[#allocation5] sm:$0xff]
      %1385 = vrot.lane.b32.xlu0 %v1383, 32
      %v1386 = vpop.permute.xlu0 %1385
      %v1388 = vmul.f32 %v1381, %v1386
      %1390 = vrot.lane.b32.xlu0 %v1382, 32
      %v1391 = vpop.permute.xlu0 %1390
      %v1393 = vmul.f32 %v1381, %v1391
      %1395 = vrot.lane.b32.xlu0 %v1393, 32
      %v1396 = vpop.permute.xlu0 %1395
      %v1398 = vadd.f32 %v1388, %v1396
      %v1399 = vtanh.pop %v1398
      %1401 = vrot.lane.b32.xlu0 %v1399, 32
      %v1402 = vpop.permute.xlu0 %1401
      %v1404 = vmul.f32 %v1381, %v1402
      %1406 = vrot.lane.b32.xlu0 %v1398, 96
      %v1407 = vpop.permute.xlu0 %1406
      %1409 = vst.msk [vmem:[#allocation5] sm:$0xff] %vm217, %v1407
      %1411 = vrot.lane.b32.xlu0 %v1404, 64
      %v1412 = vpop.permute.xlu0 %1411
      %1414 = vst.msk [vmem:[#allocation4] sm:$0xff] %vm217, %v1412
      %1415 = vst.msk [vmem:[%s580] sm:$0xff] %vm217, %v1412
      %v1416 = vld [vmem:[#allocation4] sm:$0xff]
      %v1417 = vpack.c.bf16 %v1416, %v1416
      %v1418 = vld [vmem:[%s584] sm:$0xff]
      %v1420 = vsel %vm217, %v1417, 0
      %1422 = vmatprep.subr.bf16.mxu0 0
      %1423 = vmatpush1.bf16.msra.mxu0 0
      %1424 = vmatprep.subr.bf16.mxu0 0
      %1425 = vmatpush1.bf16.msra.mxu0 0
      %1426 = vmatprep.subr.bf16.mxu0 0
      %1427 = vmatpush1.bf16.msra.mxu0 0
      %1428 = vmatprep.subr.bf16.mxu0 0
      %1429 = vmatpush1.bf16.msra.mxu0 0
      %1430 = vmatprep.subr.bf16.mxu0 0
      %1431 = vmatpush1.bf16.msra.mxu0 0
      %1432 = vmatprep.subr.bf16.mxu0 0
      %1433 = vmatpush1.bf16.msra.mxu0 0
      %1434 = vmatprep.subr.bf16.mxu0 0
      %1435 = vmatpush1.bf16.msra.mxu0 %v1072
      %1436 = vmatprep.subr.bf16.mxu0 0
      %1437 = vmatpush1.bf16.msra.mxu0 %v1071
      %1438 = vmatprep.subr.bf16.mxu0 0
      %1439 = vmatpush2.bf16.msra.mxu0 0
      %1440 = vmatprep.subr.bf16.mxu0 0
      %1441 = vmatpush2.bf16.msra.mxu0 0
      %1442 = vmatprep.subr.bf16.mxu0 0
      %1443 = vmatpush2.bf16.msra.mxu0 0
      %1444 = vmatprep.subr.bf16.mxu0 0
      %1445 = vmatpush2.bf16.msra.mxu0 0
      %1446 = vmatprep.subr.bf16.mxu0 0
      %1447 = vmatpush2.bf16.msra.mxu0 0
      %1448 = vmatprep.subr.bf16.mxu0 0
      %1449 = vmatpush2.bf16.msra.mxu0 0
      %1450 = vmatprep.subr.bf16.mxu0 0
      %1451 = vmatpush2.bf16.msra.mxu0 0
      %1452 = vmatprep.subr.bf16.mxu0 0
      %1453 = vmatpush2.bf16.msra.mxu0 0
      %1454 = vmatprep.mubr.bf16.mxu0 0
      %1455 = vmatmul.mubr.bf16.gmra.mxu0 %v1420
      %v1456 = vpop.f32.mrf.mxu0
      %v1457 = vadd.f32 %v1418, %v1456
      %v1458 = vpop.f32.mrf.mxu0
      %v1459 = vpop.f32.mrf.mxu0
      %v1460 = vpop.f32.mrf.mxu0
      %1461 = vdwg.mxu0
      %v1462 = vxor.u32 %v1457, 2147483648
      %v1463 = vmul.f32 %v1462, 1.442695
      %v1464 = vpow.pop %v1463
      %v1465 = vadd.f32 %v1464, 1.0
      %v1466 = vrcp.pop %v1465
      %v1467 = vmul.f32 1.0, %v1466
      %v1468 = vtanh.pop %v1457
      %v1469 = vld [vmem:[#allocation5] sm:$0xff]
      %1471 = vrot.lane.b32.xlu0 %v1469, 32
      %v1472 = vpop.permute.xlu0 %1471
      %v1474 = vmul.f32 %v1467, %v1472
      %1476 = vrot.lane.b32.xlu0 %v1468, 32
      %v1477 = vpop.permute.xlu0 %1476
      %v1479 = vmul.f32 %v1467, %v1477
      %1481 = vrot.lane.b32.xlu0 %v1479, 32
      %v1482 = vpop.permute.xlu0 %1481
      %v1484 = vadd.f32 %v1474, %v1482
      %v1485 = vtanh.pop %v1484
      %1487 = vrot.lane.b32.xlu0 %v1485, 32
      %v1488 = vpop.permute.xlu0 %1487
      %v1490 = vmul.f32 %v1467, %v1488
      %1492 = vrot.lane.b32.xlu0 %v1484, 96
      %v1493 = vpop.permute.xlu0 %1492
      %1495 = vst.msk [vmem:[#allocation5] sm:$0xff] %vm217, %v1493
      %1497 = vrot.lane.b32.xlu0 %v1490, 64
      %v1498 = vpop.permute.xlu0 %1497
      %1500 = vst.msk [vmem:[#allocation4] sm:$0xff] %vm217, %v1498
      %1501 = vst.msk [vmem:[%s668] sm:$0xff] %vm217, %v1498
      %v1502 = vld [vmem:[#allocation4] sm:$0xff]
      %v1503 = vpack.c.bf16 %v1502, %v1502
      %v1504 = vld [vmem:[%s672] sm:$0xff]
      %v1506 = vsel %vm217, %v1503, 0
      %1508 = vmatprep.subr.bf16.mxu0 0
      %1509 = vmatpush1.bf16.msra.mxu0 0
      %1510 = vmatprep.subr.bf16.mxu0 0
      %1511 = vmatpush1.bf16.msra.mxu0 0
      %1512 = vmatprep.subr.bf16.mxu0 0
      %1513 = vmatpush1.bf16.msra.mxu0 0
      %1514 = vmatprep.subr.bf16.mxu0 0
      %1515 = vmatpush1.bf16.msra.mxu0 0
      %1516 = vmatprep.subr.bf16.mxu0 0
      %1517 = vmatpush1.bf16.msra.mxu0 0
      %1518 = vmatprep.subr.bf16.mxu0 0
      %1519 = vmatpush1.bf16.msra.mxu0 0
      %1520 = vmatprep.subr.bf16.mxu0 0
      %1521 = vmatpush1.bf16.msra.mxu0 %v1072
      %1522 = vmatprep.subr.bf16.mxu0 0
      %1523 = vmatpush1.bf16.msra.mxu0 %v1071
      %1524 = vmatprep.subr.bf16.mxu0 0
      %1525 = vmatpush2.bf16.msra.mxu0 0
      %1526 = vmatprep.subr.bf16.mxu0 0
      %1527 = vmatpush2.bf16.msra.mxu0 0
      %1528 = vmatprep.subr.bf16.mxu0 0
      %1529 = vmatpush2.bf16.msra.mxu0 0
      %1530 = vmatprep.subr.bf16.mxu0 0
      %1531 = vmatpush2.bf16.msra.mxu0 0
      %1532 = vmatprep.subr.bf16.mxu0 0
      %1533 = vmatpush2.bf16.msra.mxu0 0
      %1534 = vmatprep.subr.bf16.mxu0 0
      %1535 = vmatpush2.bf16.msra.mxu0 0
      %1536 = vmatprep.subr.bf16.mxu0 0
      %1537 = vmatpush2.bf16.msra.mxu0 0
      %1538 = vmatprep.subr.bf16.mxu0 0
      %1539 = vmatpush2.bf16.msra.mxu0 0
      %1540 = vmatprep.mubr.bf16.mxu0 0
      %1541 = vmatmul.mubr.bf16.gmra.mxu0 %v1506
      %v1542 = vpop.f32.mrf.mxu0
      %v1543 = vadd.f32 %v1504, %v1542
      %v1544 = vpop.f32.mrf.mxu0
      %v1545 = vpop.f32.mrf.mxu0
      %v1546 = vpop.f32.mrf.mxu0
      %1547 = vdwg.mxu0
      %v1548 = vxor.u32 %v1543, 2147483648
      %v1549 = vmul.f32 %v1548, 1.442695
      %v1550 = vpow.pop %v1549
      %v1551 = vadd.f32 %v1550, 1.0
      %v1552 = vrcp.pop %v1551
      %v1553 = vmul.f32 1.0, %v1552
      %v1554 = vtanh.pop %v1543
      %v1555 = vld [vmem:[#allocation5] sm:$0xff]
      %1557 = vrot.lane.b32.xlu0 %v1555, 32
      %v1558 = vpop.permute.xlu0 %1557
      %v1560 = vmul.f32 %v1553, %v1558
      %1562 = vrot.lane.b32.xlu0 %v1554, 32
      %v1563 = vpop.permute.xlu0 %1562
      %v1565 = vmul.f32 %v1553, %v1563
      %1567 = vrot.lane.b32.xlu0 %v1565, 32
      %v1568 = vpop.permute.xlu0 %1567
      %v1570 = vadd.f32 %v1560, %v1568
      %v1571 = vtanh.pop %v1570
      %1573 = vrot.lane.b32.xlu0 %v1571, 32
      %v1574 = vpop.permute.xlu0 %1573
      %v1576 = vmul.f32 %v1553, %v1574
      %1578 = vrot.lane.b32.xlu0 %v1570, 96
      %v1579 = vpop.permute.xlu0 %1578
      %1581 = vst.msk [vmem:[#allocation5] sm:$0xff] %vm217, %v1579
      %1583 = vrot.lane.b32.xlu0 %v1576, 64
      %v1584 = vpop.permute.xlu0 %1583
      %1586 = vst.msk [vmem:[#allocation4] sm:$0xff] %vm217, %v1584
      %1587 = vst.msk [vmem:[%s756] sm:$0xff] %vm217, %v1584
      %v1588 = vld [vmem:[#allocation4] sm:$0xff]
      %v1589 = vpack.c.bf16 %v1588, %v1588
      %v1590 = vld [vmem:[%s760] sm:$0xff]
      %v1592 = vsel %vm217, %v1589, 0
      %1594 = vmatprep.subr.bf16.mxu0 0
      %1595 = vmatpush1.bf16.msra.mxu0 0
      %1596 = vmatprep.subr.bf16.mxu0 0
      %1597 = vmatpush1.bf16.msra.mxu0 0
      %1598 = vmatprep.subr.bf16.mxu0 0
      %1599 = vmatpush1.bf16.msra.mxu0 0
      %1600 = vmatprep.subr.bf16.mxu0 0
      %1601 = vmatpush1.bf16.msra.mxu0 0
      %1602 = vmatprep.subr.bf16.mxu0 0
      %1603 = vmatpush1.bf16.msra.mxu0 0
      %1604 = vmatprep.subr.bf16.mxu0 0
      %1605 = vmatpush1.bf16.msra.mxu0 0
      %1606 = vmatprep.subr.bf16.mxu0 0
      %1607 = vmatpush1.bf16.msra.mxu0 %v1072
      %1608 = vmatprep.subr.bf16.mxu0 0
      %1609 = vmatpush1.bf16.msra.mxu0 %v1071
      %1610 = vmatprep.subr.bf16.mxu0 0
      %1611 = vmatpush2.bf16.msra.mxu0 0
      %1612 = vmatprep.subr.bf16.mxu0 0
      %1613 = vmatpush2.bf16.msra.mxu0 0
      %1614 = vmatprep.subr.bf16.mxu0 0
      %1615 = vmatpush2.bf16.msra.mxu0 0
      %1616 = vmatprep.subr.bf16.mxu0 0
      %1617 = vmatpush2.bf16.msra.mxu0 0
      %1618 = vmatprep.subr.bf16.mxu0 0
      %1619 = vmatpush2.bf16.msra.mxu0 0
      %1620 = vmatprep.subr.bf16.mxu0 0
      %1621 = vmatpush2.bf16.msra.mxu0 0
      %1622 = vmatprep.subr.bf16.mxu0 0
      %1623 = vmatpush2.bf16.msra.mxu0 0
      %1624 = vmatprep.subr.bf16.mxu0 0
      %1625 = vmatpush2.bf16.msra.mxu0 0
      %1626 = vmatprep.mubr.bf16.mxu0 0
      %1627 = vmatmul.mubr.bf16.gmra.mxu0 %v1592
      %v1628 = vpop.f32.mrf.mxu0
      %v1629 = vadd.f32 %v1590, %v1628
      %v1630 = vpop.f32.mrf.mxu0
      %v1631 = vpop.f32.mrf.mxu0
      %v1632 = vpop.f32.mrf.mxu0
      %1633 = vdwg.mxu0
      %v1634 = vxor.u32 %v1629, 2147483648
      %v1635 = vmul.f32 %v1634, 1.442695
      %v1636 = vpow.pop %v1635
      %v1637 = vadd.f32 %v1636, 1.0
      %v1638 = vrcp.pop %v1637
      %v1639 = vmul.f32 1.0, %v1638
      %v1640 = vtanh.pop %v1629
      %v1641 = vld [vmem:[#allocation5] sm:$0xff]
      %1643 = vrot.lane.b32.xlu0 %v1641, 32
      %v1644 = vpop.permute.xlu0 %1643
      %v1646 = vmul.f32 %v1639, %v1644
      %1648 = vrot.lane.b32.xlu0 %v1640, 32
      %v1649 = vpop.permute.xlu0 %1648
      %v1651 = vmul.f32 %v1639, %v1649
      %1653 = vrot.lane.b32.xlu0 %v1651, 32
      %v1654 = vpop.permute.xlu0 %1653
      %v1656 = vadd.f32 %v1646, %v1654
      %v1657 = vtanh.pop %v1656
      %1659 = vrot.lane.b32.xlu0 %v1657, 32
      %v1660 = vpop.permute.xlu0 %1659
      %v1662 = vmul.f32 %v1639, %v1660
      %1664 = vrot.lane.b32.xlu0 %v1656, 96
      %v1665 = vpop.permute.xlu0 %1664
      %1667 = vst.msk [vmem:[#allocation5] sm:$0xff] %vm217, %v1665
      %1669 = vrot.lane.b32.xlu0 %v1662, 64
      %v1670 = vpop.permute.xlu0 %1669
      %1672 = vst.msk [vmem:[#allocation4] sm:$0xff] %vm217, %v1670
      %1673 = vst.msk [vmem:[%s844] sm:$0xff] %vm217, %v1670
      %v1674 = vld [vmem:[#allocation4] sm:$0xff]
      %v1675 = vpack.c.bf16 %v1674, %v1674
      %v1676 = vld [vmem:[%s848] sm:$0xff]
      %v1678 = vsel %vm217, %v1675, 0
      %1680 = vmatprep.subr.bf16.mxu0 0
      %1681 = vmatpush1.bf16.msra.mxu0 0
      %1682 = vmatprep.subr.bf16.mxu0 0
      %1683 = vmatpush1.bf16.msra.mxu0 0
      %1684 = vmatprep.subr.bf16.mxu0 0
      %1685 = vmatpush1.bf16.msra.mxu0 0
      %1686 = vmatprep.subr.bf16.mxu0 0
      %1687 = vmatpush1.bf16.msra.mxu0 0
      %1688 = vmatprep.subr.bf16.mxu0 0
      %1689 = vmatpush1.bf16.msra.mxu0 0
      %1690 = vmatprep.subr.bf16.mxu0 0
      %1691 = vmatpush1.bf16.msra.mxu0 0
      %1692 = vmatprep.subr.bf16.mxu0 0
      %1693 = vmatpush1.bf16.msra.mxu0 %v1072
      %1694 = vmatprep.subr.bf16.mxu0 0
      %1695 = vmatpush1.bf16.msra.mxu0 %v1071
      %1696 = vmatprep.subr.bf16.mxu0 0
      %1697 = vmatpush2.bf16.msra.mxu0 0
      %1698 = vmatprep.subr.bf16.mxu0 0
      %1699 = vmatpush2.bf16.msra.mxu0 0
      %1700 = vmatprep.subr.bf16.mxu0 0
      %1701 = vmatpush2.bf16.msra.mxu0 0
      %1702 = vmatprep.subr.bf16.mxu0 0
      %1703 = vmatpush2.bf16.msra.mxu0 0
      %1704 = vmatprep.subr.bf16.mxu0 0
      %1705 = vmatpush2.bf16.msra.mxu0 0
      %1706 = vmatprep.subr.bf16.mxu0 0
      %1707 = vmatpush2.bf16.msra.mxu0 0
      %1708 = vmatprep.subr.bf16.mxu0 0
      %1709 = vmatpush2.bf16.msra.mxu0 0
      %1710 = vmatprep.subr.bf16.mxu0 0
      %1711 = vmatpush2.bf16.msra.mxu0 0
      %1712 = vmatprep.mubr.bf16.mxu0 0
      %1713 = vmatmul.mubr.bf16.gmra.mxu0 %v1678
      %v1714 = vpop.f32.mrf.mxu0
      %v1715 = vadd.f32 %v1676, %v1714
      %v1716 = vpop.f32.mrf.mxu0
      %v1717 = vpop.f32.mrf.mxu0
      %v1718 = vpop.f32.mrf.mxu0
      %1719 = vdwg.mxu0
      %v1720 = vxor.u32 %v1715, 2147483648
      %v1721 = vmul.f32 %v1720, 1.442695
      %v1722 = vpow.pop %v1721
      %v1723 = vadd.f32 %v1722, 1.0
      %v1724 = vrcp.pop %v1723
      %v1725 = vmul.f32 1.0, %v1724
      %v1726 = vtanh.pop %v1715
      %v1727 = vld [vmem:[#allocation5] sm:$0xff]
      %1729 = vrot.lane.b32.xlu0 %v1727, 32
      %v1730 = vpop.permute.xlu0 %1729
      %v1732 = vmul.f32 %v1725, %v1730
      %1734 = vrot.lane.b32.xlu0 %v1726, 32
      %v1735 = vpop.permute.xlu0 %1734
      %v1737 = vmul.f32 %v1725, %v1735
      %1739 = vrot.lane.b32.xlu0 %v1737, 32
      %v1740 = vpop.permute.xlu0 %1739
      %v1742 = vadd.f32 %v1732, %v1740
      %v1743 = vtanh.pop %v1742
      %1745 = vrot.lane.b32.xlu0 %v1743, 32
      %v1746 = vpop.permute.xlu0 %1745
      %v1748 = vmul.f32 %v1725, %v1746
      %1750 = vrot.lane.b32.xlu0 %v1742, 96
      %v1751 = vpop.permute.xlu0 %1750
      %1753 = vst.msk [vmem:[#allocation5] sm:$0xff] %vm217, %v1751
      %1755 = vrot.lane.b32.xlu0 %v1748, 64
      %v1756 = vpop.permute.xlu0 %1755
      %1758 = vst.msk [vmem:[#allocation4] sm:$0xff] %vm217, %v1756
      %1759 = vst.msk [vmem:[%s932] sm:$0xff] %vm217, %v1756
      loop: start=0, step=1, limit=24
      $region54: #{tpu_custom_call.1} parent=52 // loop_pre_header
        _
      $region55: #{tpu_custom_call.1} parent=52 // loop_header
        %s1761 = sphi 0, %s1765
        %p1762 = scmp.ge.s32.totalorder %s1761, 24
      $region56: #{tpu_custom_call.1} parent=52 // loop_header_branch
        %1764 = sbr.rel (%p1762) target = $region60
      $region57: #{tpu_custom_call.1} parent=52 // loop_body
        %s1766 = sld [smem:[#allocation9 + %s1761]]
        %s1767 = scalar_lea.vmem [#allocation2], %s1766
        %v1768 = vld [vmem:[%s1767] sm:$0x1]
        %s1769 = scalar_lea.vmem [#allocation6], %s1761
        %vm1770 = vcmask 253952
        %1771 = vst.msk [vmem:[%s1769] sm:$0x1] %vm1770, %v1768
      $region58: #{tpu_custom_call.1} parent=52 // loop_footer
        %s1765 = sadd.s32 1, %s1761
      $region59: #{tpu_custom_call.1} parent=52 // loop_footer_branch
        %1760 = sbr.rel target = $region55
      $region60: #{tpu_custom_call.1} parent=52 // loop_exit
        _
      %v1772 = vld [vmem:[#allocation6] sm:$0xff]
      %v1773 = vld [vmem:[#allocation6 + $0x8] sm:$0xff]
      %v1774 = vld [vmem:[#allocation6 + $0x10] sm:$0xff]
      %v1775 = vpack.c.bf16 %v1773, %v1772
      %v1776 = vpack.c.bf16 %v1774, %v1774
      %v1779 = vunpack.c.l.b16 %v1775
      %v1780 = vunpack.c.h.b16 %v1775
      %v1781 = vunpack.c.l.b16 %v1776
      %v1782 = vpack.c.b16 %v1779, %v1779
      %v1783 = vpack.c.b16 %v1780, %v1780
      %v1784 = vpack.c.b16 %v1781, %v1781
      %vm1788 = vcmask 257024
      %1789 = vst.msk [vmem:[#allocation7] sm:$0xf] %vm1788, %v1782
      %1790 = vst.msk [vmem:[#allocation7 + $0x4] sm:$0xf] %vm1788, %v1783
      %1791 = vst.msk [vmem:[#allocation7 + $0x8] sm:$0xf] %vm1788, %v1784
    $region53: #{tpu_custom_call.1} parent=1 // pred_fallthru
      _
    %v1792 = vld [vmem:[#allocation7] sm:$0xf]
    %v1793 = vld [vmem:[#allocation7 + $0x4] sm:$0xf]
    %v1794 = vld [vmem:[#allocation7 + $0x8] sm:$0xf]
    %v1795 = vld [vmem:[#allocation15] sm:$0xf]
    %v1796 = vld [vmem:[#allocation15 + $0x4] sm:$0xf]
    %v1797 = vld [vmem:[#allocation15 + $0x8] sm:$0xf]
    %v1798 = vld [vmem:[#allocation15 + $0xc] sm:$0xf]
    %v1799 = vld [vmem:[%s9] sm:$0x1]
    %v1801 = vlaneseq
    %v1802 = vshrl.u32 %v1801, 7
    %v1803 = vsub.s32 0, %v1802
    %v1804 = vrot.slane %v1799, %v1803
    %v1809 = vunpack.c.l.b16 %v1792
    %v1810 = vunpack.c.l.b16 %v1793
    %v1811 = vunpack.c.l.b16 %v1794
    %v1812 = vpack.c.b16 %v1810, %v1809
    %v1813 = vpack.c.b16 %v1811, %v1811
    %v1818 = vunpack.c.l.b16 %v1795
    %v1819 = vunpack.c.l.b16 %v1796
    %v1820 = vunpack.c.l.b16 %v1797
    %v1821 = vunpack.c.l.b16 %v1798
    %v1822 = vpack.c.b16 %v1819, %v1818
    %v1823 = vpack.c.b16 %v1821, %v1820
    %vm1826 = vcmask 261120
    %v1828 = vsel %vm1826, %v1812, 0
    %v1831 = vsel %vm1826, %v1813, 0
    %1833 = vmatprep.subr.bf16.mxu0 0
    %1834 = vmatpush1.bf16.msra.mxu0 0
    %1835 = vmatprep.subr.bf16.mxu0 0
    %1836 = vmatpush1.bf16.msra.mxu0 0
    %1837 = vmatprep.subr.bf16.mxu0 0
    %1838 = vmatpush1.bf16.msra.mxu0 0
    %1839 = vmatprep.subr.bf16.mxu0 0
    %1840 = vmatpush1.bf16.msra.mxu0 0
    %1841 = vmatprep.subr.bf16.mxu0 0
    %1842 = vmatpush1.bf16.msra.mxu0 0
    %1843 = vmatprep.subr.bf16.mxu0 0
    %1844 = vmatpush1.bf16.msra.mxu0 0
    %1845 = vmatprep.subr.bf16.mxu0 0
    %1846 = vmatpush1.bf16.msra.mxu0 %v1823
    %1847 = vmatprep.subr.bf16.mxu0 0
    %1848 = vmatpush1.bf16.msra.mxu0 %v1822
    %1849 = vmatprep.subr.bf16.mxu0 0
    %1850 = vmatpush2.bf16.msra.mxu0 0
    %1851 = vmatprep.subr.bf16.mxu0 0
    %1852 = vmatpush2.bf16.msra.mxu0 0
    %1853 = vmatprep.subr.bf16.mxu0 0
    %1854 = vmatpush2.bf16.msra.mxu0 0
    %1855 = vmatprep.subr.bf16.mxu0 0
    %1856 = vmatpush2.bf16.msra.mxu0 0
    %1857 = vmatprep.subr.bf16.mxu0 0
    %1858 = vmatpush2.bf16.msra.mxu0 0
    %1859 = vmatprep.subr.bf16.mxu0 0
    %1860 = vmatpush2.bf16.msra.mxu0 0
    %1861 = vmatprep.subr.bf16.mxu0 0
    %1862 = vmatpush2.bf16.msra.mxu0 0
    %1863 = vmatprep.subr.bf16.mxu0 0
    %1864 = vmatpush2.bf16.msra.mxu0 0
    %1865 = vmatprep.mubr.bf16.mxu0 0
    %1866 = vmatmul.mubr.bf16.gmra.mxu0 %v1828
    %v1867 = vpop.f32.mrf.mxu0
    %v1868 = vadd.f32 %v1804, %v1867
    %v1869 = vpop.f32.mrf.mxu0
    %v1870 = vpop.f32.mrf.mxu0
    %v1871 = vadd.f32 %v1804, %v1870
    %v1872 = vpop.f32.mrf.mxu0
    %1873 = vmatprep.mubr.bf16.mxu0 0
    %1874 = vmatmul.mubr.bf16.gmra.mxu0 %v1831
    %v1875 = vpop.f32.mrf.mxu0
    %v1876 = vadd.f32 %v1804, %v1875
    %v1877 = vpop.f32.mrf.mxu0
    %v1878 = vpop.f32.mrf.mxu0
    %v1879 = vpop.f32.mrf.mxu0
    %1880 = vdwg.mxu0
    %1881 = vst [vmem:[#allocation16] sm:$0xff] %v1868
    %1882 = vst [vmem:[#allocation16 + $0x8] sm:$0xff] %v1871
    %1883 = vst [vmem:[#allocation16 + $0x10] sm:$0xff] %v1876
    // Predicated region
    $region61: #{tpu_custom_call.1} parent=1 // pred_check
      _
    $region62: #{tpu_custom_call.1} parent=1 // pred_check_branch
      %1885 = sbr.rel (0) target = $region64
    $region63: #{tpu_custom_call.1} parent=1 // pred_region
      %s1887 = ssub.s32 384, 384
      %1888 = vsyncadd [#allocation12], %s1887
      %s1889 = sshll.u32 [#allocation16], 4
      %s1890 = int_to_ptr.vmem [resolvable:$true] %s1889
      %1895 = dma.vmem_to_hbm [thread:$0]  %s1890, 384, %s10, [#allocation12], 128, 128, 8
    $region64: #{tpu_custom_call.1} parent=1 // pred_fallthru
      _
    // Predicated region
    $region65: #{tpu_custom_call.1} parent=1 // pred_check
      _
    $region66: #{tpu_custom_call.1} parent=1 // pred_check_branch
      %1897 = sbr.rel (0) target = $region68
    $region67: #{tpu_custom_call.1} parent=1 // pred_region
      %1898 = dma.done [#allocation12], 384
    $region68: #{tpu_custom_call.1} parent=1 // pred_fallthru
      _
    %1899 = vsyncpa [#allocation11], 1
    %1900 = vsyncpa [#allocation14], 1
    %1901 = vsyncpa [#allocation12], 1

</llo_original>
